<compile_context>
chip_gen: v7x
topology: tpu7x:2x2x1
jax: 0.10.0
libtpu: 0.0.40
codegen_flags: <defaults>
</compile_context>

<pallas_src>
import math

import jax
import jax.numpy as jnp
from jax.experimental import pallas as pl
from jax.experimental.pallas import tpu as pltpu

# ---- model dims (small, deterministic) -------------------------------------
B = 2          # batch
S = 8          # sequence length
D = 32         # model dim  (layer.size)
H = 4          # attention heads
DK = D // H    # per-head dim
FF = 64        # feed-forward hidden dim
N_LAYERS = 2   # N
EPS = 1e-5     # nn.LayerNorm default eps
BS = B * S     # batch folded into matmul rows

# ---- packed parameter slab layout (row offsets, all multiples of 8) ---------
R_WQKV = 0               # (D, 3D)  rows [0, 32)    cols [0, 96)
R_WO = R_WQKV + D        # (D, D)   rows [32, 64)   cols [0, 32)
R_W1 = R_WO + D          # (D, FF)  rows [64, 96)   cols [0, 64)
R_W2 = R_W1 + D          # (FF, D)  rows [96, 160)  cols [0, 32)
R_VEC = R_W2 + FF        # 8 bias/layernorm rows
LAYER_ROWS = R_VEC + 8   # 168
R_FINAL = N_LAYERS * LAYER_ROWS       # final LayerNorm gamma / beta rows
SLAB_ROWS = ((R_FINAL + 2 + 7) // 8) * 8
SLAB_COLS = 128


# ---- Pallas kernel ----------------------------------------------------------
def encoder_kernel(x_ref, bias_ref, w_ref, out_ref):
    x = x_ref[...]          # (BS, D) f32
    bias = bias_ref[...]    # (BS, BS) additive mask (batch block-diag + padding), hoisted

    def layernorm(h, g, b):               # h: (BS, D); g, b: (1, D)
        mu = jnp.mean(h, axis=-1, keepdims=True)
        var = jnp.mean((h - mu) ** 2, axis=-1, keepdims=True)
        return (h - mu) * jax.lax.rsqrt(var + EPS) * g + b

    for l in range(N_LAYERS):
        base = l * LAYER_ROWS
        # static slices of the packed weight slab are free
        wqkv = w_ref[base + R_WQKV: base + R_WQKV + D, 0:3 * D]   # (D, 3D), q-scale folded
        wo = w_ref[base + R_WO: base + R_WO + D, 0:D]             # (D, D)
        w1 = w_ref[base + R_W1: base + R_W1 + D, 0:FF]            # (D, FF)
        w2 = w_ref[base + R_W2: base + R_W2 + FF, 0:D]            # (FF, D)
        vrow = base + R_VEC
        bqkv = w_ref[vrow + 0: vrow + 1, 0:3 * D]                 # (1, 3D)
        bo = w_ref[vrow + 1: vrow + 2, 0:D]
        ln1g = w_ref[vrow + 2: vrow + 3, 0:D]
        ln1b = w_ref[vrow + 3: vrow + 4, 0:D]
        ln2g = w_ref[vrow + 4: vrow + 5, 0:D]
        ln2b = w_ref[vrow + 5: vrow + 6, 0:D]
        b1 = w_ref[vrow + 6: vrow + 7, 0:FF]
        b2 = w_ref[vrow + 7: vrow + 8, 0:D]

        # ---- self-attention sublayer: x + attn(norm(x)) ----
        hn = layernorm(x, ln1g, ln1b)                              # (BS, D)

        # Fused QKV projection: ONE (16,32)x(32,96) matmul.
        qkv = jnp.dot(hn, wqkv, preferred_element_type=jnp.float32) + bqkv   # (BS, 3D)

        # Heads onto a leading axis via static lane slices of the slab.
        qh = jnp.stack([qkv[:, h * DK:(h + 1) * DK] for h in range(H)], axis=0)
        kh = jnp.stack([qkv[:, D + h * DK: D + (h + 1) * DK] for h in range(H)], axis=0)
        vh = jnp.stack([qkv[:, 2 * D + h * DK: 2 * D + (h + 1) * DK] for h in range(H)], axis=0)
        # qh/kh/vh: (H, BS, DK)

        # q . k^T contracting last dims of both operands (no materialized k^T).
        scores = jnp.einsum('hqd,hkd->hqk', qh, kh,
                            preferred_element_type=jnp.float32) + bias       # (H, BS, BS)
        scores = scores - jnp.max(scores, axis=-1, keepdims=True)
        p = jnp.exp(scores)
        p = p * pl.reciprocal(jnp.sum(p, axis=-1, keepdims=True), approx=False)

        ctx = jnp.einsum('hqk,hkd->hqd', p, vh,
                         preferred_element_type=jnp.float32)                 # (H, BS, DK)

        # Fold the head reduction into one matmul: concat heads back on lanes
        # and hit the original (D, D) W_o once.
        ctx_flat = jnp.concatenate([ctx[h] for h in range(H)], axis=-1)      # (BS, D)
        attn = jnp.dot(ctx_flat, wo, preferred_element_type=jnp.float32) + bo
        x = x + attn                                                         # dropout = id

        # ---- feed-forward sublayer: x + ffn(norm(x)) ----
        hn = layernorm(x, ln2g, ln2b)
        ff = jnp.dot(hn, w1, preferred_element_type=jnp.float32) + b1
        ff = jnp.maximum(ff, 0.0)
        ff = jnp.dot(ff, w2, preferred_element_type=jnp.float32) + b2
        x = x + ff                                                           # dropout = id

    # ---- final LayerNorm (self.norm) ----
    lnfg = w_ref[R_FINAL + 0: R_FINAL + 1, 0:D]
    lnfb = w_ref[R_FINAL + 1: R_FINAL + 2, 0:D]
    out_ref[...] = layernorm(x, lnfg, lnfb).astype(out_ref.dtype)


# ---- wrapper ----------------------------------------------------------------
def build_attn_bias(mask):
    """Combined additive attention bias (BS, BS): batch block-diagonal + key padding."""
    block = jnp.where(jnp.arange(B)[:, None] == jnp.arange(B)[None, :],
                      0.0, -1e9).astype(jnp.float32)                    # (b, b')
    padk = jnp.where(mask[:, 0, :] != 0, 0.0, -1e9).astype(jnp.float32)  # (b', k)
    bias = block[:, None, :, None] + padk[None, None, :, :]              # (b, 1, b', k)
    bias = jnp.broadcast_to(bias, (B, S, B, S))                          # (b, s, b', k)
    return bias.reshape(BS, BS)


def transformer_encoder(x, mask, w_slab):
    """x: (B, S, D) f32, mask: (B, 1, S) int32, w_slab: packed (SLAB_ROWS, 128) f32."""
    x2 = x.reshape(BS, D)
    bias = build_attn_bias(mask)
    out = pl.pallas_call(
        encoder_kernel,
        out_shape=jax.ShapeDtypeStruct((BS, D), jnp.float32),
        grid_spec=pltpu.PrefetchScalarGridSpec(
            num_scalar_prefetch=0,
            grid=(1,),                                   # single invocation (grid collapsed)
            in_specs=[
                pl.BlockSpec((BS, D), lambda i: (0, 0)),            # x (batch folded)
                pl.BlockSpec((BS, BS), lambda i: (0, 0)),           # additive mask
                pl.BlockSpec((SLAB_ROWS, SLAB_COLS), lambda i: (0, 0)),  # packed weights
            ],
            out_specs=pl.BlockSpec((BS, D), lambda i: (0, 0)),
        ),
        compiler_params=pltpu.CompilerParams(
            dimension_semantics=("arbitrary",)),
    )(x2, bias, w_slab)
    return out.reshape(B, S, D)


# ---- parameter construction & kernel-layout prep ----------------------------
def make_params(key):
    ks = jax.random.split(key, 12)
    scale = 0.05
    P = {
        "wq": jax.random.normal(ks[0], (N_LAYERS, D, D), jnp.float32) * scale,
        "wk": jax.random.normal(ks[1], (N_LAYERS, D, D), jnp.float32) * scale,
        "wv": jax.random.normal(ks[2], (N_LAYERS, D, D), jnp.float32) * scale,
        "wo": jax.random.normal(ks[3], (N_LAYERS, D, D), jnp.float32) * scale,
        "bq": jax.random.normal(ks[4], (N_LAYERS, 1, D), jnp.float32) * scale,
        "bk": jax.random.normal(ks[5], (N_LAYERS, 1, D), jnp.float32) * scale,
        "bv": jax.random.normal(ks[6], (N_LAYERS, 1, D), jnp.float32) * scale,
        "bo": jax.random.normal(ks[7], (N_LAYERS, 1, D), jnp.float32) * scale,
        "ln1g": jnp.ones((N_LAYERS, 1, D), jnp.float32),
        "ln1b": jnp.zeros((N_LAYERS, 1, D), jnp.float32),
        "ln2g": jnp.ones((N_LAYERS, 1, D), jnp.float32),
        "ln2b": jnp.zeros((N_LAYERS, 1, D), jnp.float32),
        "w1": jax.random.normal(ks[8], (N_LAYERS, D, FF), jnp.float32) * scale,
        "b1": jax.random.normal(ks[9], (N_LAYERS, 1, FF), jnp.float32) * scale,
        "w2": jax.random.normal(ks[10], (N_LAYERS, FF, D), jnp.float32) * scale,
        "b2": jax.random.normal(ks[11], (N_LAYERS, 1, D), jnp.float32) * scale,
        "lnfg": jnp.ones((1, D), jnp.float32),
        "lnfb": jnp.zeros((1, D), jnp.float32),
    }
    return P


def prepare_kernel_params(P):
    """One-time host-side re-layout: fuse q|k|v (scale baked into q), and pack
    every weight/bias into a single lane-dense (SLAB_ROWS, 128) f32 slab."""
    inv = 1.0 / math.sqrt(DK)

    def pad_cols(a):
        return jnp.pad(a, ((0, 0), (0, SLAB_COLS - a.shape[1])))

    pieces = []
    for l in range(N_LAYERS):
        wqkv = jnp.concatenate([P["wq"][l] * inv, P["wk"][l], P["wv"][l]], axis=1)  # (D, 3D)
        bqkv = jnp.concatenate([P["bq"][l] * inv, P["bk"][l], P["bv"][l]], axis=1)  # (1, 3D)
        pieces += [
            pad_cols(wqkv),           # rows base+0   .. +31
            pad_cols(P["wo"][l]),     # rows base+32  .. +63
            pad_cols(P["w1"][l]),     # rows base+64  .. +95
            pad_cols(P["w2"][l]),     # rows base+96  .. +159
            pad_cols(bqkv),           # row  base+160
            pad_cols(P["bo"][l]),     # row  base+161
            pad_cols(P["ln1g"][l]), pad_cols(P["ln1b"][l]),   # 162, 163
            pad_cols(P["ln2g"][l]), pad_cols(P["ln2b"][l]),   # 164, 165
            pad_cols(P["b1"][l]),     # 166
            pad_cols(P["b2"][l]),     # 167
        ]
    pieces += [pad_cols(P["lnfg"]), pad_cols(P["lnfb"])]       # rows R_FINAL, R_FINAL+1
    slab = jnp.concatenate(pieces, axis=0)
    slab = jnp.pad(slab, ((0, SLAB_ROWS - slab.shape[0]), (0, 0)))
    return slab


# ---- pure-JAX reference (same math, un-fused weights) ------------------------
def reference(x, mask, P):
    def ln(h, g, b):
        mu = h.mean(-1, keepdims=True)
        var = ((h - mu) ** 2).mean(-1, keepdims=True)
        return (h - mu) / jnp.sqrt(var + EPS) * g + b

    m4 = mask[:, None, :, :]                                   # (B,1,1,S)
    out = x
    for l in range(N_LAYERS):
        h = ln(out, P["ln1g"][l], P["ln1b"][l])
        q = h @ P["wq"][l] + P["bq"][l]
        k = h @ P["wk"][l] + P["bk"][l]
        v = h @ P["wv"][l] + P["bv"][l]
        qh = q.reshape(B, S, H, DK).transpose(0, 2, 1, 3)
        kh = k.reshape(B, S, H, DK).transpose(0, 2, 1, 3)
        vh = v.reshape(B, S, H, DK).transpose(0, 2, 1, 3)
        scores = jnp.einsum("bhqd,bhkd->bhqk", qh, kh) / math.sqrt(DK)
        scores = jnp.where(m4 == 0, -1e9, scores)
        p = jax.nn.softmax(scores, axis=-1)
        att = jnp.einsum("bhqk,bhkd->bhqd", p, vh)
        att = att.transpose(0, 2, 1, 3).reshape(B, S, D)
        out = out + (att @ P["wo"][l] + P["bo"][l])
        h = ln(out, P["ln2g"][l], P["ln2b"][l])
        ff = jnp.maximum(h @ P["w1"][l] + P["b1"][l], 0.0)
        out = out + (ff @ P["w2"][l] + P["b2"][l])
    return ln(out, P["lnfg"], P["lnfb"])


if __name__ == "__main__":
    key = jax.random.PRNGKey(0)
    kx, kp = jax.random.split(key)
    x = jax.random.normal(kx, (B, S, D), jnp.float32)
    # mask: batch 0 attends to all 8 positions, batch 1 only to the first 5
    lengths = jnp.array([8, 5], jnp.int32)
    mask = (jnp.arange(S)[None, None, :] < lengths[:, None, None]).astype(jnp.int32)

    P = make_params(kp)
    w_slab = prepare_kernel_params(P)

    encode = jax.jit(transformer_encoder)
    out = encode(x, mask, w_slab)
    out = jax.block_until_ready(out)

    ref = reference(x, mask, P)
    assert out.shape == (B, S, D)
    assert jnp.allclose(out, ref, atol=1e-4, rtol=1e-4), "mismatch vs reference"

    print("KERNEL_OK")
</pallas_src>

<mosaic_0001>
module attributes {stable_mosaic.version = 11 : i64} {
  func.func @encoder_kernel(%arg0: i32, %arg1: memref<16x32xf32, #tpu.memory_space<vmem>>, %arg2: memref<16x16xf32, #tpu.memory_space<vmem>>, %arg3: memref<344x128xf32, #tpu.memory_space<vmem>>, %arg4: memref<16x32xf32, #tpu.memory_space<vmem>>) attributes {dimension_semantics = [#tpu.dimension_semantics<arbitrary>], iteration_bounds = array<i64: 1>, scalar_prefetch = 0 : i64, scratch_operands = 0 : i64, tpu.core_type = #tpu.core_type<tc>, window_params = [{pipeline_mode = #tpu.pipeline_mode<synchronous>, transform_indices = @transform_0, window_bounds = array<i64: 16, 32>}, {pipeline_mode = #tpu.pipeline_mode<synchronous>, transform_indices = @transform_1, window_bounds = array<i64: 16, 16>}, {pipeline_mode = #tpu.pipeline_mode<synchronous>, transform_indices = @transform_2, window_bounds = array<i64: 344, 128>}, {pipeline_mode = #tpu.pipeline_mode<synchronous>, transform_indices = @transform_3, window_bounds = array<i64: 16, 32>}]} {
    %c0 = arith.constant 0 : index
    %c0_0 = arith.constant 0 : index
    %0 = vector.load %arg1[%c0, %c0_0] : memref<16x32xf32, #tpu.memory_space<vmem>>, vector<16x32xf32>
    %c0_1 = arith.constant 0 : index
    %c0_2 = arith.constant 0 : index
    %1 = vector.load %arg2[%c0_1, %c0_2] : memref<16x16xf32, #tpu.memory_space<vmem>>, vector<16x16xf32>
    %c0_3 = arith.constant 0 : index
    %c0_4 = arith.constant 0 : index
    %2 = vector.load %arg3[%c0_3, %c0_4] : memref<344x128xf32, #tpu.memory_space<vmem>>, vector<32x96xf32>
    %c32 = arith.constant 32 : index
    %c0_5 = arith.constant 0 : index
    %3 = vector.load %arg3[%c32, %c0_5] : memref<344x128xf32, #tpu.memory_space<vmem>>, vector<32x32xf32>
    %c64 = arith.constant 64 : index
    %c0_6 = arith.constant 0 : index
    %4 = vector.load %arg3[%c64, %c0_6] : memref<344x128xf32, #tpu.memory_space<vmem>>, vector<32x64xf32>
    %c96 = arith.constant 96 : index
    %c0_7 = arith.constant 0 : index
    %5 = vector.load %arg3[%c96, %c0_7] : memref<344x128xf32, #tpu.memory_space<vmem>>, vector<64x32xf32>
    %c160 = arith.constant 160 : index
    %c0_8 = arith.constant 0 : index
    %6 = vector.load %arg3[%c160, %c0_8] : memref<344x128xf32, #tpu.memory_space<vmem>>, vector<1x96xf32>
    %c161 = arith.constant 161 : index
    %c0_9 = arith.constant 0 : index
    %7 = vector.load %arg3[%c161, %c0_9] : memref<344x128xf32, #tpu.memory_space<vmem>>, vector<1x32xf32>
    %c162 = arith.constant 162 : index
    %c0_10 = arith.constant 0 : index
    %8 = vector.load %arg3[%c162, %c0_10] : memref<344x128xf32, #tpu.memory_space<vmem>>, vector<1x32xf32>
    %c163 = arith.constant 163 : index
    %c0_11 = arith.constant 0 : index
    %9 = vector.load %arg3[%c163, %c0_11] : memref<344x128xf32, #tpu.memory_space<vmem>>, vector<1x32xf32>
    %c164 = arith.constant 164 : index
    %c0_12 = arith.constant 0 : index
    %10 = vector.load %arg3[%c164, %c0_12] : memref<344x128xf32, #tpu.memory_space<vmem>>, vector<1x32xf32>
    %c165 = arith.constant 165 : index
    %c0_13 = arith.constant 0 : index
    %11 = vector.load %arg3[%c165, %c0_13] : memref<344x128xf32, #tpu.memory_space<vmem>>, vector<1x32xf32>
    %c166 = arith.constant 166 : index
    %c0_14 = arith.constant 0 : index
    %12 = vector.load %arg3[%c166, %c0_14] : memref<344x128xf32, #tpu.memory_space<vmem>>, vector<1x64xf32>
    %c167 = arith.constant 167 : index
    %c0_15 = arith.constant 0 : index
    %13 = vector.load %arg3[%c167, %c0_15] : memref<344x128xf32, #tpu.memory_space<vmem>>, vector<1x32xf32>
    %cst = arith.constant dense<0.000000e+00> : vector<16xf32>
    %14 = vector.multi_reduction <add>, %0, %cst [1] : vector<16x32xf32> to vector<16xf32>
    %15 = vector.shape_cast %14 : vector<16xf32> to vector<16x1xf32>
    %cst_16 = arith.constant 3.200000e+01 : f32
    %16 = vector.broadcast %cst_16 : f32 to vector<16x1xf32>
    %17 = arith.divf %15, %16 : vector<16x1xf32>
    %18 = vector.broadcast %17 : vector<16x1xf32> to vector<16x32xf32>
    %19 = arith.subf %0, %18 : vector<16x32xf32>
    %20 = arith.mulf %19, %19 : vector<16x32xf32>
    %cst_17 = arith.constant dense<0.000000e+00> : vector<16xf32>
    %21 = vector.multi_reduction <add>, %20, %cst_17 [1] : vector<16x32xf32> to vector<16xf32>
    %22 = vector.shape_cast %21 : vector<16xf32> to vector<16x1xf32>
    %cst_18 = arith.constant 3.200000e+01 : f32
    %23 = vector.broadcast %cst_18 : f32 to vector<16x1xf32>
    %24 = arith.divf %22, %23 : vector<16x1xf32>
    %25 = vector.broadcast %17 : vector<16x1xf32> to vector<16x32xf32>
    %26 = arith.subf %0, %25 : vector<16x32xf32>
    %cst_19 = arith.constant 9.99999974E-6 : f32
    %27 = vector.broadcast %cst_19 : f32 to vector<16x1xf32>
    %28 = arith.addf %24, %27 : vector<16x1xf32>
    %29 = math.rsqrt %28 : vector<16x1xf32>
    %30 = vector.broadcast %29 : vector<16x1xf32> to vector<16x32xf32>
    %31 = arith.mulf %26, %30 : vector<16x32xf32>
    %32 = vector.broadcast %8 : vector<1x32xf32> to vector<16x32xf32>
    %33 = arith.mulf %31, %32 : vector<16x32xf32>
    %34 = vector.broadcast %9 : vector<1x32xf32> to vector<16x32xf32>
    %35 = arith.addf %33, %34 : vector<16x32xf32>
    %cst_20 = arith.constant dense<0.000000e+00> : vector<16x96xf32>
    %36 = tpu.matmul %35, %2, %cst_20 {dimension_numbers = #tpu.dot_dimension_numbers<[1], [0], [0], [1], [0, 0, 1, 1], [], []>} : vector<16x32xf32>, vector<32x96xf32>, vector<16x96xf32> -> vector<16x96xf32>
    %37 = vector.broadcast %6 : vector<1x96xf32> to vector<16x96xf32>
    %38 = arith.addf %36, %37 : vector<16x96xf32>
    %39 = vector.extract_strided_slice %38 {offsets = [0, 0], sizes = [16, 8], strides = [1, 1]} : vector<16x96xf32> to vector<16x8xf32>
    %40 = vector.extract_strided_slice %38 {offsets = [0, 8], sizes = [16, 8], strides = [1, 1]} : vector<16x96xf32> to vector<16x8xf32>
    %41 = vector.extract_strided_slice %38 {offsets = [0, 16], sizes = [16, 8], strides = [1, 1]} : vector<16x96xf32> to vector<16x8xf32>
    %42 = vector.extract_strided_slice %38 {offsets = [0, 24], sizes = [16, 8], strides = [1, 1]} : vector<16x96xf32> to vector<16x8xf32>
    %43 = vector.shape_cast %39 : vector<16x8xf32> to vector<1x16x8xf32>
    %44 = vector.shape_cast %40 : vector<16x8xf32> to vector<1x16x8xf32>
    %45 = vector.shape_cast %41 : vector<16x8xf32> to vector<1x16x8xf32>
    %46 = vector.shape_cast %42 : vector<16x8xf32> to vector<1x16x8xf32>
    %47 = tpu.concatenate %43, %44, %45, %46 in 0 : vector<1x16x8xf32>, vector<1x16x8xf32>, vector<1x16x8xf32>, vector<1x16x8xf32> -> vector<4x16x8xf32>
    %48 = vector.extract_strided_slice %38 {offsets = [0, 32], sizes = [16, 8], strides = [1, 1]} : vector<16x96xf32> to vector<16x8xf32>
    %49 = vector.extract_strided_slice %38 {offsets = [0, 40], sizes = [16, 8], strides = [1, 1]} : vector<16x96xf32> to vector<16x8xf32>
    %50 = vector.extract_strided_slice %38 {offsets = [0, 48], sizes = [16, 8], strides = [1, 1]} : vector<16x96xf32> to vector<16x8xf32>
    %51 = vector.extract_strided_slice %38 {offsets = [0, 56], sizes = [16, 8], strides = [1, 1]} : vector<16x96xf32> to vector<16x8xf32>
    %52 = vector.shape_cast %48 : vector<16x8xf32> to vector<1x16x8xf32>
    %53 = vector.shape_cast %49 : vector<16x8xf32> to vector<1x16x8xf32>
    %54 = vector.shape_cast %50 : vector<16x8xf32> to vector<1x16x8xf32>
    %55 = vector.shape_cast %51 : vector<16x8xf32> to vector<1x16x8xf32>
    %56 = tpu.concatenate %52, %53, %54, %55 in 0 : vector<1x16x8xf32>, vector<1x16x8xf32>, vector<1x16x8xf32>, vector<1x16x8xf32> -> vector<4x16x8xf32>
    %57 = vector.extract_strided_slice %38 {offsets = [0, 64], sizes = [16, 8], strides = [1, 1]} : vector<16x96xf32> to vector<16x8xf32>
    %58 = vector.extract_strided_slice %38 {offsets = [0, 72], sizes = [16, 8], strides = [1, 1]} : vector<16x96xf32> to vector<16x8xf32>
    %59 = vector.extract_strided_slice %38 {offsets = [0, 80], sizes = [16, 8], strides = [1, 1]} : vector<16x96xf32> to vector<16x8xf32>
    %60 = vector.extract_strided_slice %38 {offsets = [0, 88], sizes = [16, 8], strides = [1, 1]} : vector<16x96xf32> to vector<16x8xf32>
    %61 = vector.shape_cast %57 : vector<16x8xf32> to vector<1x16x8xf32>
    %62 = vector.shape_cast %58 : vector<16x8xf32> to vector<1x16x8xf32>
    %63 = vector.shape_cast %59 : vector<16x8xf32> to vector<1x16x8xf32>
    %64 = vector.shape_cast %60 : vector<16x8xf32> to vector<1x16x8xf32>
    %65 = tpu.concatenate %61, %62, %63, %64 in 0 : vector<1x16x8xf32>, vector<1x16x8xf32>, vector<1x16x8xf32>, vector<1x16x8xf32> -> vector<4x16x8xf32>
    "tpu.trace_start"() <{level = 10 : i32, message = "hqd,hkd->hqk"}> : () -> ()
    %cst_21 = arith.constant dense<0.000000e+00> : vector<4x16x16xf32>
    %66 = tpu.matmul %47, %56, %cst_21 {dimension_numbers = #tpu.dot_dimension_numbers<[2], [2], [1], [1], [0, 0, 0, 1, 1, 1], [0], [0]>} : vector<4x16x8xf32>, vector<4x16x8xf32>, vector<4x16x16xf32> -> vector<4x16x16xf32>
    "tpu.trace_stop"() : () -> ()
    %67 = vector.shape_cast %1 : vector<16x16xf32> to vector<1x16x16xf32>
    %68 = vector.broadcast %67 : vector<1x16x16xf32> to vector<4x16x16xf32>
    %69 = arith.addf %66, %68 : vector<4x16x16xf32>
    %cst_22 = arith.constant dense<0xFF800000> : vector<4x16xf32>
    %70 = vector.multi_reduction <maximumf>, %69, %cst_22 [2] : vector<4x16x16xf32> to vector<4x16xf32>
    %71 = vector.shape_cast %70 : vector<4x16xf32> to vector<4x16x1xf32>
    %72 = vector.broadcast %71 : vector<4x16x1xf32> to vector<4x16x16xf32>
    %73 = arith.subf %69, %72 : vector<4x16x16xf32>
    %74 = math.exp %73 : vector<4x16x16xf32>
    %cst_23 = arith.constant dense<0.000000e+00> : vector<4x16xf32>
    %75 = vector.multi_reduction <add>, %74, %cst_23 [2] : vector<4x16x16xf32> to vector<4x16xf32>
    %76 = vector.shape_cast %75 : vector<4x16xf32> to vector<4x16x1xf32>
    %77 = tpu.reciprocal %76 : vector<4x16x1xf32> -> vector<4x16x1xf32>
    %78 = vector.broadcast %77 : vector<4x16x1xf32> to vector<4x16x16xf32>
    %79 = arith.mulf %74, %78 : vector<4x16x16xf32>
    "tpu.trace_start"() <{level = 10 : i32, message = "hqk,hkd->hqd"}> : () -> ()
    %cst_24 = arith.constant dense<0.000000e+00> : vector<4x16x8xf32>
    %80 = tpu.matmul %79, %65, %cst_24 {dimension_numbers = #tpu.dot_dimension_numbers<[2], [1], [1], [2], [0, 0, 0, 1, 1, 2], [0], [0]>} : vector<4x16x16xf32>, vector<4x16x8xf32>, vector<4x16x8xf32> -> vector<4x16x8xf32>
    "tpu.trace_stop"() : () -> ()
    %81 = vector.extract_strided_slice %80 {offsets = [0, 0, 0], sizes = [1, 16, 8], strides = [1, 1, 1]} : vector<4x16x8xf32> to vector<1x16x8xf32>
    %82 = vector.shape_cast %81 : vector<1x16x8xf32> to vector<16x8xf32>
    %83 = vector.extract_strided_slice %80 {offsets = [1, 0, 0], sizes = [1, 16, 8], strides = [1, 1, 1]} : vector<4x16x8xf32> to vector<1x16x8xf32>
    %84 = vector.shape_cast %83 : vector<1x16x8xf32> to vector<16x8xf32>
    %85 = vector.extract_strided_slice %80 {offsets = [2, 0, 0], sizes = [1, 16, 8], strides = [1, 1, 1]} : vector<4x16x8xf32> to vector<1x16x8xf32>
    %86 = vector.shape_cast %85 : vector<1x16x8xf32> to vector<16x8xf32>
    %87 = vector.extract_strided_slice %80 {offsets = [3, 0, 0], sizes = [1, 16, 8], strides = [1, 1, 1]} : vector<4x16x8xf32> to vector<1x16x8xf32>
    %88 = vector.shape_cast %87 : vector<1x16x8xf32> to vector<16x8xf32>
    %89 = tpu.concatenate %82, %84, %86, %88 in 1 : vector<16x8xf32>, vector<16x8xf32>, vector<16x8xf32>, vector<16x8xf32> -> vector<16x32xf32>
    %cst_25 = arith.constant dense<0.000000e+00> : vector<16x32xf32>
    %90 = tpu.matmul %89, %3, %cst_25 {dimension_numbers = #tpu.dot_dimension_numbers<[1], [0], [0], [1], [0, 0, 1, 1], [], []>} : vector<16x32xf32>, vector<32x32xf32>, vector<16x32xf32> -> vector<16x32xf32>
    %91 = vector.broadcast %7 : vector<1x32xf32> to vector<16x32xf32>
    %92 = arith.addf %90, %91 : vector<16x32xf32>
    %93 = arith.addf %0, %92 : vector<16x32xf32>
    %cst_26 = arith.constant dense<0.000000e+00> : vector<16xf32>
    %94 = vector.multi_reduction <add>, %93, %cst_26 [1] : vector<16x32xf32> to vector<16xf32>
    %95 = vector.shape_cast %94 : vector<16xf32> to vector<16x1xf32>
    %cst_27 = arith.constant 3.200000e+01 : f32
    %96 = vector.broadcast %cst_27 : f32 to vector<16x1xf32>
    %97 = arith.divf %95, %96 : vector<16x1xf32>
    %98 = vector.broadcast %97 : vector<16x1xf32> to vector<16x32xf32>
    %99 = arith.subf %93, %98 : vector<16x32xf32>
    %100 = arith.mulf %99, %99 : vector<16x32xf32>
    %cst_28 = arith.constant dense<0.000000e+00> : vector<16xf32>
    %101 = vector.multi_reduction <add>, %100, %cst_28 [1] : vector<16x32xf32> to vector<16xf32>
    %102 = vector.shape_cast %101 : vector<16xf32> to vector<16x1xf32>
    %cst_29 = arith.constant 3.200000e+01 : f32
    %103 = vector.broadcast %cst_29 : f32 to vector<16x1xf32>
    %104 = arith.divf %102, %103 : vector<16x1xf32>
    %105 = vector.broadcast %97 : vector<16x1xf32> to vector<16x32xf32>
    %106 = arith.subf %93, %105 : vector<16x32xf32>
    %cst_30 = arith.constant 9.99999974E-6 : f32
    %107 = vector.broadcast %cst_30 : f32 to vector<16x1xf32>
    %108 = arith.addf %104, %107 : vector<16x1xf32>
    %109 = math.rsqrt %108 : vector<16x1xf32>
    %110 = vector.broadcast %109 : vector<16x1xf32> to vector<16x32xf32>
    %111 = arith.mulf %106, %110 : vector<16x32xf32>
    %112 = vector.broadcast %10 : vector<1x32xf32> to vector<16x32xf32>
    %113 = arith.mulf %111, %112 : vector<16x32xf32>
    %114 = vector.broadcast %11 : vector<1x32xf32> to vector<16x32xf32>
    %115 = arith.addf %113, %114 : vector<16x32xf32>
    %cst_31 = arith.constant dense<0.000000e+00> : vector<16x64xf32>
    %116 = tpu.matmul %115, %4, %cst_31 {dimension_numbers = #tpu.dot_dimension_numbers<[1], [0], [0], [1], [0, 0, 1, 1], [], []>} : vector<16x32xf32>, vector<32x64xf32>, vector<16x64xf32> -> vector<16x64xf32>
    %117 = vector.broadcast %12 : vector<1x64xf32> to vector<16x64xf32>
    %118 = arith.addf %116, %117 : vector<16x64xf32>
    %cst_32 = arith.constant 0.000000e+00 : f32
    %119 = vector.broadcast %cst_32 : f32 to vector<16x64xf32>
    %120 = arith.maximumf %118, %119 : vector<16x64xf32>
    %cst_33 = arith.constant dense<0.000000e+00> : vector<16x32xf32>
    %121 = tpu.matmul %120, %5, %cst_33 {dimension_numbers = #tpu.dot_dimension_numbers<[1], [0], [0], [1], [0, 0, 1, 1], [], []>} : vector<16x64xf32>, vector<64x32xf32>, vector<16x32xf32> -> vector<16x32xf32>
    %122 = vector.broadcast %13 : vector<1x32xf32> to vector<16x32xf32>
    %123 = arith.addf %121, %122 : vector<16x32xf32>
    %124 = arith.addf %93, %123 : vector<16x32xf32>
    %c168 = arith.constant 168 : index
    %c0_34 = arith.constant 0 : index
    %125 = vector.load %arg3[%c168, %c0_34] : memref<344x128xf32, #tpu.memory_space<vmem>>, vector<32x96xf32>
    %c200 = arith.constant 200 : index
    %c0_35 = arith.constant 0 : index
    %126 = vector.load %arg3[%c200, %c0_35] : memref<344x128xf32, #tpu.memory_space<vmem>>, vector<32x32xf32>
    %c232 = arith.constant 232 : index
    %c0_36 = arith.constant 0 : index
    %127 = vector.load %arg3[%c232, %c0_36] : memref<344x128xf32, #tpu.memory_space<vmem>>, vector<32x64xf32>
    %c264 = arith.constant 264 : index
    %c0_37 = arith.constant 0 : index
    %128 = vector.load %arg3[%c264, %c0_37] : memref<344x128xf32, #tpu.memory_space<vmem>>, vector<64x32xf32>
    %c328 = arith.constant 328 : index
    %c0_38 = arith.constant 0 : index
    %129 = vector.load %arg3[%c328, %c0_38] : memref<344x128xf32, #tpu.memory_space<vmem>>, vector<1x96xf32>
    %c329 = arith.constant 329 : index
    %c0_39 = arith.constant 0 : index
    %130 = vector.load %arg3[%c329, %c0_39] : memref<344x128xf32, #tpu.memory_space<vmem>>, vector<1x32xf32>
    %c330 = arith.constant 330 : index
    %c0_40 = arith.constant 0 : index
    %131 = vector.load %arg3[%c330, %c0_40] : memref<344x128xf32, #tpu.memory_space<vmem>>, vector<1x32xf32>
    %c331 = arith.constant 331 : index
    %c0_41 = arith.constant 0 : index
    %132 = vector.load %arg3[%c331, %c0_41] : memref<344x128xf32, #tpu.memory_space<vmem>>, vector<1x32xf32>
    %c332 = arith.constant 332 : index
    %c0_42 = arith.constant 0 : index
    %133 = vector.load %arg3[%c332, %c0_42] : memref<344x128xf32, #tpu.memory_space<vmem>>, vector<1x32xf32>
    %c333 = arith.constant 333 : index
    %c0_43 = arith.constant 0 : index
    %134 = vector.load %arg3[%c333, %c0_43] : memref<344x128xf32, #tpu.memory_space<vmem>>, vector<1x32xf32>
    %c334 = arith.constant 334 : index
    %c0_44 = arith.constant 0 : index
    %135 = vector.load %arg3[%c334, %c0_44] : memref<344x128xf32, #tpu.memory_space<vmem>>, vector<1x64xf32>
    %c335 = arith.constant 335 : index
    %c0_45 = arith.constant 0 : index
    %136 = vector.load %arg3[%c335, %c0_45] : memref<344x128xf32, #tpu.memory_space<vmem>>, vector<1x32xf32>
    %cst_46 = arith.constant dense<0.000000e+00> : vector<16xf32>
    %137 = vector.multi_reduction <add>, %124, %cst_46 [1] : vector<16x32xf32> to vector<16xf32>
    %138 = vector.shape_cast %137 : vector<16xf32> to vector<16x1xf32>
    %cst_47 = arith.constant 3.200000e+01 : f32
    %139 = vector.broadcast %cst_47 : f32 to vector<16x1xf32>
    %140 = arith.divf %138, %139 : vector<16x1xf32>
    %141 = vector.broadcast %140 : vector<16x1xf32> to vector<16x32xf32>
    %142 = arith.subf %124, %141 : vector<16x32xf32>
    %143 = arith.mulf %142, %142 : vector<16x32xf32>
    %cst_48 = arith.constant dense<0.000000e+00> : vector<16xf32>
    %144 = vector.multi_reduction <add>, %143, %cst_48 [1] : vector<16x32xf32> to vector<16xf32>
    %145 = vector.shape_cast %144 : vector<16xf32> to vector<16x1xf32>
    %cst_49 = arith.constant 3.200000e+01 : f32
    %146 = vector.broadcast %cst_49 : f32 to vector<16x1xf32>
    %147 = arith.divf %145, %146 : vector<16x1xf32>
    %148 = vector.broadcast %140 : vector<16x1xf32> to vector<16x32xf32>
    %149 = arith.subf %124, %148 : vector<16x32xf32>
    %cst_50 = arith.constant 9.99999974E-6 : f32
    %150 = vector.broadcast %cst_50 : f32 to vector<16x1xf32>
    %151 = arith.addf %147, %150 : vector<16x1xf32>
    %152 = math.rsqrt %151 : vector<16x1xf32>
    %153 = vector.broadcast %152 : vector<16x1xf32> to vector<16x32xf32>
    %154 = arith.mulf %149, %153 : vector<16x32xf32>
    %155 = vector.broadcast %131 : vector<1x32xf32> to vector<16x32xf32>
    %156 = arith.mulf %154, %155 : vector<16x32xf32>
    %157 = vector.broadcast %132 : vector<1x32xf32> to vector<16x32xf32>
    %158 = arith.addf %156, %157 : vector<16x32xf32>
    %cst_51 = arith.constant dense<0.000000e+00> : vector<16x96xf32>
    %159 = tpu.matmul %158, %125, %cst_51 {dimension_numbers = #tpu.dot_dimension_numbers<[1], [0], [0], [1], [0, 0, 1, 1], [], []>} : vector<16x32xf32>, vector<32x96xf32>, vector<16x96xf32> -> vector<16x96xf32>
    %160 = vector.broadcast %129 : vector<1x96xf32> to vector<16x96xf32>
    %161 = arith.addf %159, %160 : vector<16x96xf32>
    %162 = vector.extract_strided_slice %161 {offsets = [0, 0], sizes = [16, 8], strides = [1, 1]} : vector<16x96xf32> to vector<16x8xf32>
    %163 = vector.extract_strided_slice %161 {offsets = [0, 8], sizes = [16, 8], strides = [1, 1]} : vector<16x96xf32> to vector<16x8xf32>
    %164 = vector.extract_strided_slice %161 {offsets = [0, 16], sizes = [16, 8], strides = [1, 1]} : vector<16x96xf32> to vector<16x8xf32>
    %165 = vector.extract_strided_slice %161 {offsets = [0, 24], sizes = [16, 8], strides = [1, 1]} : vector<16x96xf32> to vector<16x8xf32>
    %166 = vector.shape_cast %162 : vector<16x8xf32> to vector<1x16x8xf32>
    %167 = vector.shape_cast %163 : vector<16x8xf32> to vector<1x16x8xf32>
    %168 = vector.shape_cast %164 : vector<16x8xf32> to vector<1x16x8xf32>
    %169 = vector.shape_cast %165 : vector<16x8xf32> to vector<1x16x8xf32>
    %170 = tpu.concatenate %166, %167, %168, %169 in 0 : vector<1x16x8xf32>, vector<1x16x8xf32>, vector<1x16x8xf32>, vector<1x16x8xf32> -> vector<4x16x8xf32>
    %171 = vector.extract_strided_slice %161 {offsets = [0, 32], sizes = [16, 8], strides = [1, 1]} : vector<16x96xf32> to vector<16x8xf32>
    %172 = vector.extract_strided_slice %161 {offsets = [0, 40], sizes = [16, 8], strides = [1, 1]} : vector<16x96xf32> to vector<16x8xf32>
    %173 = vector.extract_strided_slice %161 {offsets = [0, 48], sizes = [16, 8], strides = [1, 1]} : vector<16x96xf32> to vector<16x8xf32>
    %174 = vector.extract_strided_slice %161 {offsets = [0, 56], sizes = [16, 8], strides = [1, 1]} : vector<16x96xf32> to vector<16x8xf32>
    %175 = vector.shape_cast %171 : vector<16x8xf32> to vector<1x16x8xf32>
    %176 = vector.shape_cast %172 : vector<16x8xf32> to vector<1x16x8xf32>
    %177 = vector.shape_cast %173 : vector<16x8xf32> to vector<1x16x8xf32>
    %178 = vector.shape_cast %174 : vector<16x8xf32> to vector<1x16x8xf32>
    %179 = tpu.concatenate %175, %176, %177, %178 in 0 : vector<1x16x8xf32>, vector<1x16x8xf32>, vector<1x16x8xf32>, vector<1x16x8xf32> -> vector<4x16x8xf32>
    %180 = vector.extract_strided_slice %161 {offsets = [0, 64], sizes = [16, 8], strides = [1, 1]} : vector<16x96xf32> to vector<16x8xf32>
    %181 = vector.extract_strided_slice %161 {offsets = [0, 72], sizes = [16, 8], strides = [1, 1]} : vector<16x96xf32> to vector<16x8xf32>
    %182 = vector.extract_strided_slice %161 {offsets = [0, 80], sizes = [16, 8], strides = [1, 1]} : vector<16x96xf32> to vector<16x8xf32>
    %183 = vector.extract_strided_slice %161 {offsets = [0, 88], sizes = [16, 8], strides = [1, 1]} : vector<16x96xf32> to vector<16x8xf32>
    %184 = vector.shape_cast %180 : vector<16x8xf32> to vector<1x16x8xf32>
    %185 = vector.shape_cast %181 : vector<16x8xf32> to vector<1x16x8xf32>
    %186 = vector.shape_cast %182 : vector<16x8xf32> to vector<1x16x8xf32>
    %187 = vector.shape_cast %183 : vector<16x8xf32> to vector<1x16x8xf32>
    %188 = tpu.concatenate %184, %185, %186, %187 in 0 : vector<1x16x8xf32>, vector<1x16x8xf32>, vector<1x16x8xf32>, vector<1x16x8xf32> -> vector<4x16x8xf32>
    "tpu.trace_start"() <{level = 10 : i32, message = "hqd,hkd->hqk"}> : () -> ()
    %cst_52 = arith.constant dense<0.000000e+00> : vector<4x16x16xf32>
    %189 = tpu.matmul %170, %179, %cst_52 {dimension_numbers = #tpu.dot_dimension_numbers<[2], [2], [1], [1], [0, 0, 0, 1, 1, 1], [0], [0]>} : vector<4x16x8xf32>, vector<4x16x8xf32>, vector<4x16x16xf32> -> vector<4x16x16xf32>
    "tpu.trace_stop"() : () -> ()
    %190 = vector.shape_cast %1 : vector<16x16xf32> to vector<1x16x16xf32>
    %191 = vector.broadcast %190 : vector<1x16x16xf32> to vector<4x16x16xf32>
    %192 = arith.addf %189, %191 : vector<4x16x16xf32>
    %cst_53 = arith.constant dense<0xFF800000> : vector<4x16xf32>
    %193 = vector.multi_reduction <maximumf>, %192, %cst_53 [2] : vector<4x16x16xf32> to vector<4x16xf32>
    %194 = vector.shape_cast %193 : vector<4x16xf32> to vector<4x16x1xf32>
    %195 = vector.broadcast %194 : vector<4x16x1xf32> to vector<4x16x16xf32>
    %196 = arith.subf %192, %195 : vector<4x16x16xf32>
    %197 = math.exp %196 : vector<4x16x16xf32>
    %cst_54 = arith.constant dense<0.000000e+00> : vector<4x16xf32>
    %198 = vector.multi_reduction <add>, %197, %cst_54 [2] : vector<4x16x16xf32> to vector<4x16xf32>
    %199 = vector.shape_cast %198 : vector<4x16xf32> to vector<4x16x1xf32>
    %200 = tpu.reciprocal %199 : vector<4x16x1xf32> -> vector<4x16x1xf32>
    %201 = vector.broadcast %200 : vector<4x16x1xf32> to vector<4x16x16xf32>
    %202 = arith.mulf %197, %201 : vector<4x16x16xf32>
    "tpu.trace_start"() <{level = 10 : i32, message = "hqk,hkd->hqd"}> : () -> ()
    %cst_55 = arith.constant dense<0.000000e+00> : vector<4x16x8xf32>
    %203 = tpu.matmul %202, %188, %cst_55 {dimension_numbers = #tpu.dot_dimension_numbers<[2], [1], [1], [2], [0, 0, 0, 1, 1, 2], [0], [0]>} : vector<4x16x16xf32>, vector<4x16x8xf32>, vector<4x16x8xf32> -> vector<4x16x8xf32>
    "tpu.trace_stop"() : () -> ()
    %204 = vector.extract_strided_slice %203 {offsets = [0, 0, 0], sizes = [1, 16, 8], strides = [1, 1, 1]} : vector<4x16x8xf32> to vector<1x16x8xf32>
    %205 = vector.shape_cast %204 : vector<1x16x8xf32> to vector<16x8xf32>
    %206 = vector.extract_strided_slice %203 {offsets = [1, 0, 0], sizes = [1, 16, 8], strides = [1, 1, 1]} : vector<4x16x8xf32> to vector<1x16x8xf32>
    %207 = vector.shape_cast %206 : vector<1x16x8xf32> to vector<16x8xf32>
    %208 = vector.extract_strided_slice %203 {offsets = [2, 0, 0], sizes = [1, 16, 8], strides = [1, 1, 1]} : vector<4x16x8xf32> to vector<1x16x8xf32>
    %209 = vector.shape_cast %208 : vector<1x16x8xf32> to vector<16x8xf32>
    %210 = vector.extract_strided_slice %203 {offsets = [3, 0, 0], sizes = [1, 16, 8], strides = [1, 1, 1]} : vector<4x16x8xf32> to vector<1x16x8xf32>
    %211 = vector.shape_cast %210 : vector<1x16x8xf32> to vector<16x8xf32>
    %212 = tpu.concatenate %205, %207, %209, %211 in 1 : vector<16x8xf32>, vector<16x8xf32>, vector<16x8xf32>, vector<16x8xf32> -> vector<16x32xf32>
    %cst_56 = arith.constant dense<0.000000e+00> : vector<16x32xf32>
    %213 = tpu.matmul %212, %126, %cst_56 {dimension_numbers = #tpu.dot_dimension_numbers<[1], [0], [0], [1], [0, 0, 1, 1], [], []>} : vector<16x32xf32>, vector<32x32xf32>, vector<16x32xf32> -> vector<16x32xf32>
    %214 = vector.broadcast %130 : vector<1x32xf32> to vector<16x32xf32>
    %215 = arith.addf %213, %214 : vector<16x32xf32>
    %216 = arith.addf %124, %215 : vector<16x32xf32>
    %cst_57 = arith.constant dense<0.000000e+00> : vector<16xf32>
    %217 = vector.multi_reduction <add>, %216, %cst_57 [1] : vector<16x32xf32> to vector<16xf32>
    %218 = vector.shape_cast %217 : vector<16xf32> to vector<16x1xf32>
    %cst_58 = arith.constant 3.200000e+01 : f32
    %219 = vector.broadcast %cst_58 : f32 to vector<16x1xf32>
    %220 = arith.divf %218, %219 : vector<16x1xf32>
    %221 = vector.broadcast %220 : vector<16x1xf32> to vector<16x32xf32>
    %222 = arith.subf %216, %221 : vector<16x32xf32>
    %223 = arith.mulf %222, %222 : vector<16x32xf32>
    %cst_59 = arith.constant dense<0.000000e+00> : vector<16xf32>
    %224 = vector.multi_reduction <add>, %223, %cst_59 [1] : vector<16x32xf32> to vector<16xf32>
    %225 = vector.shape_cast %224 : vector<16xf32> to vector<16x1xf32>
    %cst_60 = arith.constant 3.200000e+01 : f32
    %226 = vector.broadcast %cst_60 : f32 to vector<16x1xf32>
    %227 = arith.divf %225, %226 : vector<16x1xf32>
    %228 = vector.broadcast %220 : vector<16x1xf32> to vector<16x32xf32>
    %229 = arith.subf %216, %228 : vector<16x32xf32>
    %cst_61 = arith.constant 9.99999974E-6 : f32
    %230 = vector.broadcast %cst_61 : f32 to vector<16x1xf32>
    %231 = arith.addf %227, %230 : vector<16x1xf32>
    %232 = math.rsqrt %231 : vector<16x1xf32>
    %233 = vector.broadcast %232 : vector<16x1xf32> to vector<16x32xf32>
    %234 = arith.mulf %229, %233 : vector<16x32xf32>
    %235 = vector.broadcast %133 : vector<1x32xf32> to vector<16x32xf32>
    %236 = arith.mulf %234, %235 : vector<16x32xf32>
    %237 = vector.broadcast %134 : vector<1x32xf32> to vector<16x32xf32>
    %238 = arith.addf %236, %237 : vector<16x32xf32>
    %cst_62 = arith.constant dense<0.000000e+00> : vector<16x64xf32>
    %239 = tpu.matmul %238, %127, %cst_62 {dimension_numbers = #tpu.dot_dimension_numbers<[1], [0], [0], [1], [0, 0, 1, 1], [], []>} : vector<16x32xf32>, vector<32x64xf32>, vector<16x64xf32> -> vector<16x64xf32>
    %240 = vector.broadcast %135 : vector<1x64xf32> to vector<16x64xf32>
    %241 = arith.addf %239, %240 : vector<16x64xf32>
    %cst_63 = arith.constant 0.000000e+00 : f32
    %242 = vector.broadcast %cst_63 : f32 to vector<16x64xf32>
    %243 = arith.maximumf %241, %242 : vector<16x64xf32>
    %cst_64 = arith.constant dense<0.000000e+00> : vector<16x32xf32>
    %244 = tpu.matmul %243, %128, %cst_64 {dimension_numbers = #tpu.dot_dimension_numbers<[1], [0], [0], [1], [0, 0, 1, 1], [], []>} : vector<16x64xf32>, vector<64x32xf32>, vector<16x32xf32> -> vector<16x32xf32>
    %245 = vector.broadcast %136 : vector<1x32xf32> to vector<16x32xf32>
    %246 = arith.addf %244, %245 : vector<16x32xf32>
    %247 = arith.addf %216, %246 : vector<16x32xf32>
    %c336 = arith.constant 336 : index
    %c0_65 = arith.constant 0 : index
    %248 = vector.load %arg3[%c336, %c0_65] : memref<344x128xf32, #tpu.memory_space<vmem>>, vector<1x32xf32>
    %c337 = arith.constant 337 : index
    %c0_66 = arith.constant 0 : index
    %249 = vector.load %arg3[%c337, %c0_66] : memref<344x128xf32, #tpu.memory_space<vmem>>, vector<1x32xf32>
    %cst_67 = arith.constant dense<0.000000e+00> : vector<16xf32>
    %250 = vector.multi_reduction <add>, %247, %cst_67 [1] : vector<16x32xf32> to vector<16xf32>
    %251 = vector.shape_cast %250 : vector<16xf32> to vector<16x1xf32>
    %cst_68 = arith.constant 3.200000e+01 : f32
    %252 = vector.broadcast %cst_68 : f32 to vector<16x1xf32>
    %253 = arith.divf %251, %252 : vector<16x1xf32>
    %254 = vector.broadcast %253 : vector<16x1xf32> to vector<16x32xf32>
    %255 = arith.subf %247, %254 : vector<16x32xf32>
    %256 = arith.mulf %255, %255 : vector<16x32xf32>
    %cst_69 = arith.constant dense<0.000000e+00> : vector<16xf32>
    %257 = vector.multi_reduction <add>, %256, %cst_69 [1] : vector<16x32xf32> to vector<16xf32>
    %258 = vector.shape_cast %257 : vector<16xf32> to vector<16x1xf32>
    %cst_70 = arith.constant 3.200000e+01 : f32
    %259 = vector.broadcast %cst_70 : f32 to vector<16x1xf32>
    %260 = arith.divf %258, %259 : vector<16x1xf32>
    %261 = vector.broadcast %253 : vector<16x1xf32> to vector<16x32xf32>
    %262 = arith.subf %247, %261 : vector<16x32xf32>
    %cst_71 = arith.constant 9.99999974E-6 : f32
    %263 = vector.broadcast %cst_71 : f32 to vector<16x1xf32>
    %264 = arith.addf %260, %263 : vector<16x1xf32>
    %265 = math.rsqrt %264 : vector<16x1xf32>
    %266 = vector.broadcast %265 : vector<16x1xf32> to vector<16x32xf32>
    %267 = arith.mulf %262, %266 : vector<16x32xf32>
    %268 = vector.broadcast %248 : vector<1x32xf32> to vector<16x32xf32>
    %269 = arith.mulf %267, %268 : vector<16x32xf32>
    %270 = vector.broadcast %249 : vector<1x32xf32> to vector<16x32xf32>
    %271 = arith.addf %269, %270 : vector<16x32xf32>
    %c0_72 = arith.constant 0 : index
    %c0_73 = arith.constant 0 : index
    %272 = vector.load %arg4[%c0_72, %c0_73] : memref<16x32xf32, #tpu.memory_space<vmem>>, vector<16x32xf32>
    tpu.vector_store %arg4[%c0_72, %c0_73], %271 {strides = array<i32>} : memref<16x32xf32, #tpu.memory_space<vmem>>, vector<16x32xf32>,
    return
  }
  func.func @transform_0(%arg0: i32) -> (i32, i32) {
    %c0_i32 = arith.constant 0 : i32
    %c0_i32_0 = arith.constant 0 : i32
    %c0_i32_1 = arith.constant 0 : i32
    return %c0_i32, %c0_i32_0 : i32, i32
  }
  func.func @transform_1(%arg0: i32) -> (i32, i32) {
    %c0_i32 = arith.constant 0 : i32
    %c0_i32_0 = arith.constant 0 : i32
    %c0_i32_1 = arith.constant 0 : i32
    return %c0_i32, %c0_i32_0 : i32, i32
  }
  func.func @transform_2(%arg0: i32) -> (i32, i32) {
    %c0_i32 = arith.constant 0 : i32
    %c0_i32_0 = arith.constant 0 : i32
    %c0_i32_1 = arith.constant 0 : i32
    return %c0_i32, %c0_i32_0 : i32, i32
  }
  func.func @transform_3(%arg0: i32) -> (i32, i32) {
    %c0_i32 = arith.constant 0 : i32
    %c0_i32_0 = arith.constant 0 : i32
    %c0_i32_1 = arith.constant 0 : i32
    return %c0_i32, %c0_i32_0 : i32, i32
  }
}

</mosaic_0001>

<llo_original>
// kernel: transformer_encoder.1
$region0: #{transformer_encoder.1}
  #allocation0 [shape = 'u32[]', space=smem, size = 0x4, offset = 0x4, fixed_abs, tag = 'smem constant byte address 0x4 - core index']
  #allocation1 [shape = 'u32[144,128]{1,0:T(1,128)}', space=vmem, size = 0x12000, scoped, tag = 'internal scratch']
  %s0 = inlined_call_operand.vmem [shape: f32[16,32], index: 0, kind: input, shape index: {}]
  %s1 = inlined_call_operand.vmem [shape: f32[16,16], index: 1, kind: input, shape index: {}]
  %s2 = inlined_call_operand.hbm [shape: f32[344,128], index: 2, kind: input, shape index: {}]
  %s3 = inlined_call_operand.hbm [shape: f32[16,32], index: 3, kind: output, shape index: {}]
  %s4 = sld [smem:[#allocation0]]
  $region26: #{transformer_encoder.1} parent=0
    _
  %s6 = ssub.s32 1, %s4
  %s7 = scalar_select 0, %s6, %s4
  $region1: #{transformer_encoder.1} parent=0
    #allocation2 [shape = 'u8[176128]{0}', space=vmem, size = 0x2b000, scoped, tag = 'input window, operand 2, single buffered']
    #allocation3 [shape = 's32[1]{0}', space=sflag, size = 0x4, scoped, tag = 'scoped memory for transformer_encoder.1']
    #allocation4 [shape = 's32[1]{0}', space=sflag, size = 0x4, scoped, tag = 'scoped memory for transformer_encoder.1']
    #allocation5 [shape = 'u8[8192]{0}', space=vmem, size = 0x2000, scoped, tag = 'output window, operand 0, single buffered']
    %8 = vsyncpa [#allocation3], 0
    %9 = vsyncpa [#allocation4], 0
    // Predicated region
    $region2: #{transformer_encoder.1} parent=1 // pred_check
      _
    $region3: #{transformer_encoder.1} parent=1 // pred_check_branch
      %11 = sbr.rel (0) target = $region5
    $region4: #{transformer_encoder.1} parent=1 // pred_region
      _
    $region5: #{transformer_encoder.1} parent=1 // pred_fallthru
      _
    // Predicated region
    $region6: #{transformer_encoder.1} parent=1 // pred_check
      _
    $region7: #{transformer_encoder.1} parent=1 // pred_check_branch
      %13 = sbr.rel (0) target = $region9
    $region8: #{transformer_encoder.1} parent=1 // pred_region
      _
    $region9: #{transformer_encoder.1} parent=1 // pred_fallthru
      _
    // Predicated region
    $region10: #{transformer_encoder.1} parent=1 // pred_check
      _
    $region11: #{transformer_encoder.1} parent=1 // pred_check_branch
      %15 = sbr.rel (0) target = $region13
    $region12: #{transformer_encoder.1} parent=1 // pred_region
      %s17 = ssub.s32 5504, 5504
      %18 = vsyncadd [#allocation3], %s17
      %s19 = sshll.u32 [#allocation2], 4
      %s20 = int_to_ptr.vmem [resolvable:$true] %s19
      %25 = dma.hbm_to_vmem [thread:$0]  %s2, 5504, %s20, [#allocation3], 128, 128, 8
    $region13: #{transformer_encoder.1} parent=1 // pred_fallthru
      _
    // Predicated region
    $region14: #{transformer_encoder.1} parent=1 // pred_check
      _
    $region15: #{transformer_encoder.1} parent=1 // pred_check_branch
      %27 = sbr.rel (0) target = $region17
    $region16: #{transformer_encoder.1} parent=1 // pred_region
      %28 = dma.done [#allocation3], 5504
    $region17: #{transformer_encoder.1} parent=1 // pred_fallthru
      _
    %v29 = vld [vmem:[%s0] sm:$0xff]
    %v30 = vld [vmem:[%s0 + $0x8] sm:$0xff]
    %v31 = vld [vmem:[%s1] sm:$0xff]
    %v32 = vld [vmem:[%s1 + $0x8] sm:$0xff]
    %v33 = vld [vmem:[#allocation2] sm:$0xff]
    %v34 = vld [vmem:[#allocation2 + $0x8] sm:$0xff]
    %v35 = vld [vmem:[#allocation2 + $0x10] sm:$0xff]
    %v36 = vld [vmem:[#allocation2 + $0x18] sm:$0xff]
    %v37 = vld [vmem:[#allocation2 + $0x20] sm:$0xff]
    %v38 = vld [vmem:[#allocation2 + $0x28] sm:$0xff]
    %v39 = vld [vmem:[#allocation2 + $0x30] sm:$0xff]
    %v40 = vld [vmem:[#allocation2 + $0x38] sm:$0xff]
    %v41 = vld [vmem:[#allocation2 + $0x40] sm:$0xff]
    %v42 = vld [vmem:[#allocation2 + $0x48] sm:$0xff]
    %v43 = vld [vmem:[#allocation2 + $0x50] sm:$0xff]
    %v44 = vld [vmem:[#allocation2 + $0x58] sm:$0xff]
    %v45 = vld [vmem:[#allocation2 + $0x60] sm:$0xff]
    %v46 = vld [vmem:[#allocation2 + $0x68] sm:$0xff]
    %v47 = vld [vmem:[#allocation2 + $0x70] sm:$0xff]
    %v48 = vld [vmem:[#allocation2 + $0x78] sm:$0xff]
    %v49 = vld [vmem:[#allocation2 + $0x80] sm:$0xff]
    %v50 = vld [vmem:[#allocation2 + $0x88] sm:$0xff]
    %v51 = vld [vmem:[#allocation2 + $0x90] sm:$0xff]
    %v52 = vld [vmem:[#allocation2 + $0x98] sm:$0xff]
    %v53 = vld [vmem:[#allocation2 + $0xa0] sm:$0x1]
    %v54 = vld [vmem:[#allocation2 + $0xa1] sm:$0x1]
    %v55 = vld [vmem:[#allocation2 + $0xa2] sm:$0x1]
    %v56 = vld [vmem:[#allocation2 + $0xa3] sm:$0x1]
    %v57 = vld [vmem:[#allocation2 + $0xa4] sm:$0x1]
    %v58 = vld [vmem:[#allocation2 + $0xa5] sm:$0x1]
    %v59 = vld [vmem:[#allocation2 + $0xa6] sm:$0x1]
    %v60 = vld [vmem:[#allocation2 + $0xa7] sm:$0x1]
    %vm61 = vcmask 261120
    %v62 = vsel %vm61, %v29, 0.0
    %63 = vadd.xlane.f32.xlu0 %v62
    %v64 = vpop.xlane.xlu0 %63
    %v65 = vsel %vm61, %v30, 0.0
    %66 = vadd.xlane.f32.xlu0 %v65
    %v67 = vpop.xlane.xlu0 %66
    %v68 = vrcp.pop 32.0
    %v69 = vmul.f32 %v64, %v68
    %v70 = vmul.f32 %v67, %v68
    %v71 = vsub.f32 %v29, %v69
    %v72 = vsub.f32 %v30, %v70
    %v73 = vmul.f32 %v71, %v71
    %v74 = vmul.f32 %v72, %v72
    %v75 = vsel %vm61, %v73, 0.0
    %76 = vadd.xlane.f32.xlu0 %v75
    %v77 = vpop.xlane.xlu0 %76
    %v78 = vsel %vm61, %v74, 0.0
    %79 = vadd.xlane.f32.xlu0 %v78
    %v80 = vpop.xlane.xlu0 %79
    %v81 = vmul.f32 %v77, %v68
    %v82 = vmul.f32 %v80, %v68
    %v83 = vadd.f32 %v81, 1e-05
    %v84 = vadd.f32 %v82, 1e-05
    %v85 = vrsqrt.pop %v83
    %v86 = vrsqrt.pop %v84
    %v87 = vmul.f32 %v71, %v85
    %v88 = vmul.f32 %v72, %v86
    %v89 = vlaneseq
    %v90 = vshrl.u32 %v89, 7
    %v91 = vsub.s32 0, %v90
    %v92 = vrot.slane %v55, %v91
    %v93 = vmul.f32 %v87, %v92
    %v94 = vmul.f32 %v88, %v92
    %v95 = vlaneseq
    %v96 = vshrl.u32 %v95, 7
    %v97 = vsub.s32 0, %v96
    %v98 = vrot.slane %v56, %v97
    %v99 = vadd.f32 %v93, %v98
    %v100 = vadd.f32 %v94, %v98
    %v101 = vlaneseq
    %v102 = vshrl.u32 %v101, 7
    %v103 = vsub.s32 0, %v102
    %v104 = vrot.slane %v53, %v103
    %v106 = vsel %vm61, %v99, 0
    %v109 = vsel %vm61, %v100, 0
    %111 = vmatprep.subr.mxu0 0.0
    %112 = vmatpush1.msra.mxu0 %v33
    %113 = vmatprep.subr.mxu0 0.0
    %114 = vmatpush1.msra.mxu0 %v34
    %115 = vmatprep.subr.mxu0 0.0
    %116 = vmatpush1.msra.mxu0 %v35
    %117 = vmatprep.subr.mxu0 0.0
    %118 = vmatpush1.msra.mxu0 %v36
    %119 = vmatprep.subr.mxu0 0.0
    %120 = vmatpush1.msra.mxu0 0.0
    %121 = vmatprep.subr.mxu0 0.0
    %122 = vmatpush1.msra.mxu0 0.0
    %123 = vmatprep.subr.mxu0 0.0
    %124 = vmatpush1.msra.mxu0 0.0
    %125 = vmatprep.subr.mxu0 0.0
    %126 = vmatpush1.msra.mxu0 0.0
    %127 = vmatprep.subr.mxu0 0.0
    %128 = vmatpush1.msra.mxu0 0.0
    %129 = vmatprep.subr.mxu0 0.0
    %130 = vmatpush1.msra.mxu0 0.0
    %131 = vmatprep.subr.mxu0 0.0
    %132 = vmatpush1.msra.mxu0 0.0
    %133 = vmatprep.subr.mxu0 0.0
    %134 = vmatpush1.msra.mxu0 0.0
    %135 = vmatprep.subr.mxu0 0.0
    %136 = vmatpush1.msra.mxu0 0.0
    %137 = vmatprep.subr.mxu0 0.0
    %138 = vmatpush1.msra.mxu0 0.0
    %139 = vmatprep.subr.mxu0 0.0
    %140 = vmatpush1.msra.mxu0 0.0
    %141 = vmatprep.subr.mxu0 0.0
    %142 = vmatpush1.msra.mxu0 0.0
    %143 = vmatprep.subr.mxu0 0.0
    %144 = vmatpush1.msra.mxu0 0.0
    %145 = vmatprep.subr.mxu0 0.0
    %146 = vmatpush1.msra.mxu0 0.0
    %147 = vmatprep.subr.mxu0 0.0
    %148 = vmatpush1.msra.mxu0 0.0
    %149 = vmatprep.subr.mxu0 0.0
    %150 = vmatpush1.msra.mxu0 0.0
    %151 = vmatprep.subr.mxu0 0.0
    %152 = vmatpush1.msra.mxu0 0.0
    %153 = vmatprep.subr.mxu0 0.0
    %154 = vmatpush1.msra.mxu0 0.0
    %155 = vmatprep.subr.mxu0 0.0
    %156 = vmatpush1.msra.mxu0 0.0
    %157 = vmatprep.subr.mxu0 0.0
    %158 = vmatpush1.msra.mxu0 0.0
    %159 = vmatprep.subr.mxu0 0.0
    %160 = vmatpush1.msra.mxu0 0.0
    %161 = vmatprep.subr.mxu0 0.0
    %162 = vmatpush1.msra.mxu0 0.0
    %163 = vmatprep.subr.mxu0 0.0
    %164 = vmatpush1.msra.mxu0 0.0
    %165 = vmatprep.subr.mxu0 0.0
    %166 = vmatpush1.msra.mxu0 0.0
    %167 = vmatprep.subr.mxu0 0.0
    %168 = vmatpush1.msra.mxu0 0.0
    %169 = vmatprep.subr.mxu0 0.0
    %170 = vmatpush1.msra.mxu0 0.0
    %171 = vmatprep.subr.mxu0 0.0
    %172 = vmatpush1.msra.mxu0 0.0
    %173 = vmatprep.subr.mxu0 0.0
    %174 = vmatpush1.msra.mxu0 0.0
    %175 = vmatprep.mubr.f32.mxu0 0.0
    %176 = vmatmul.mubr.f32.gmra.mrb[0].mxu0 %v106
    %v177 = vpop.f32.mrb[0].mxu0
    %v178 = vadd.f32 %v104, %v177
    %v179 = vpop.f32.mrb[0].mxu0
    %180 = vmatprep.mubr.f32.mxu0 0.0
    %181 = vmatmul.mubr.f32.gmra.mrb[0].mxu0 %v109
    %v182 = vpop.f32.mrb[0].mxu0
    %v183 = vadd.f32 %v104, %v182
    %v184 = vpop.f32.mrb[0].mxu0
    %185 = vdwg.mxu0
    %188 = vrot.lane.b32.xlu0 %v178, 120
    %v189 = vpop.permute.xlu0 %188
    %190 = vrot.lane.b32.xlu0 %v183, 120
    %v191 = vpop.permute.xlu0 %190
    %192 = vrot.lane.b32.xlu0 %v178, 112
    %v193 = vpop.permute.xlu0 %192
    %194 = vrot.lane.b32.xlu0 %v183, 112
    %v195 = vpop.permute.xlu0 %194
    %196 = vrot.lane.b32.xlu0 %v178, 104
    %v197 = vpop.permute.xlu0 %196
    %198 = vrot.lane.b32.xlu0 %v183, 104
    %v199 = vpop.permute.xlu0 %198
    %200 = vrot.lane.b32.xlu0 %v178, 96
    %v201 = vpop.permute.xlu0 %200
    %202 = vrot.lane.b32.xlu0 %v183, 96
    %v203 = vpop.permute.xlu0 %202
    %vm204 = vcmask 64512
    %v205 = vsel %vm204, %v178, 0
    %v207 = vsel %vm204, %v183, 0
    %v209 = vsel %vm204, %v201, 0
    %v211 = vsel %vm204, %v203, 0
    %213 = vmatprep.subr.mxu0 0.0
    %214 = vmatpush1.xpose.msra.mxu0 %v209
    %215 = vmatprep.subr.mxu0 0.0
    %216 = vmatpush1.xpose.msra.mxu0 %v211
    %217 = vmatprep.subr.mxu0 0.0
    %218 = vmatpush1.xpose.msra.mxu0 0.0
    %219 = vmatprep.subr.mxu0 0.0
    %220 = vmatpush1.xpose.msra.mxu0 0.0
    %221 = vmatprep.subr.mxu0 0.0
    %222 = vmatpush1.xpose.msra.mxu0 0.0
    %223 = vmatprep.subr.mxu0 0.0
    %224 = vmatpush1.xpose.msra.mxu0 0.0
    %225 = vmatprep.subr.mxu0 0.0
    %226 = vmatpush1.xpose.msra.mxu0 0.0
    %227 = vmatprep.subr.mxu0 0.0
    %228 = vmatpush1.xpose.msra.mxu0 0.0
    %229 = vmatprep.subr.mxu0 0.0
    %230 = vmatpush1.xpose.msra.mxu0 0.0
    %231 = vmatprep.subr.mxu0 0.0
    %232 = vmatpush1.xpose.msra.mxu0 0.0
    %233 = vmatprep.subr.mxu0 0.0
    %234 = vmatpush1.xpose.msra.mxu0 0.0
    %235 = vmatprep.subr.mxu0 0.0
    %236 = vmatpush1.xpose.msra.mxu0 0.0
    %237 = vmatprep.subr.mxu0 0.0
    %238 = vmatpush1.xpose.msra.mxu0 0.0
    %239 = vmatprep.subr.mxu0 0.0
    %240 = vmatpush1.xpose.msra.mxu0 0.0
    %241 = vmatprep.subr.mxu0 0.0
    %242 = vmatpush1.xpose.msra.mxu0 0.0
    %243 = vmatprep.subr.mxu0 0.0
    %244 = vmatpush1.xpose.msra.mxu0 0.0
    %245 = vmatprep.subr.mxu0 0.0
    %246 = vmatpush1.xpose.msra.mxu0 0.0
    %247 = vmatprep.subr.mxu0 0.0
    %248 = vmatpush1.xpose.msra.mxu0 0.0
    %249 = vmatprep.subr.mxu0 0.0
    %250 = vmatpush1.xpose.msra.mxu0 0.0
    %251 = vmatprep.subr.mxu0 0.0
    %252 = vmatpush1.xpose.msra.mxu0 0.0
    %253 = vmatprep.subr.mxu0 0.0
    %254 = vmatpush1.xpose.msra.mxu0 0.0
    %255 = vmatprep.subr.mxu0 0.0
    %256 = vmatpush1.xpose.msra.mxu0 0.0
    %257 = vmatprep.subr.mxu0 0.0
    %258 = vmatpush1.xpose.msra.mxu0 0.0
    %259 = vmatprep.subr.mxu0 0.0
    %260 = vmatpush1.xpose.msra.mxu0 0.0
    %261 = vmatprep.subr.mxu0 0.0
    %262 = vmatpush1.xpose.msra.mxu0 0.0
    %263 = vmatprep.subr.mxu0 0.0
    %264 = vmatpush1.xpose.msra.mxu0 0.0
    %265 = vmatprep.subr.mxu0 0.0
    %266 = vmatpush1.xpose.msra.mxu0 0.0
    %267 = vmatprep.subr.mxu0 0.0
    %268 = vmatpush1.xpose.msra.mxu0 0.0
    %269 = vmatprep.subr.mxu0 0.0
    %270 = vmatpush1.xpose.msra.mxu0 0.0
    %271 = vmatprep.subr.mxu0 0.0
    %272 = vmatpush1.xpose.msra.mxu0 0.0
    %273 = vmatprep.subr.mxu0 0.0
    %274 = vmatpush1.xpose.msra.mxu0 0.0
    %275 = vmatprep.subr.mxu0 0.0
    %276 = vmatpush1.xpose.msra.mxu0 0.0
    %277 = vmatprep.mubr.f32.mxu0 0.0
    %278 = vmatmul.mubr.f32.gmra.mrb[0].mxu0 %v205
    %v279 = vpop.f32.mrb[0].mxu0
    %v280 = vadd.f32 %v31, %v279
    %v281 = vpop.f32.mrb[0].mxu0
    %282 = vmatprep.mubr.f32.mxu0 0.0
    %283 = vmatmul.mubr.f32.gmra.mrb[0].mxu0 %v207
    %v284 = vpop.f32.mrb[0].mxu0
    %v285 = vadd.f32 %v32, %v284
    %v286 = vpop.f32.mrb[0].mxu0
    %287 = vdwg.mxu0
    %288 = vrot.lane.b32.xlu0 %v189, 96
    %v289 = vpop.permute.xlu0 %288
    %290 = vrot.lane.b32.xlu0 %v191, 96
    %v291 = vpop.permute.xlu0 %290
    %v292 = vsel %vm204, %v189, 0
    %v294 = vsel %vm204, %v191, 0
    %v296 = vsel %vm204, %v289, 0
    %v298 = vsel %vm204, %v291, 0
    %300 = vmatprep.subr.mxu0 0.0
    %301 = vmatpush1.xpose.msra.mxu0 %v296
    %302 = vmatprep.subr.mxu0 0.0
    %303 = vmatpush1.xpose.msra.mxu0 %v298
    %304 = vmatprep.subr.mxu0 0.0
    %305 = vmatpush1.xpose.msra.mxu0 0.0
    %306 = vmatprep.subr.mxu0 0.0
    %307 = vmatpush1.xpose.msra.mxu0 0.0
    %308 = vmatprep.subr.mxu0 0.0
    %309 = vmatpush1.xpose.msra.mxu0 0.0
    %310 = vmatprep.subr.mxu0 0.0
    %311 = vmatpush1.xpose.msra.mxu0 0.0
    %312 = vmatprep.subr.mxu0 0.0
    %313 = vmatpush1.xpose.msra.mxu0 0.0
    %314 = vmatprep.subr.mxu0 0.0
    %315 = vmatpush1.xpose.msra.mxu0 0.0
    %316 = vmatprep.subr.mxu0 0.0
    %317 = vmatpush1.xpose.msra.mxu0 0.0
    %318 = vmatprep.subr.mxu0 0.0
    %319 = vmatpush1.xpose.msra.mxu0 0.0
    %320 = vmatprep.subr.mxu0 0.0
    %321 = vmatpush1.xpose.msra.mxu0 0.0
    %322 = vmatprep.subr.mxu0 0.0
    %323 = vmatpush1.xpose.msra.mxu0 0.0
    %324 = vmatprep.subr.mxu0 0.0
    %325 = vmatpush1.xpose.msra.mxu0 0.0
    %326 = vmatprep.subr.mxu0 0.0
    %327 = vmatpush1.xpose.msra.mxu0 0.0
    %328 = vmatprep.subr.mxu0 0.0
    %329 = vmatpush1.xpose.msra.mxu0 0.0
    %330 = vmatprep.subr.mxu0 0.0
    %331 = vmatpush1.xpose.msra.mxu0 0.0
    %332 = vmatprep.subr.mxu0 0.0
    %333 = vmatpush1.xpose.msra.mxu0 0.0
    %334 = vmatprep.subr.mxu0 0.0
    %335 = vmatpush1.xpose.msra.mxu0 0.0
    %336 = vmatprep.subr.mxu0 0.0
    %337 = vmatpush1.xpose.msra.mxu0 0.0
    %338 = vmatprep.subr.mxu0 0.0
    %339 = vmatpush1.xpose.msra.mxu0 0.0
    %340 = vmatprep.subr.mxu0 0.0
    %341 = vmatpush1.xpose.msra.mxu0 0.0
    %342 = vmatprep.subr.mxu0 0.0
    %343 = vmatpush1.xpose.msra.mxu0 0.0
    %344 = vmatprep.subr.mxu0 0.0
    %345 = vmatpush1.xpose.msra.mxu0 0.0
    %346 = vmatprep.subr.mxu0 0.0
    %347 = vmatpush1.xpose.msra.mxu0 0.0
    %348 = vmatprep.subr.mxu0 0.0
    %349 = vmatpush1.xpose.msra.mxu0 0.0
    %350 = vmatprep.subr.mxu0 0.0
    %351 = vmatpush1.xpose.msra.mxu0 0.0
    %352 = vmatprep.subr.mxu0 0.0
    %353 = vmatpush1.xpose.msra.mxu0 0.0
    %354 = vmatprep.subr.mxu0 0.0
    %355 = vmatpush1.xpose.msra.mxu0 0.0
    %356 = vmatprep.subr.mxu0 0.0
    %357 = vmatpush1.xpose.msra.mxu0 0.0
    %358 = vmatprep.subr.mxu0 0.0
    %359 = vmatpush1.xpose.msra.mxu0 0.0
    %360 = vmatprep.subr.mxu0 0.0
    %361 = vmatpush1.xpose.msra.mxu0 0.0
    %362 = vmatprep.subr.mxu0 0.0
    %363 = vmatpush1.xpose.msra.mxu0 0.0
    %364 = vmatprep.mubr.f32.mxu0 0.0
    %365 = vmatmul.mubr.f32.gmra.mrb[0].mxu0 %v292
    %v366 = vpop.f32.mrb[0].mxu0
    %v367 = vadd.f32 %v31, %v366
    %v368 = vpop.f32.mrb[0].mxu0
    %369 = vmatprep.mubr.f32.mxu0 0.0
    %370 = vmatmul.mubr.f32.gmra.mrb[0].mxu0 %v294
    %v371 = vpop.f32.mrb[0].mxu0
    %v372 = vadd.f32 %v32, %v371
    %v373 = vpop.f32.mrb[0].mxu0
    %374 = vdwg.mxu0
    %375 = vrot.lane.b32.xlu0 %v193, 96
    %v376 = vpop.permute.xlu0 %375
    %377 = vrot.lane.b32.xlu0 %v195, 96
    %v378 = vpop.permute.xlu0 %377
    %v379 = vsel %vm204, %v193, 0
    %v381 = vsel %vm204, %v195, 0
    %v383 = vsel %vm204, %v376, 0
    %v385 = vsel %vm204, %v378, 0
    %387 = vmatprep.subr.mxu0 0.0
    %388 = vmatpush1.xpose.msra.mxu0 %v383
    %389 = vmatprep.subr.mxu0 0.0
    %390 = vmatpush1.xpose.msra.mxu0 %v385
    %391 = vmatprep.subr.mxu0 0.0
    %392 = vmatpush1.xpose.msra.mxu0 0.0
    %393 = vmatprep.subr.mxu0 0.0
    %394 = vmatpush1.xpose.msra.mxu0 0.0
    %395 = vmatprep.subr.mxu0 0.0
    %396 = vmatpush1.xpose.msra.mxu0 0.0
    %397 = vmatprep.subr.mxu0 0.0
    %398 = vmatpush1.xpose.msra.mxu0 0.0
    %399 = vmatprep.subr.mxu0 0.0
    %400 = vmatpush1.xpose.msra.mxu0 0.0
    %401 = vmatprep.subr.mxu0 0.0
    %402 = vmatpush1.xpose.msra.mxu0 0.0
    %403 = vmatprep.subr.mxu0 0.0
    %404 = vmatpush1.xpose.msra.mxu0 0.0
    %405 = vmatprep.subr.mxu0 0.0
    %406 = vmatpush1.xpose.msra.mxu0 0.0
    %407 = vmatprep.subr.mxu0 0.0
    %408 = vmatpush1.xpose.msra.mxu0 0.0
    %409 = vmatprep.subr.mxu0 0.0
    %410 = vmatpush1.xpose.msra.mxu0 0.0
    %411 = vmatprep.subr.mxu0 0.0
    %412 = vmatpush1.xpose.msra.mxu0 0.0
    %413 = vmatprep.subr.mxu0 0.0
    %414 = vmatpush1.xpose.msra.mxu0 0.0
    %415 = vmatprep.subr.mxu0 0.0
    %416 = vmatpush1.xpose.msra.mxu0 0.0
    %417 = vmatprep.subr.mxu0 0.0
    %418 = vmatpush1.xpose.msra.mxu0 0.0
    %419 = vmatprep.subr.mxu0 0.0
    %420 = vmatpush1.xpose.msra.mxu0 0.0
    %421 = vmatprep.subr.mxu0 0.0
    %422 = vmatpush1.xpose.msra.mxu0 0.0
    %423 = vmatprep.subr.mxu0 0.0
    %424 = vmatpush1.xpose.msra.mxu0 0.0
    %425 = vmatprep.subr.mxu0 0.0
    %426 = vmatpush1.xpose.msra.mxu0 0.0
    %427 = vmatprep.subr.mxu0 0.0
    %428 = vmatpush1.xpose.msra.mxu0 0.0
    %429 = vmatprep.subr.mxu0 0.0
    %430 = vmatpush1.xpose.msra.mxu0 0.0
    %431 = vmatprep.subr.mxu0 0.0
    %432 = vmatpush1.xpose.msra.mxu0 0.0
    %433 = vmatprep.subr.mxu0 0.0
    %434 = vmatpush1.xpose.msra.mxu0 0.0
    %435 = vmatprep.subr.mxu0 0.0
    %436 = vmatpush1.xpose.msra.mxu0 0.0
    %437 = vmatprep.subr.mxu0 0.0
    %438 = vmatpush1.xpose.msra.mxu0 0.0
    %439 = vmatprep.subr.mxu0 0.0
    %440 = vmatpush1.xpose.msra.mxu0 0.0
    %441 = vmatprep.subr.mxu0 0.0
    %442 = vmatpush1.xpose.msra.mxu0 0.0
    %443 = vmatprep.subr.mxu0 0.0
    %444 = vmatpush1.xpose.msra.mxu0 0.0
    %445 = vmatprep.subr.mxu0 0.0
    %446 = vmatpush1.xpose.msra.mxu0 0.0
    %447 = vmatprep.subr.mxu0 0.0
    %448 = vmatpush1.xpose.msra.mxu0 0.0
    %449 = vmatprep.subr.mxu0 0.0
    %450 = vmatpush1.xpose.msra.mxu0 0.0
    %451 = vmatprep.mubr.f32.mxu0 0.0
    %452 = vmatmul.mubr.f32.gmra.mrb[0].mxu0 %v379
    %v453 = vpop.f32.mrb[0].mxu0
    %v454 = vadd.f32 %v31, %v453
    %v455 = vpop.f32.mrb[0].mxu0
    %456 = vmatprep.mubr.f32.mxu0 0.0
    %457 = vmatmul.mubr.f32.gmra.mrb[0].mxu0 %v381
    %v458 = vpop.f32.mrb[0].mxu0
    %v459 = vadd.f32 %v32, %v458
    %v460 = vpop.f32.mrb[0].mxu0
    %461 = vdwg.mxu0
    %462 = vrot.lane.b32.xlu0 %v197, 96
    %v463 = vpop.permute.xlu0 %462
    %464 = vrot.lane.b32.xlu0 %v199, 96
    %v465 = vpop.permute.xlu0 %464
    %v466 = vsel %vm204, %v197, 0
    %v468 = vsel %vm204, %v199, 0
    %v470 = vsel %vm204, %v463, 0
    %v472 = vsel %vm204, %v465, 0
    %474 = vmatprep.subr.mxu0 0.0
    %475 = vmatpush1.xpose.msra.mxu0 %v470
    %476 = vmatprep.subr.mxu0 0.0
    %477 = vmatpush1.xpose.msra.mxu0 %v472
    %478 = vmatprep.subr.mxu0 0.0
    %479 = vmatpush1.xpose.msra.mxu0 0.0
    %480 = vmatprep.subr.mxu0 0.0
    %481 = vmatpush1.xpose.msra.mxu0 0.0
    %482 = vmatprep.subr.mxu0 0.0
    %483 = vmatpush1.xpose.msra.mxu0 0.0
    %484 = vmatprep.subr.mxu0 0.0
    %485 = vmatpush1.xpose.msra.mxu0 0.0
    %486 = vmatprep.subr.mxu0 0.0
    %487 = vmatpush1.xpose.msra.mxu0 0.0
    %488 = vmatprep.subr.mxu0 0.0
    %489 = vmatpush1.xpose.msra.mxu0 0.0
    %490 = vmatprep.subr.mxu0 0.0
    %491 = vmatpush1.xpose.msra.mxu0 0.0
    %492 = vmatprep.subr.mxu0 0.0
    %493 = vmatpush1.xpose.msra.mxu0 0.0
    %494 = vmatprep.subr.mxu0 0.0
    %495 = vmatpush1.xpose.msra.mxu0 0.0
    %496 = vmatprep.subr.mxu0 0.0
    %497 = vmatpush1.xpose.msra.mxu0 0.0
    %498 = vmatprep.subr.mxu0 0.0
    %499 = vmatpush1.xpose.msra.mxu0 0.0
    %500 = vmatprep.subr.mxu0 0.0
    %501 = vmatpush1.xpose.msra.mxu0 0.0
    %502 = vmatprep.subr.mxu0 0.0
    %503 = vmatpush1.xpose.msra.mxu0 0.0
    %504 = vmatprep.subr.mxu0 0.0
    %505 = vmatpush1.xpose.msra.mxu0 0.0
    %506 = vmatprep.subr.mxu0 0.0
    %507 = vmatpush1.xpose.msra.mxu0 0.0
    %508 = vmatprep.subr.mxu0 0.0
    %509 = vmatpush1.xpose.msra.mxu0 0.0
    %510 = vmatprep.subr.mxu0 0.0
    %511 = vmatpush1.xpose.msra.mxu0 0.0
    %512 = vmatprep.subr.mxu0 0.0
    %513 = vmatpush1.xpose.msra.mxu0 0.0
    %514 = vmatprep.subr.mxu0 0.0
    %515 = vmatpush1.xpose.msra.mxu0 0.0
    %516 = vmatprep.subr.mxu0 0.0
    %517 = vmatpush1.xpose.msra.mxu0 0.0
    %518 = vmatprep.subr.mxu0 0.0
    %519 = vmatpush1.xpose.msra.mxu0 0.0
    %520 = vmatprep.subr.mxu0 0.0
    %521 = vmatpush1.xpose.msra.mxu0 0.0
    %522 = vmatprep.subr.mxu0 0.0
    %523 = vmatpush1.xpose.msra.mxu0 0.0
    %524 = vmatprep.subr.mxu0 0.0
    %525 = vmatpush1.xpose.msra.mxu0 0.0
    %526 = vmatprep.subr.mxu0 0.0
    %527 = vmatpush1.xpose.msra.mxu0 0.0
    %528 = vmatprep.subr.mxu0 0.0
    %529 = vmatpush1.xpose.msra.mxu0 0.0
    %530 = vmatprep.subr.mxu0 0.0
    %531 = vmatpush1.xpose.msra.mxu0 0.0
    %532 = vmatprep.subr.mxu0 0.0
    %533 = vmatpush1.xpose.msra.mxu0 0.0
    %534 = vmatprep.subr.mxu0 0.0
    %535 = vmatpush1.xpose.msra.mxu0 0.0
    %536 = vmatprep.subr.mxu0 0.0
    %537 = vmatpush1.xpose.msra.mxu0 0.0
    %538 = vmatprep.mubr.f32.mxu0 0.0
    %539 = vmatmul.mubr.f32.gmra.mrb[0].mxu0 %v466
    %v540 = vpop.f32.mrb[0].mxu0
    %v541 = vadd.f32 %v31, %v540
    %v542 = vpop.f32.mrb[0].mxu0
    %543 = vmatprep.mubr.f32.mxu0 0.0
    %544 = vmatmul.mubr.f32.gmra.mrb[0].mxu0 %v468
    %v545 = vpop.f32.mrb[0].mxu0
    %v546 = vadd.f32 %v32, %v545
    %v547 = vpop.f32.mrb[0].mxu0
    %548 = vdwg.mxu0
    %vm549 = vcmask 130048
    %v550 = vsel %vm549, %v280, -inf
    %551 = vmax.xlane.f32.xlu0 %v550
    %v552 = vpop.xlane.xlu0 %551
    %v553 = vsel %vm549, %v285, -inf
    %554 = vmax.xlane.f32.xlu0 %v553
    %v555 = vpop.xlane.xlu0 %554
    %v556 = vsel %vm549, %v367, -inf
    %557 = vmax.xlane.f32.xlu0 %v556
    %v558 = vpop.xlane.xlu0 %557
    %v559 = vsel %vm549, %v372, -inf
    %560 = vmax.xlane.f32.xlu0 %v559
    %v561 = vpop.xlane.xlu0 %560
    %v562 = vsel %vm549, %v454, -inf
    %563 = vmax.xlane.f32.xlu0 %v562
    %v564 = vpop.xlane.xlu0 %563
    %v565 = vsel %vm549, %v459, -inf
    %566 = vmax.xlane.f32.xlu0 %v565
    %v567 = vpop.xlane.xlu0 %566
    %v568 = vsel %vm549, %v541, -inf
    %569 = vmax.xlane.f32.xlu0 %v568
    %v570 = vpop.xlane.xlu0 %569
    %v571 = vsel %vm549, %v546, -inf
    %572 = vmax.xlane.f32.xlu0 %v571
    %v573 = vpop.xlane.xlu0 %572
    %v574 = vsub.f32 %v280, %v552
    %v575 = vsub.f32 %v285, %v555
    %v576 = vsub.f32 %v367, %v558
    %v577 = vsub.f32 %v372, %v561
    %v578 = vsub.f32 %v454, %v564
    %v579 = vsub.f32 %v459, %v567
    %v580 = vsub.f32 %v541, %v570
    %v581 = vsub.f32 %v546, %v573
    %v582 = vmul.f32 %v574, 1.442695
    %v583 = vpow.pop %v582
    %v584 = vmul.f32 %v575, 1.442695
    %v585 = vpow.pop %v584
    %v586 = vmul.f32 %v576, 1.442695
    %v587 = vpow.pop %v586
    %v588 = vmul.f32 %v577, 1.442695
    %v589 = vpow.pop %v588
    %v590 = vmul.f32 %v578, 1.442695
    %v591 = vpow.pop %v590
    %v592 = vmul.f32 %v579, 1.442695
    %v593 = vpow.pop %v592
    %v594 = vmul.f32 %v580, 1.442695
    %v595 = vpow.pop %v594
    %v596 = vmul.f32 %v581, 1.442695
    %v597 = vpow.pop %v596
    %v598 = vsel %vm549, %v583, 0.0
    %599 = vadd.xlane.f32.xlu0 %v598
    %v600 = vpop.xlane.xlu0 %599
    %v601 = vsel %vm549, %v585, 0.0
    %602 = vadd.xlane.f32.xlu0 %v601
    %v603 = vpop.xlane.xlu0 %602
    %v604 = vsel %vm549, %v587, 0.0
    %605 = vadd.xlane.f32.xlu0 %v604
    %v606 = vpop.xlane.xlu0 %605
    %v607 = vsel %vm549, %v589, 0.0
    %608 = vadd.xlane.f32.xlu0 %v607
    %v609 = vpop.xlane.xlu0 %608
    %v610 = vsel %vm549, %v591, 0.0
    %611 = vadd.xlane.f32.xlu0 %v610
    %v612 = vpop.xlane.xlu0 %611
    %v613 = vsel %vm549, %v593, 0.0
    %614 = vadd.xlane.f32.xlu0 %v613
    %v615 = vpop.xlane.xlu0 %614
    %v616 = vsel %vm549, %v595, 0.0
    %617 = vadd.xlane.f32.xlu0 %v616
    %v618 = vpop.xlane.xlu0 %617
    %v619 = vsel %vm549, %v597, 0.0
    %620 = vadd.xlane.f32.xlu0 %v619
    %v621 = vpop.xlane.xlu0 %620
    %v622 = vrcp.pop %v600
    %v623 = vrcp.pop %v603
    %v624 = vrcp.pop %v606
    %v625 = vrcp.pop %v609
    %v626 = vrcp.pop %v612
    %v627 = vrcp.pop %v615
    %v628 = vrcp.pop %v618
    %v629 = vrcp.pop %v621
    %v630 = vmul.f32 %v583, %v622
    %v631 = vmul.f32 %v585, %v623
    %v632 = vmul.f32 %v587, %v624
    %v633 = vmul.f32 %v589, %v625
    %v634 = vmul.f32 %v591, %v626
    %v635 = vmul.f32 %v593, %v627
    %v636 = vmul.f32 %v595, %v628
    %v637 = vmul.f32 %v597, %v629
    %638 = vrot.lane.b32.xlu0 %v178, 64
    %v639 = vpop.permute.xlu0 %638
    %640 = vrot.lane.b32.xlu0 %v183, 64
    %v641 = vpop.permute.xlu0 %640
    %v645 = vsel %vm549, %v630, 0
    %v648 = vsel %vm549, %v631, 0
    %650 = vmatprep.subr.mxu0 0.0
    %651 = vmatpush1.msra.mxu0 %v639
    %652 = vmatprep.subr.mxu0 0.0
    %653 = vmatpush1.msra.mxu0 %v641
    %654 = vmatprep.subr.mxu0 0.0
    %655 = vmatpush1.msra.mxu0 0.0
    %656 = vmatprep.subr.mxu0 0.0
    %657 = vmatpush1.msra.mxu0 0.0
    %658 = vmatprep.subr.mxu0 0.0
    %659 = vmatpush1.msra.mxu0 0.0
    %660 = vmatprep.subr.mxu0 0.0
    %661 = vmatpush1.msra.mxu0 0.0
    %662 = vmatprep.subr.mxu0 0.0
    %663 = vmatpush1.msra.mxu0 0.0
    %664 = vmatprep.subr.mxu0 0.0
    %665 = vmatpush1.msra.mxu0 0.0
    %666 = vmatprep.subr.mxu0 0.0
    %667 = vmatpush1.msra.mxu0 0.0
    %668 = vmatprep.subr.mxu0 0.0
    %669 = vmatpush1.msra.mxu0 0.0
    %670 = vmatprep.subr.mxu0 0.0
    %671 = vmatpush1.msra.mxu0 0.0
    %672 = vmatprep.subr.mxu0 0.0
    %673 = vmatpush1.msra.mxu0 0.0
    %674 = vmatprep.subr.mxu0 0.0
    %675 = vmatpush1.msra.mxu0 0.0
    %676 = vmatprep.subr.mxu0 0.0
    %677 = vmatpush1.msra.mxu0 0.0
    %678 = vmatprep.subr.mxu0 0.0
    %679 = vmatpush1.msra.mxu0 0.0
    %680 = vmatprep.subr.mxu0 0.0
    %681 = vmatpush1.msra.mxu0 0.0
    %682 = vmatprep.subr.mxu0 0.0
    %683 = vmatpush1.msra.mxu0 0.0
    %684 = vmatprep.subr.mxu0 0.0
    %685 = vmatpush1.msra.mxu0 0.0
    %686 = vmatprep.subr.mxu0 0.0
    %687 = vmatpush1.msra.mxu0 0.0
    %688 = vmatprep.subr.mxu0 0.0
    %689 = vmatpush1.msra.mxu0 0.0
    %690 = vmatprep.subr.mxu0 0.0
    %691 = vmatpush1.msra.mxu0 0.0
    %692 = vmatprep.subr.mxu0 0.0
    %693 = vmatpush1.msra.mxu0 0.0
    %694 = vmatprep.subr.mxu0 0.0
    %695 = vmatpush1.msra.mxu0 0.0
    %696 = vmatprep.subr.mxu0 0.0
    %697 = vmatpush1.msra.mxu0 0.0
    %698 = vmatprep.subr.mxu0 0.0
    %699 = vmatpush1.msra.mxu0 0.0
    %700 = vmatprep.subr.mxu0 0.0
    %701 = vmatpush1.msra.mxu0 0.0
    %702 = vmatprep.subr.mxu0 0.0
    %703 = vmatpush1.msra.mxu0 0.0
    %704 = vmatprep.subr.mxu0 0.0
    %705 = vmatpush1.msra.mxu0 0.0
    %706 = vmatprep.subr.mxu0 0.0
    %707 = vmatpush1.msra.mxu0 0.0
    %708 = vmatprep.subr.mxu0 0.0
    %709 = vmatpush1.msra.mxu0 0.0
    %710 = vmatprep.subr.mxu0 0.0
    %711 = vmatpush1.msra.mxu0 0.0
    %712 = vmatprep.subr.mxu0 0.0
    %713 = vmatpush1.msra.mxu0 0.0
    %714 = vmatprep.mubr.f32.mxu0 0.0
    %715 = vmatmul.mubr.f32.gmra.mrb[0].mxu0 %v645
    %v716 = vpop.f32.mrb[0].mxu0
    %v717 = vadd.f32 0.0, %v716
    %v718 = vpop.f32.mrb[0].mxu0
    %719 = vmatprep.mubr.f32.mxu0 0.0
    %720 = vmatmul.mubr.f32.gmra.mrb[0].mxu0 %v648
    %v721 = vpop.f32.mrb[0].mxu0
    %v722 = vadd.f32 0.0, %v721
    %v723 = vpop.f32.mrb[0].mxu0
    %724 = vdwg.mxu0
    %725 = vrot.lane.b32.xlu0 %v189, 64
    %v726 = vpop.permute.xlu0 %725
    %727 = vrot.lane.b32.xlu0 %v191, 64
    %v728 = vpop.permute.xlu0 %727
    %v732 = vsel %vm549, %v632, 0
    %v735 = vsel %vm549, %v633, 0
    %737 = vmatprep.subr.mxu0 0.0
    %738 = vmatpush1.msra.mxu0 %v726
    %739 = vmatprep.subr.mxu0 0.0
    %740 = vmatpush1.msra.mxu0 %v728
    %741 = vmatprep.subr.mxu0 0.0
    %742 = vmatpush1.msra.mxu0 0.0
    %743 = vmatprep.subr.mxu0 0.0
    %744 = vmatpush1.msra.mxu0 0.0
    %745 = vmatprep.subr.mxu0 0.0
    %746 = vmatpush1.msra.mxu0 0.0
    %747 = vmatprep.subr.mxu0 0.0
    %748 = vmatpush1.msra.mxu0 0.0
    %749 = vmatprep.subr.mxu0 0.0
    %750 = vmatpush1.msra.mxu0 0.0
    %751 = vmatprep.subr.mxu0 0.0
    %752 = vmatpush1.msra.mxu0 0.0
    %753 = vmatprep.subr.mxu0 0.0
    %754 = vmatpush1.msra.mxu0 0.0
    %755 = vmatprep.subr.mxu0 0.0
    %756 = vmatpush1.msra.mxu0 0.0
    %757 = vmatprep.subr.mxu0 0.0
    %758 = vmatpush1.msra.mxu0 0.0
    %759 = vmatprep.subr.mxu0 0.0
    %760 = vmatpush1.msra.mxu0 0.0
    %761 = vmatprep.subr.mxu0 0.0
    %762 = vmatpush1.msra.mxu0 0.0
    %763 = vmatprep.subr.mxu0 0.0
    %764 = vmatpush1.msra.mxu0 0.0
    %765 = vmatprep.subr.mxu0 0.0
    %766 = vmatpush1.msra.mxu0 0.0
    %767 = vmatprep.subr.mxu0 0.0
    %768 = vmatpush1.msra.mxu0 0.0
    %769 = vmatprep.subr.mxu0 0.0
    %770 = vmatpush1.msra.mxu0 0.0
    %771 = vmatprep.subr.mxu0 0.0
    %772 = vmatpush1.msra.mxu0 0.0
    %773 = vmatprep.subr.mxu0 0.0
    %774 = vmatpush1.msra.mxu0 0.0
    %775 = vmatprep.subr.mxu0 0.0
    %776 = vmatpush1.msra.mxu0 0.0
    %777 = vmatprep.subr.mxu0 0.0
    %778 = vmatpush1.msra.mxu0 0.0
    %779 = vmatprep.subr.mxu0 0.0
    %780 = vmatpush1.msra.mxu0 0.0
    %781 = vmatprep.subr.mxu0 0.0
    %782 = vmatpush1.msra.mxu0 0.0
    %783 = vmatprep.subr.mxu0 0.0
    %784 = vmatpush1.msra.mxu0 0.0
    %785 = vmatprep.subr.mxu0 0.0
    %786 = vmatpush1.msra.mxu0 0.0
    %787 = vmatprep.subr.mxu0 0.0
    %788 = vmatpush1.msra.mxu0 0.0
    %789 = vmatprep.subr.mxu0 0.0
    %790 = vmatpush1.msra.mxu0 0.0
    %791 = vmatprep.subr.mxu0 0.0
    %792 = vmatpush1.msra.mxu0 0.0
    %793 = vmatprep.subr.mxu0 0.0
    %794 = vmatpush1.msra.mxu0 0.0
    %795 = vmatprep.subr.mxu0 0.0
    %796 = vmatpush1.msra.mxu0 0.0
    %797 = vmatprep.subr.mxu0 0.0
    %798 = vmatpush1.msra.mxu0 0.0
    %799 = vmatprep.subr.mxu0 0.0
    %800 = vmatpush1.msra.mxu0 0.0
    %801 = vmatprep.mubr.f32.mxu0 0.0
    %802 = vmatmul.mubr.f32.gmra.mrb[0].mxu0 %v732
    %v803 = vpop.f32.mrb[0].mxu0
    %v804 = vadd.f32 0.0, %v803
    %v805 = vpop.f32.mrb[0].mxu0
    %806 = vmatprep.mubr.f32.mxu0 0.0
    %807 = vmatmul.mubr.f32.gmra.mrb[0].mxu0 %v735
    %v808 = vpop.f32.mrb[0].mxu0
    %v809 = vadd.f32 0.0, %v808
    %v810 = vpop.f32.mrb[0].mxu0
    %811 = vdwg.mxu0
    %812 = vrot.lane.b32.xlu0 %v193, 64
    %v813 = vpop.permute.xlu0 %812
    %814 = vrot.lane.b32.xlu0 %v195, 64
    %v815 = vpop.permute.xlu0 %814
    %v819 = vsel %vm549, %v634, 0
    %v822 = vsel %vm549, %v635, 0
    %824 = vmatprep.subr.mxu0 0.0
    %825 = vmatpush1.msra.mxu0 %v813
    %826 = vmatprep.subr.mxu0 0.0
    %827 = vmatpush1.msra.mxu0 %v815
    %828 = vmatprep.subr.mxu0 0.0
    %829 = vmatpush1.msra.mxu0 0.0
    %830 = vmatprep.subr.mxu0 0.0
    %831 = vmatpush1.msra.mxu0 0.0
    %832 = vmatprep.subr.mxu0 0.0
    %833 = vmatpush1.msra.mxu0 0.0
    %834 = vmatprep.subr.mxu0 0.0
    %835 = vmatpush1.msra.mxu0 0.0
    %836 = vmatprep.subr.mxu0 0.0
    %837 = vmatpush1.msra.mxu0 0.0
    %838 = vmatprep.subr.mxu0 0.0
    %839 = vmatpush1.msra.mxu0 0.0
    %840 = vmatprep.subr.mxu0 0.0
    %841 = vmatpush1.msra.mxu0 0.0
    %842 = vmatprep.subr.mxu0 0.0
    %843 = vmatpush1.msra.mxu0 0.0
    %844 = vmatprep.subr.mxu0 0.0
    %845 = vmatpush1.msra.mxu0 0.0
    %846 = vmatprep.subr.mxu0 0.0
    %847 = vmatpush1.msra.mxu0 0.0
    %848 = vmatprep.subr.mxu0 0.0
    %849 = vmatpush1.msra.mxu0 0.0
    %850 = vmatprep.subr.mxu0 0.0
    %851 = vmatpush1.msra.mxu0 0.0
    %852 = vmatprep.subr.mxu0 0.0
    %853 = vmatpush1.msra.mxu0 0.0
    %854 = vmatprep.subr.mxu0 0.0
    %855 = vmatpush1.msra.mxu0 0.0
    %856 = vmatprep.subr.mxu0 0.0
    %857 = vmatpush1.msra.mxu0 0.0
    %858 = vmatprep.subr.mxu0 0.0
    %859 = vmatpush1.msra.mxu0 0.0
    %860 = vmatprep.subr.mxu0 0.0
    %861 = vmatpush1.msra.mxu0 0.0
    %862 = vmatprep.subr.mxu0 0.0
    %863 = vmatpush1.msra.mxu0 0.0
    %864 = vmatprep.subr.mxu0 0.0
    %865 = vmatpush1.msra.mxu0 0.0
    %866 = vmatprep.subr.mxu0 0.0
    %867 = vmatpush1.msra.mxu0 0.0
    %868 = vmatprep.subr.mxu0 0.0
    %869 = vmatpush1.msra.mxu0 0.0
    %870 = vmatprep.subr.mxu0 0.0
    %871 = vmatpush1.msra.mxu0 0.0
    %872 = vmatprep.subr.mxu0 0.0
    %873 = vmatpush1.msra.mxu0 0.0
    %874 = vmatprep.subr.mxu0 0.0
    %875 = vmatpush1.msra.mxu0 0.0
    %876 = vmatprep.subr.mxu0 0.0
    %877 = vmatpush1.msra.mxu0 0.0
    %878 = vmatprep.subr.mxu0 0.0
    %879 = vmatpush1.msra.mxu0 0.0
    %880 = vmatprep.subr.mxu0 0.0
    %881 = vmatpush1.msra.mxu0 0.0
    %882 = vmatprep.subr.mxu0 0.0
    %883 = vmatpush1.msra.mxu0 0.0
    %884 = vmatprep.subr.mxu0 0.0
    %885 = vmatpush1.msra.mxu0 0.0
    %886 = vmatprep.subr.mxu0 0.0
    %887 = vmatpush1.msra.mxu0 0.0
    %888 = vmatprep.mubr.f32.mxu0 0.0
    %889 = vmatmul.mubr.f32.gmra.mrb[0].mxu0 %v819
    %v890 = vpop.f32.mrb[0].mxu0
    %v891 = vadd.f32 0.0, %v890
    %v892 = vpop.f32.mrb[0].mxu0
    %893 = vmatprep.mubr.f32.mxu0 0.0
    %894 = vmatmul.mubr.f32.gmra.mrb[0].mxu0 %v822
    %v895 = vpop.f32.mrb[0].mxu0
    %v896 = vadd.f32 0.0, %v895
    %v897 = vpop.f32.mrb[0].mxu0
    %898 = vdwg.mxu0
    %899 = vrot.lane.b32.xlu0 %v197, 64
    %v900 = vpop.permute.xlu0 %899
    %901 = vrot.lane.b32.xlu0 %v199, 64
    %v902 = vpop.permute.xlu0 %901
    %v906 = vsel %vm549, %v636, 0
    %v909 = vsel %vm549, %v637, 0
    %911 = vmatprep.subr.mxu0 0.0
    %912 = vmatpush1.msra.mxu0 %v900
    %913 = vmatprep.subr.mxu0 0.0
    %914 = vmatpush1.msra.mxu0 %v902
    %915 = vmatprep.subr.mxu0 0.0
    %916 = vmatpush1.msra.mxu0 0.0
    %917 = vmatprep.subr.mxu0 0.0
    %918 = vmatpush1.msra.mxu0 0.0
    %919 = vmatprep.subr.mxu0 0.0
    %920 = vmatpush1.msra.mxu0 0.0
    %921 = vmatprep.subr.mxu0 0.0
    %922 = vmatpush1.msra.mxu0 0.0
    %923 = vmatprep.subr.mxu0 0.0
    %924 = vmatpush1.msra.mxu0 0.0
    %925 = vmatprep.subr.mxu0 0.0
    %926 = vmatpush1.msra.mxu0 0.0
    %927 = vmatprep.subr.mxu0 0.0
    %928 = vmatpush1.msra.mxu0 0.0
    %929 = vmatprep.subr.mxu0 0.0
    %930 = vmatpush1.msra.mxu0 0.0
    %931 = vmatprep.subr.mxu0 0.0
    %932 = vmatpush1.msra.mxu0 0.0
    %933 = vmatprep.subr.mxu0 0.0
    %934 = vmatpush1.msra.mxu0 0.0
    %935 = vmatprep.subr.mxu0 0.0
    %936 = vmatpush1.msra.mxu0 0.0
    %937 = vmatprep.subr.mxu0 0.0
    %938 = vmatpush1.msra.mxu0 0.0
    %939 = vmatprep.subr.mxu0 0.0
    %940 = vmatpush1.msra.mxu0 0.0
    %941 = vmatprep.subr.mxu0 0.0
    %942 = vmatpush1.msra.mxu0 0.0
    %943 = vmatprep.subr.mxu0 0.0
    %944 = vmatpush1.msra.mxu0 0.0
    %945 = vmatprep.subr.mxu0 0.0
    %946 = vmatpush1.msra.mxu0 0.0
    %947 = vmatprep.subr.mxu0 0.0
    %948 = vmatpush1.msra.mxu0 0.0
    %949 = vmatprep.subr.mxu0 0.0
    %950 = vmatpush1.msra.mxu0 0.0
    %951 = vmatprep.subr.mxu0 0.0
    %952 = vmatpush1.msra.mxu0 0.0
    %953 = vmatprep.subr.mxu0 0.0
    %954 = vmatpush1.msra.mxu0 0.0
    %955 = vmatprep.subr.mxu0 0.0
    %956 = vmatpush1.msra.mxu0 0.0
    %957 = vmatprep.subr.mxu0 0.0
    %958 = vmatpush1.msra.mxu0 0.0
    %959 = vmatprep.subr.mxu0 0.0
    %960 = vmatpush1.msra.mxu0 0.0
    %961 = vmatprep.subr.mxu0 0.0
    %962 = vmatpush1.msra.mxu0 0.0
    %963 = vmatprep.subr.mxu0 0.0
    %964 = vmatpush1.msra.mxu0 0.0
    %965 = vmatprep.subr.mxu0 0.0
    %966 = vmatpush1.msra.mxu0 0.0
    %967 = vmatprep.subr.mxu0 0.0
    %968 = vmatpush1.msra.mxu0 0.0
    %969 = vmatprep.subr.mxu0 0.0
    %970 = vmatpush1.msra.mxu0 0.0
    %971 = vmatprep.subr.mxu0 0.0
    %972 = vmatpush1.msra.mxu0 0.0
    %973 = vmatprep.subr.mxu0 0.0
    %974 = vmatpush1.msra.mxu0 0.0
    %975 = vmatprep.mubr.f32.mxu0 0.0
    %976 = vmatmul.mubr.f32.gmra.mrb[0].mxu0 %v906
    %v977 = vpop.f32.mrb[0].mxu0
    %v978 = vadd.f32 0.0, %v977
    %v979 = vpop.f32.mrb[0].mxu0
    %980 = vmatprep.mubr.f32.mxu0 0.0
    %981 = vmatmul.mubr.f32.gmra.mrb[0].mxu0 %v909
    %v982 = vpop.f32.mrb[0].mxu0
    %v983 = vadd.f32 0.0, %v982
    %v984 = vpop.f32.mrb[0].mxu0
    %985 = vdwg.mxu0
    %988 = vrot.lane.b32.xlu0 %v804, 8
    %v989 = vpop.permute.xlu0 %988
    %990 = vrot.lane.b32.xlu0 %v809, 8
    %v991 = vpop.permute.xlu0 %990
    %996 = vrot.lane.b32.xlu0 %v891, 16
    %v997 = vpop.permute.xlu0 %996
    %998 = vrot.lane.b32.xlu0 %v896, 16
    %v999 = vpop.permute.xlu0 %998
    %1004 = vrot.lane.b32.xlu0 %v978, 24
    %v1005 = vpop.permute.xlu0 %1004
    %1006 = vrot.lane.b32.xlu0 %v983, 24
    %v1007 = vpop.permute.xlu0 %1006
    %v1010 = vsel %vm204, %v717, %v989
    %v1011 = vsel %vm204, %v722, %v991
    %v1012 = vsel %vm549, %v1010, %v997
    %v1013 = vsel %vm549, %v1011, %v999
    %vm1014 = vcmask 195584
    %v1015 = vsel %vm1014, %v1012, %v1005
    %v1016 = vsel %vm1014, %v1013, %v1007
    %v1017 = vlaneseq
    %v1018 = vshrl.u32 %v1017, 7
    %v1019 = vsub.s32 0, %v1018
    %v1020 = vrot.slane %v54, %v1019
    %v1022 = vsel %vm61, %v1015, 0
    %v1025 = vsel %vm61, %v1016, 0
    %1027 = vmatprep.subr.mxu0 0.0
    %1028 = vmatpush1.msra.mxu0 %v37
    %1029 = vmatprep.subr.mxu0 0.0
    %1030 = vmatpush1.msra.mxu0 %v38
    %1031 = vmatprep.subr.mxu0 0.0
    %1032 = vmatpush1.msra.mxu0 %v39
    %1033 = vmatprep.subr.mxu0 0.0
    %1034 = vmatpush1.msra.mxu0 %v40
    %1035 = vmatprep.subr.mxu0 0.0
    %1036 = vmatpush1.msra.mxu0 0.0
    %1037 = vmatprep.subr.mxu0 0.0
    %1038 = vmatpush1.msra.mxu0 0.0
    %1039 = vmatprep.subr.mxu0 0.0
    %1040 = vmatpush1.msra.mxu0 0.0
    %1041 = vmatprep.subr.mxu0 0.0
    %1042 = vmatpush1.msra.mxu0 0.0
    %1043 = vmatprep.subr.mxu0 0.0
    %1044 = vmatpush1.msra.mxu0 0.0
    %1045 = vmatprep.subr.mxu0 0.0
    %1046 = vmatpush1.msra.mxu0 0.0
    %1047 = vmatprep.subr.mxu0 0.0
    %1048 = vmatpush1.msra.mxu0 0.0
    %1049 = vmatprep.subr.mxu0 0.0
    %1050 = vmatpush1.msra.mxu0 0.0
    %1051 = vmatprep.subr.mxu0 0.0
    %1052 = vmatpush1.msra.mxu0 0.0
    %1053 = vmatprep.subr.mxu0 0.0
    %1054 = vmatpush1.msra.mxu0 0.0
    %1055 = vmatprep.subr.mxu0 0.0
    %1056 = vmatpush1.msra.mxu0 0.0
    %1057 = vmatprep.subr.mxu0 0.0
    %1058 = vmatpush1.msra.mxu0 0.0
    %1059 = vmatprep.subr.mxu0 0.0
    %1060 = vmatpush1.msra.mxu0 0.0
    %1061 = vmatprep.subr.mxu0 0.0
    %1062 = vmatpush1.msra.mxu0 0.0
    %1063 = vmatprep.subr.mxu0 0.0
    %1064 = vmatpush1.msra.mxu0 0.0
    %1065 = vmatprep.subr.mxu0 0.0
    %1066 = vmatpush1.msra.mxu0 0.0
    %1067 = vmatprep.subr.mxu0 0.0
    %1068 = vmatpush1.msra.mxu0 0.0
    %1069 = vmatprep.subr.mxu0 0.0
    %1070 = vmatpush1.msra.mxu0 0.0
    %1071 = vmatprep.subr.mxu0 0.0
    %1072 = vmatpush1.msra.mxu0 0.0
    %1073 = vmatprep.subr.mxu0 0.0
    %1074 = vmatpush1.msra.mxu0 0.0
    %1075 = vmatprep.subr.mxu0 0.0
    %1076 = vmatpush1.msra.mxu0 0.0
    %1077 = vmatprep.subr.mxu0 0.0
    %1078 = vmatpush1.msra.mxu0 0.0
    %1079 = vmatprep.subr.mxu0 0.0
    %1080 = vmatpush1.msra.mxu0 0.0
    %1081 = vmatprep.subr.mxu0 0.0
    %1082 = vmatpush1.msra.mxu0 0.0
    %1083 = vmatprep.subr.mxu0 0.0
    %1084 = vmatpush1.msra.mxu0 0.0
    %1085 = vmatprep.subr.mxu0 0.0
    %1086 = vmatpush1.msra.mxu0 0.0
    %1087 = vmatprep.subr.mxu0 0.0
    %1088 = vmatpush1.msra.mxu0 0.0
    %1089 = vmatprep.subr.mxu0 0.0
    %1090 = vmatpush1.msra.mxu0 0.0
    %1091 = vmatprep.mubr.f32.mxu0 0.0
    %1092 = vmatmul.mubr.f32.gmra.mrb[0].mxu0 %v1022
    %v1093 = vpop.f32.mrb[0].mxu0
    %v1094 = vadd.f32 %v1020, %v1093
    %v1095 = vpop.f32.mrb[0].mxu0
    %1096 = vmatprep.mubr.f32.mxu0 0.0
    %1097 = vmatmul.mubr.f32.gmra.mrb[0].mxu0 %v1025
    %v1098 = vpop.f32.mrb[0].mxu0
    %v1099 = vadd.f32 %v1020, %v1098
    %v1100 = vpop.f32.mrb[0].mxu0
    %1101 = vdwg.mxu0
    %v1102 = vadd.f32 %v29, %v1094
    %v1103 = vadd.f32 %v30, %v1099
    %v1104 = vsel %vm61, %v1102, 0.0
    %1105 = vadd.xlane.f32.xlu0 %v1104
    %v1106 = vpop.xlane.xlu0 %1105
    %v1107 = vsel %vm61, %v1103, 0.0
    %1108 = vadd.xlane.f32.xlu0 %v1107
    %v1109 = vpop.xlane.xlu0 %1108
    %v1110 = vmul.f32 %v1106, %v68
    %v1111 = vmul.f32 %v1109, %v68
    %v1112 = vsub.f32 %v1102, %v1110
    %v1113 = vsub.f32 %v1103, %v1111
    %v1114 = vmul.f32 %v1112, %v1112
    %v1115 = vmul.f32 %v1113, %v1113
    %v1116 = vsel %vm61, %v1114, 0.0
    %1117 = vadd.xlane.f32.xlu0 %v1116
    %v1118 = vpop.xlane.xlu0 %1117
    %v1119 = vsel %vm61, %v1115, 0.0
    %1120 = vadd.xlane.f32.xlu0 %v1119
    %v1121 = vpop.xlane.xlu0 %1120
    %v1122 = vmul.f32 %v1118, %v68
    %v1123 = vmul.f32 %v1121, %v68
    %v1124 = vadd.f32 %v1122, 1e-05
    %v1125 = vadd.f32 %v1123, 1e-05
    %v1126 = vrsqrt.pop %v1124
    %v1127 = vrsqrt.pop %v1125
    %v1128 = vmul.f32 %v1112, %v1126
    %v1129 = vmul.f32 %v1113, %v1127
    %v1130 = vlaneseq
    %v1131 = vshrl.u32 %v1130, 7
    %v1132 = vsub.s32 0, %v1131
    %v1133 = vrot.slane %v57, %v1132
    %v1134 = vmul.f32 %v1128, %v1133
    %v1135 = vmul.f32 %v1129, %v1133
    %v1136 = vlaneseq
    %v1137 = vshrl.u32 %v1136, 7
    %v1138 = vsub.s32 0, %v1137
    %v1139 = vrot.slane %v58, %v1138
    %v1140 = vadd.f32 %v1134, %v1139
    %v1141 = vadd.f32 %v1135, %v1139
    %v1142 = vlaneseq
    %v1143 = vshrl.u32 %v1142, 7
    %v1144 = vsub.s32 0, %v1143
    %v1145 = vrot.slane %v59, %v1144
    %v1147 = vsel %vm61, %v1140, 0
    %v1150 = vsel %vm61, %v1141, 0
    %1152 = vmatprep.subr.mxu0 0.0
    %1153 = vmatpush1.msra.mxu0 %v41
    %1154 = vmatprep.subr.mxu0 0.0
    %1155 = vmatpush1.msra.mxu0 %v42
    %1156 = vmatprep.subr.mxu0 0.0
    %1157 = vmatpush1.msra.mxu0 %v43
    %1158 = vmatprep.subr.mxu0 0.0
    %1159 = vmatpush1.msra.mxu0 %v44
    %1160 = vmatprep.subr.mxu0 0.0
    %1161 = vmatpush1.msra.mxu0 0.0
    %1162 = vmatprep.subr.mxu0 0.0
    %1163 = vmatpush1.msra.mxu0 0.0
    %1164 = vmatprep.subr.mxu0 0.0
    %1165 = vmatpush1.msra.mxu0 0.0
    %1166 = vmatprep.subr.mxu0 0.0
    %1167 = vmatpush1.msra.mxu0 0.0
    %1168 = vmatprep.subr.mxu0 0.0
    %1169 = vmatpush1.msra.mxu0 0.0
    %1170 = vmatprep.subr.mxu0 0.0
    %1171 = vmatpush1.msra.mxu0 0.0
    %1172 = vmatprep.subr.mxu0 0.0
    %1173 = vmatpush1.msra.mxu0 0.0
    %1174 = vmatprep.subr.mxu0 0.0
    %1175 = vmatpush1.msra.mxu0 0.0
    %1176 = vmatprep.subr.mxu0 0.0
    %1177 = vmatpush1.msra.mxu0 0.0
    %1178 = vmatprep.subr.mxu0 0.0
    %1179 = vmatpush1.msra.mxu0 0.0
    %1180 = vmatprep.subr.mxu0 0.0
    %1181 = vmatpush1.msra.mxu0 0.0
    %1182 = vmatprep.subr.mxu0 0.0
    %1183 = vmatpush1.msra.mxu0 0.0
    %1184 = vmatprep.subr.mxu0 0.0
    %1185 = vmatpush1.msra.mxu0 0.0
    %1186 = vmatprep.subr.mxu0 0.0
    %1187 = vmatpush1.msra.mxu0 0.0
    %1188 = vmatprep.subr.mxu0 0.0
    %1189 = vmatpush1.msra.mxu0 0.0
    %1190 = vmatprep.subr.mxu0 0.0
    %1191 = vmatpush1.msra.mxu0 0.0
    %1192 = vmatprep.subr.mxu0 0.0
    %1193 = vmatpush1.msra.mxu0 0.0
    %1194 = vmatprep.subr.mxu0 0.0
    %1195 = vmatpush1.msra.mxu0 0.0
    %1196 = vmatprep.subr.mxu0 0.0
    %1197 = vmatpush1.msra.mxu0 0.0
    %1198 = vmatprep.subr.mxu0 0.0
    %1199 = vmatpush1.msra.mxu0 0.0
    %1200 = vmatprep.subr.mxu0 0.0
    %1201 = vmatpush1.msra.mxu0 0.0
    %1202 = vmatprep.subr.mxu0 0.0
    %1203 = vmatpush1.msra.mxu0 0.0
    %1204 = vmatprep.subr.mxu0 0.0
    %1205 = vmatpush1.msra.mxu0 0.0
    %1206 = vmatprep.subr.mxu0 0.0
    %1207 = vmatpush1.msra.mxu0 0.0
    %1208 = vmatprep.subr.mxu0 0.0
    %1209 = vmatpush1.msra.mxu0 0.0
    %1210 = vmatprep.subr.mxu0 0.0
    %1211 = vmatpush1.msra.mxu0 0.0
    %1212 = vmatprep.subr.mxu0 0.0
    %1213 = vmatpush1.msra.mxu0 0.0
    %1214 = vmatprep.subr.mxu0 0.0
    %1215 = vmatpush1.msra.mxu0 0.0
    %1216 = vmatprep.mubr.f32.mxu0 0.0
    %1217 = vmatmul.mubr.f32.gmra.mrb[0].mxu0 %v1147
    %v1218 = vpop.f32.mrb[0].mxu0
    %v1219 = vadd.f32 %v1145, %v1218
    %v1220 = vpop.f32.mrb[0].mxu0
    %1221 = vmatprep.mubr.f32.mxu0 0.0
    %1222 = vmatmul.mubr.f32.gmra.mrb[0].mxu0 %v1150
    %v1223 = vpop.f32.mrb[0].mxu0
    %v1224 = vadd.f32 %v1145, %v1223
    %v1225 = vpop.f32.mrb[0].mxu0
    %1226 = vdwg.mxu0
    %v1227 = vmax.f32 %v1219, 0.0
    %v1228 = vmax.f32 %v1224, 0.0
    %v1229 = vlaneseq
    %v1230 = vshrl.u32 %v1229, 7
    %v1231 = vsub.s32 0, %v1230
    %v1232 = vrot.slane %v60, %v1231
    %vm1233 = vcmask 523264
    %v1235 = vsel %vm1233, %v1227, 0
    %v1238 = vsel %vm1233, %v1228, 0
    %1240 = vmatprep.subr.mxu0 0.0
    %1241 = vmatpush1.msra.mxu0 %v45
    %1242 = vmatprep.subr.mxu0 0.0
    %1243 = vmatpush1.msra.mxu0 %v46
    %1244 = vmatprep.subr.mxu0 0.0
    %1245 = vmatpush1.msra.mxu0 %v47
    %1246 = vmatprep.subr.mxu0 0.0
    %1247 = vmatpush1.msra.mxu0 %v48
    %1248 = vmatprep.subr.mxu0 0.0
    %1249 = vmatpush1.msra.mxu0 %v49
    %1250 = vmatprep.subr.mxu0 0.0
    %1251 = vmatpush1.msra.mxu0 %v50
    %1252 = vmatprep.subr.mxu0 0.0
    %1253 = vmatpush1.msra.mxu0 %v51
    %1254 = vmatprep.subr.mxu0 0.0
    %1255 = vmatpush1.msra.mxu0 %v52
    %1256 = vmatprep.subr.mxu0 0.0
    %1257 = vmatpush1.msra.mxu0 0.0
    %1258 = vmatprep.subr.mxu0 0.0
    %1259 = vmatpush1.msra.mxu0 0.0
    %1260 = vmatprep.subr.mxu0 0.0
    %1261 = vmatpush1.msra.mxu0 0.0
    %1262 = vmatprep.subr.mxu0 0.0
    %1263 = vmatpush1.msra.mxu0 0.0
    %1264 = vmatprep.subr.mxu0 0.0
    %1265 = vmatpush1.msra.mxu0 0.0
    %1266 = vmatprep.subr.mxu0 0.0
    %1267 = vmatpush1.msra.mxu0 0.0
    %1268 = vmatprep.subr.mxu0 0.0
    %1269 = vmatpush1.msra.mxu0 0.0
    %1270 = vmatprep.subr.mxu0 0.0
    %1271 = vmatpush1.msra.mxu0 0.0
    %1272 = vmatprep.subr.mxu0 0.0
    %1273 = vmatpush1.msra.mxu0 0.0
    %1274 = vmatprep.subr.mxu0 0.0
    %1275 = vmatpush1.msra.mxu0 0.0
    %1276 = vmatprep.subr.mxu0 0.0
    %1277 = vmatpush1.msra.mxu0 0.0
    %1278 = vmatprep.subr.mxu0 0.0
    %1279 = vmatpush1.msra.mxu0 0.0
    %1280 = vmatprep.subr.mxu0 0.0
    %1281 = vmatpush1.msra.mxu0 0.0
    %1282 = vmatprep.subr.mxu0 0.0
    %1283 = vmatpush1.msra.mxu0 0.0
    %1284 = vmatprep.subr.mxu0 0.0
    %1285 = vmatpush1.msra.mxu0 0.0
    %1286 = vmatprep.subr.mxu0 0.0
    %1287 = vmatpush1.msra.mxu0 0.0
    %1288 = vmatprep.subr.mxu0 0.0
    %1289 = vmatpush1.msra.mxu0 0.0
    %1290 = vmatprep.subr.mxu0 0.0
    %1291 = vmatpush1.msra.mxu0 0.0
    %1292 = vmatprep.subr.mxu0 0.0
    %1293 = vmatpush1.msra.mxu0 0.0
    %1294 = vmatprep.subr.mxu0 0.0
    %1295 = vmatpush1.msra.mxu0 0.0
    %1296 = vmatprep.subr.mxu0 0.0
    %1297 = vmatpush1.msra.mxu0 0.0
    %1298 = vmatprep.subr.mxu0 0.0
    %1299 = vmatpush1.msra.mxu0 0.0
    %1300 = vmatprep.subr.mxu0 0.0
    %1301 = vmatpush1.msra.mxu0 0.0
    %1302 = vmatprep.subr.mxu0 0.0
    %1303 = vmatpush1.msra.mxu0 0.0
    %1304 = vmatprep.mubr.f32.mxu0 0.0
    %1305 = vmatmul.mubr.f32.gmra.mrb[0].mxu0 %v1235
    %v1306 = vpop.f32.mrb[0].mxu0
    %v1307 = vadd.f32 %v1232, %v1306
    %v1308 = vpop.f32.mrb[0].mxu0
    %1309 = vmatprep.mubr.f32.mxu0 0.0
    %1310 = vmatmul.mubr.f32.gmra.mrb[0].mxu0 %v1238
    %v1311 = vpop.f32.mrb[0].mxu0
    %v1312 = vadd.f32 %v1232, %v1311
    %v1313 = vpop.f32.mrb[0].mxu0
    %1314 = vdwg.mxu0
    %v1315 = vadd.f32 %v1102, %v1307
    %v1316 = vadd.f32 %v1103, %v1312
    %v1317 = vld [vmem:[#allocation2 + $0xa8] sm:$0xff]
    %v1318 = vld [vmem:[#allocation2 + $0xb0] sm:$0xff]
    %v1319 = vld [vmem:[#allocation2 + $0xb8] sm:$0xff]
    %v1320 = vld [vmem:[#allocation2 + $0xc0] sm:$0xff]
    %v1321 = vld [vmem:[#allocation2 + $0xc8] sm:$0xff]
    %v1322 = vld [vmem:[#allocation2 + $0xd0] sm:$0xff]
    %v1323 = vld [vmem:[#allocation2 + $0xd8] sm:$0xff]
    %v1324 = vld [vmem:[#allocation2 + $0xe0] sm:$0xff]
    %v1325 = vld [vmem:[#allocation2 + $0xe8] sm:$0xff]
    %v1326 = vld [vmem:[#allocation2 + $0xf0] sm:$0xff]
    %v1327 = vld [vmem:[#allocation2 + $0xf8] sm:$0xff]
    %v1328 = vld [vmem:[#allocation2 + $0x100] sm:$0xff]
    %v1329 = vld [vmem:[#allocation2 + $0x108] sm:$0xff]
    %v1330 = vld [vmem:[#allocation2 + $0x110] sm:$0xff]
    %v1331 = vld [vmem:[#allocation2 + $0x118] sm:$0xff]
    %v1332 = vld [vmem:[#allocation2 + $0x120] sm:$0xff]
    %v1333 = vld [vmem:[#allocation2 + $0x128] sm:$0xff]
    %v1334 = vld [vmem:[#allocation2 + $0x130] sm:$0xff]
    %v1335 = vld [vmem:[#allocation2 + $0x138] sm:$0xff]
    %v1336 = vld [vmem:[#allocation2 + $0x140] sm:$0xff]
    %v1337 = vld [vmem:[#allocation2 + $0x148] sm:$0x1]
    %v1338 = vld [vmem:[#allocation2 + $0x149] sm:$0x1]
    %v1339 = vld [vmem:[#allocation2 + $0x14a] sm:$0x1]
    %v1340 = vld [vmem:[#allocation2 + $0x14b] sm:$0x1]
    %v1341 = vld [vmem:[#allocation2 + $0x14c] sm:$0x1]
    %v1342 = vld [vmem:[#allocation2 + $0x14d] sm:$0x1]
    %v1343 = vld [vmem:[#allocation2 + $0x14e] sm:$0x1]
    %v1344 = vld [vmem:[#allocation2 + $0x14f] sm:$0x1]
    %v1345 = vsel %vm61, %v1315, 0.0
    %1346 = vadd.xlane.f32.xlu0 %v1345
    %v1347 = vpop.xlane.xlu0 %1346
    %v1348 = vsel %vm61, %v1316, 0.0
    %1349 = vadd.xlane.f32.xlu0 %v1348
    %v1350 = vpop.xlane.xlu0 %1349
    %v1351 = vmul.f32 %v1347, %v68
    %v1352 = vmul.f32 %v1350, %v68
    %v1353 = vsub.f32 %v1315, %v1351
    %v1354 = vsub.f32 %v1316, %v1352
    %v1355 = vmul.f32 %v1353, %v1353
    %v1356 = vmul.f32 %v1354, %v1354
    %v1357 = vsel %vm61, %v1355, 0.0
    %1358 = vadd.xlane.f32.xlu0 %v1357
    %v1359 = vpop.xlane.xlu0 %1358
    %v1360 = vsel %vm61, %v1356, 0.0
    %1361 = vadd.xlane.f32.xlu0 %v1360
    %v1362 = vpop.xlane.xlu0 %1361
    %v1363 = vmul.f32 %v1359, %v68
    %v1364 = vmul.f32 %v1362, %v68
    %v1365 = vadd.f32 %v1363, 1e-05
    %v1366 = vadd.f32 %v1364, 1e-05
    %v1367 = vrsqrt.pop %v1365
    %v1368 = vrsqrt.pop %v1366
    %v1369 = vmul.f32 %v1353, %v1367
    %v1370 = vmul.f32 %v1354, %v1368
    %v1371 = vlaneseq
    %v1372 = vshrl.u32 %v1371, 7
    %v1373 = vsub.s32 0, %v1372
    %v1374 = vrot.slane %v1339, %v1373
    %v1375 = vmul.f32 %v1369, %v1374
    %v1376 = vmul.f32 %v1370, %v1374
    %v1377 = vlaneseq
    %v1378 = vshrl.u32 %v1377, 7
    %v1379 = vsub.s32 0, %v1378
    %v1380 = vrot.slane %v1340, %v1379
    %v1381 = vadd.f32 %v1375, %v1380
    %v1382 = vadd.f32 %v1376, %v1380
    %v1383 = vlaneseq
    %v1384 = vshrl.u32 %v1383, 7
    %v1385 = vsub.s32 0, %v1384
    %v1386 = vrot.slane %v1337, %v1385
    %v1388 = vsel %vm61, %v1381, 0
    %v1391 = vsel %vm61, %v1382, 0
    %1393 = vmatprep.subr.mxu0 0.0
    %1394 = vmatpush1.msra.mxu0 %v1317
    %1395 = vmatprep.subr.mxu0 0.0
    %1396 = vmatpush1.msra.mxu0 %v1318
    %1397 = vmatprep.subr.mxu0 0.0
    %1398 = vmatpush1.msra.mxu0 %v1319
    %1399 = vmatprep.subr.mxu0 0.0
    %1400 = vmatpush1.msra.mxu0 %v1320
    %1401 = vmatprep.subr.mxu0 0.0
    %1402 = vmatpush1.msra.mxu0 0.0
    %1403 = vmatprep.subr.mxu0 0.0
    %1404 = vmatpush1.msra.mxu0 0.0
    %1405 = vmatprep.subr.mxu0 0.0
    %1406 = vmatpush1.msra.mxu0 0.0
    %1407 = vmatprep.subr.mxu0 0.0
    %1408 = vmatpush1.msra.mxu0 0.0
    %1409 = vmatprep.subr.mxu0 0.0
    %1410 = vmatpush1.msra.mxu0 0.0
    %1411 = vmatprep.subr.mxu0 0.0
    %1412 = vmatpush1.msra.mxu0 0.0
    %1413 = vmatprep.subr.mxu0 0.0
    %1414 = vmatpush1.msra.mxu0 0.0
    %1415 = vmatprep.subr.mxu0 0.0
    %1416 = vmatpush1.msra.mxu0 0.0
    %1417 = vmatprep.subr.mxu0 0.0
    %1418 = vmatpush1.msra.mxu0 0.0
    %1419 = vmatprep.subr.mxu0 0.0
    %1420 = vmatpush1.msra.mxu0 0.0
    %1421 = vmatprep.subr.mxu0 0.0
    %1422 = vmatpush1.msra.mxu0 0.0
    %1423 = vmatprep.subr.mxu0 0.0
    %1424 = vmatpush1.msra.mxu0 0.0
    %1425 = vmatprep.subr.mxu0 0.0
    %1426 = vmatpush1.msra.mxu0 0.0
    %1427 = vmatprep.subr.mxu0 0.0
    %1428 = vmatpush1.msra.mxu0 0.0
    %1429 = vmatprep.subr.mxu0 0.0
    %1430 = vmatpush1.msra.mxu0 0.0
    %1431 = vmatprep.subr.mxu0 0.0
    %1432 = vmatpush1.msra.mxu0 0.0
    %1433 = vmatprep.subr.mxu0 0.0
    %1434 = vmatpush1.msra.mxu0 0.0
    %1435 = vmatprep.subr.mxu0 0.0
    %1436 = vmatpush1.msra.mxu0 0.0
    %1437 = vmatprep.subr.mxu0 0.0
    %1438 = vmatpush1.msra.mxu0 0.0
    %1439 = vmatprep.subr.mxu0 0.0
    %1440 = vmatpush1.msra.mxu0 0.0
    %1441 = vmatprep.subr.mxu0 0.0
    %1442 = vmatpush1.msra.mxu0 0.0
    %1443 = vmatprep.subr.mxu0 0.0
    %1444 = vmatpush1.msra.mxu0 0.0
    %1445 = vmatprep.subr.mxu0 0.0
    %1446 = vmatpush1.msra.mxu0 0.0
    %1447 = vmatprep.subr.mxu0 0.0
    %1448 = vmatpush1.msra.mxu0 0.0
    %1449 = vmatprep.subr.mxu0 0.0
    %1450 = vmatpush1.msra.mxu0 0.0
    %1451 = vmatprep.subr.mxu0 0.0
    %1452 = vmatpush1.msra.mxu0 0.0
    %1453 = vmatprep.subr.mxu0 0.0
    %1454 = vmatpush1.msra.mxu0 0.0
    %1455 = vmatprep.subr.mxu0 0.0
    %1456 = vmatpush1.msra.mxu0 0.0
    %1457 = vmatprep.mubr.f32.mxu0 0.0
    %1458 = vmatmul.mubr.f32.gmra.mrb[0].mxu0 %v1388
    %v1459 = vpop.f32.mrb[0].mxu0
    %v1460 = vadd.f32 %v1386, %v1459
    %v1461 = vpop.f32.mrb[0].mxu0
    %1462 = vmatprep.mubr.f32.mxu0 0.0
    %1463 = vmatmul.mubr.f32.gmra.mrb[0].mxu0 %v1391
    %v1464 = vpop.f32.mrb[0].mxu0
    %v1465 = vadd.f32 %v1386, %v1464
    %v1466 = vpop.f32.mrb[0].mxu0
    %1467 = vdwg.mxu0
    %1470 = vrot.lane.b32.xlu0 %v1460, 120
    %v1471 = vpop.permute.xlu0 %1470
    %1472 = vrot.lane.b32.xlu0 %v1465, 120
    %v1473 = vpop.permute.xlu0 %1472
    %1474 = vrot.lane.b32.xlu0 %v1460, 112
    %v1475 = vpop.permute.xlu0 %1474
    %1476 = vrot.lane.b32.xlu0 %v1465, 112
    %v1477 = vpop.permute.xlu0 %1476
    %1478 = vrot.lane.b32.xlu0 %v1460, 104
    %v1479 = vpop.permute.xlu0 %1478
    %1480 = vrot.lane.b32.xlu0 %v1465, 104
    %v1481 = vpop.permute.xlu0 %1480
    %1482 = vrot.lane.b32.xlu0 %v1460, 96
    %v1483 = vpop.permute.xlu0 %1482
    %1484 = vrot.lane.b32.xlu0 %v1465, 96
    %v1485 = vpop.permute.xlu0 %1484
    %v1486 = vsel %vm204, %v1460, 0
    %v1488 = vsel %vm204, %v1465, 0
    %v1490 = vsel %vm204, %v1483, 0
    %v1492 = vsel %vm204, %v1485, 0
    %1494 = vmatprep.subr.mxu0 0.0
    %1495 = vmatpush1.xpose.msra.mxu0 %v1490
    %1496 = vmatprep.subr.mxu0 0.0
    %1497 = vmatpush1.xpose.msra.mxu0 %v1492
    %1498 = vmatprep.subr.mxu0 0.0
    %1499 = vmatpush1.xpose.msra.mxu0 0.0
    %1500 = vmatprep.subr.mxu0 0.0
    %1501 = vmatpush1.xpose.msra.mxu0 0.0
    %1502 = vmatprep.subr.mxu0 0.0
    %1503 = vmatpush1.xpose.msra.mxu0 0.0
    %1504 = vmatprep.subr.mxu0 0.0
    %1505 = vmatpush1.xpose.msra.mxu0 0.0
    %1506 = vmatprep.subr.mxu0 0.0
    %1507 = vmatpush1.xpose.msra.mxu0 0.0
    %1508 = vmatprep.subr.mxu0 0.0
    %1509 = vmatpush1.xpose.msra.mxu0 0.0
    %1510 = vmatprep.subr.mxu0 0.0
    %1511 = vmatpush1.xpose.msra.mxu0 0.0
    %1512 = vmatprep.subr.mxu0 0.0
    %1513 = vmatpush1.xpose.msra.mxu0 0.0
    %1514 = vmatprep.subr.mxu0 0.0
    %1515 = vmatpush1.xpose.msra.mxu0 0.0
    %1516 = vmatprep.subr.mxu0 0.0
    %1517 = vmatpush1.xpose.msra.mxu0 0.0
    %1518 = vmatprep.subr.mxu0 0.0
    %1519 = vmatpush1.xpose.msra.mxu0 0.0
    %1520 = vmatprep.subr.mxu0 0.0
    %1521 = vmatpush1.xpose.msra.mxu0 0.0
    %1522 = vmatprep.subr.mxu0 0.0
    %1523 = vmatpush1.xpose.msra.mxu0 0.0
    %1524 = vmatprep.subr.mxu0 0.0
    %1525 = vmatpush1.xpose.msra.mxu0 0.0
    %1526 = vmatprep.subr.mxu0 0.0
    %1527 = vmatpush1.xpose.msra.mxu0 0.0
    %1528 = vmatprep.subr.mxu0 0.0
    %1529 = vmatpush1.xpose.msra.mxu0 0.0
    %1530 = vmatprep.subr.mxu0 0.0
    %1531 = vmatpush1.xpose.msra.mxu0 0.0
    %1532 = vmatprep.subr.mxu0 0.0
    %1533 = vmatpush1.xpose.msra.mxu0 0.0
    %1534 = vmatprep.subr.mxu0 0.0
    %1535 = vmatpush1.xpose.msra.mxu0 0.0
    %1536 = vmatprep.subr.mxu0 0.0
    %1537 = vmatpush1.xpose.msra.mxu0 0.0
    %1538 = vmatprep.subr.mxu0 0.0
    %1539 = vmatpush1.xpose.msra.mxu0 0.0
    %1540 = vmatprep.subr.mxu0 0.0
    %1541 = vmatpush1.xpose.msra.mxu0 0.0
    %1542 = vmatprep.subr.mxu0 0.0
    %1543 = vmatpush1.xpose.msra.mxu0 0.0
    %1544 = vmatprep.subr.mxu0 0.0
    %1545 = vmatpush1.xpose.msra.mxu0 0.0
    %1546 = vmatprep.subr.mxu0 0.0
    %1547 = vmatpush1.xpose.msra.mxu0 0.0
    %1548 = vmatprep.subr.mxu0 0.0
    %1549 = vmatpush1.xpose.msra.mxu0 0.0
    %1550 = vmatprep.subr.mxu0 0.0
    %1551 = vmatpush1.xpose.msra.mxu0 0.0
    %1552 = vmatprep.subr.mxu0 0.0
    %1553 = vmatpush1.xpose.msra.mxu0 0.0
    %1554 = vmatprep.subr.mxu0 0.0
    %1555 = vmatpush1.xpose.msra.mxu0 0.0
    %1556 = vmatprep.subr.mxu0 0.0
    %1557 = vmatpush1.xpose.msra.mxu0 0.0
    %1558 = vmatprep.mubr.f32.mxu0 0.0
    %1559 = vmatmul.mubr.f32.gmra.mrb[0].mxu0 %v1486
    %v1560 = vpop.f32.mrb[0].mxu0
    %v1561 = vadd.f32 %v31, %v1560
    %v1562 = vpop.f32.mrb[0].mxu0
    %1563 = vmatprep.mubr.f32.mxu0 0.0
    %1564 = vmatmul.mubr.f32.gmra.mrb[0].mxu0 %v1488
    %v1565 = vpop.f32.mrb[0].mxu0
    %v1566 = vadd.f32 %v32, %v1565
    %v1567 = vpop.f32.mrb[0].mxu0
    %1568 = vdwg.mxu0
    %1569 = vrot.lane.b32.xlu0 %v1471, 96
    %v1570 = vpop.permute.xlu0 %1569
    %1571 = vrot.lane.b32.xlu0 %v1473, 96
    %v1572 = vpop.permute.xlu0 %1571
    %v1573 = vsel %vm204, %v1471, 0
    %v1575 = vsel %vm204, %v1473, 0
    %v1577 = vsel %vm204, %v1570, 0
    %v1579 = vsel %vm204, %v1572, 0
    %1581 = vmatprep.subr.mxu0 0.0
    %1582 = vmatpush1.xpose.msra.mxu0 %v1577
    %1583 = vmatprep.subr.mxu0 0.0
    %1584 = vmatpush1.xpose.msra.mxu0 %v1579
    %1585 = vmatprep.subr.mxu0 0.0
    %1586 = vmatpush1.xpose.msra.mxu0 0.0
    %1587 = vmatprep.subr.mxu0 0.0
    %1588 = vmatpush1.xpose.msra.mxu0 0.0
    %1589 = vmatprep.subr.mxu0 0.0
    %1590 = vmatpush1.xpose.msra.mxu0 0.0
    %1591 = vmatprep.subr.mxu0 0.0
    %1592 = vmatpush1.xpose.msra.mxu0 0.0
    %1593 = vmatprep.subr.mxu0 0.0
    %1594 = vmatpush1.xpose.msra.mxu0 0.0
    %1595 = vmatprep.subr.mxu0 0.0
    %1596 = vmatpush1.xpose.msra.mxu0 0.0
    %1597 = vmatprep.subr.mxu0 0.0
    %1598 = vmatpush1.xpose.msra.mxu0 0.0
    %1599 = vmatprep.subr.mxu0 0.0
    %1600 = vmatpush1.xpose.msra.mxu0 0.0
    %1601 = vmatprep.subr.mxu0 0.0
    %1602 = vmatpush1.xpose.msra.mxu0 0.0
    %1603 = vmatprep.subr.mxu0 0.0
    %1604 = vmatpush1.xpose.msra.mxu0 0.0
    %1605 = vmatprep.subr.mxu0 0.0
    %1606 = vmatpush1.xpose.msra.mxu0 0.0
    %1607 = vmatprep.subr.mxu0 0.0
    %1608 = vmatpush1.xpose.msra.mxu0 0.0
    %1609 = vmatprep.subr.mxu0 0.0
    %1610 = vmatpush1.xpose.msra.mxu0 0.0
    %1611 = vmatprep.subr.mxu0 0.0
    %1612 = vmatpush1.xpose.msra.mxu0 0.0
    %1613 = vmatprep.subr.mxu0 0.0
    %1614 = vmatpush1.xpose.msra.mxu0 0.0
    %1615 = vmatprep.subr.mxu0 0.0
    %1616 = vmatpush1.xpose.msra.mxu0 0.0
    %1617 = vmatprep.subr.mxu0 0.0
    %1618 = vmatpush1.xpose.msra.mxu0 0.0
    %1619 = vmatprep.subr.mxu0 0.0
    %1620 = vmatpush1.xpose.msra.mxu0 0.0
    %1621 = vmatprep.subr.mxu0 0.0
    %1622 = vmatpush1.xpose.msra.mxu0 0.0
    %1623 = vmatprep.subr.mxu0 0.0
    %1624 = vmatpush1.xpose.msra.mxu0 0.0
    %1625 = vmatprep.subr.mxu0 0.0
    %1626 = vmatpush1.xpose.msra.mxu0 0.0
    %1627 = vmatprep.subr.mxu0 0.0
    %1628 = vmatpush1.xpose.msra.mxu0 0.0
    %1629 = vmatprep.subr.mxu0 0.0
    %1630 = vmatpush1.xpose.msra.mxu0 0.0
    %1631 = vmatprep.subr.mxu0 0.0
    %1632 = vmatpush1.xpose.msra.mxu0 0.0
    %1633 = vmatprep.subr.mxu0 0.0
    %1634 = vmatpush1.xpose.msra.mxu0 0.0
    %1635 = vmatprep.subr.mxu0 0.0
    %1636 = vmatpush1.xpose.msra.mxu0 0.0
    %1637 = vmatprep.subr.mxu0 0.0
    %1638 = vmatpush1.xpose.msra.mxu0 0.0
    %1639 = vmatprep.subr.mxu0 0.0
    %1640 = vmatpush1.xpose.msra.mxu0 0.0
    %1641 = vmatprep.subr.mxu0 0.0
    %1642 = vmatpush1.xpose.msra.mxu0 0.0
    %1643 = vmatprep.subr.mxu0 0.0
    %1644 = vmatpush1.xpose.msra.mxu0 0.0
    %1645 = vmatprep.mubr.f32.mxu0 0.0
    %1646 = vmatmul.mubr.f32.gmra.mrb[0].mxu0 %v1573
    %v1647 = vpop.f32.mrb[0].mxu0
    %v1648 = vadd.f32 %v31, %v1647
    %v1649 = vpop.f32.mrb[0].mxu0
    %1650 = vmatprep.mubr.f32.mxu0 0.0
    %1651 = vmatmul.mubr.f32.gmra.mrb[0].mxu0 %v1575
    %v1652 = vpop.f32.mrb[0].mxu0
    %v1653 = vadd.f32 %v32, %v1652
    %v1654 = vpop.f32.mrb[0].mxu0
    %1655 = vdwg.mxu0
    %1656 = vrot.lane.b32.xlu0 %v1475, 96
    %v1657 = vpop.permute.xlu0 %1656
    %1658 = vrot.lane.b32.xlu0 %v1477, 96
    %v1659 = vpop.permute.xlu0 %1658
    %v1660 = vsel %vm204, %v1475, 0
    %v1662 = vsel %vm204, %v1477, 0
    %v1664 = vsel %vm204, %v1657, 0
    %v1666 = vsel %vm204, %v1659, 0
    %1668 = vmatprep.subr.mxu0 0.0
    %1669 = vmatpush1.xpose.msra.mxu0 %v1664
    %1670 = vmatprep.subr.mxu0 0.0
    %1671 = vmatpush1.xpose.msra.mxu0 %v1666
    %1672 = vmatprep.subr.mxu0 0.0
    %1673 = vmatpush1.xpose.msra.mxu0 0.0
    %1674 = vmatprep.subr.mxu0 0.0
    %1675 = vmatpush1.xpose.msra.mxu0 0.0
    %1676 = vmatprep.subr.mxu0 0.0
    %1677 = vmatpush1.xpose.msra.mxu0 0.0
    %1678 = vmatprep.subr.mxu0 0.0
    %1679 = vmatpush1.xpose.msra.mxu0 0.0
    %1680 = vmatprep.subr.mxu0 0.0
    %1681 = vmatpush1.xpose.msra.mxu0 0.0
    %1682 = vmatprep.subr.mxu0 0.0
    %1683 = vmatpush1.xpose.msra.mxu0 0.0
    %1684 = vmatprep.subr.mxu0 0.0
    %1685 = vmatpush1.xpose.msra.mxu0 0.0
    %1686 = vmatprep.subr.mxu0 0.0
    %1687 = vmatpush1.xpose.msra.mxu0 0.0
    %1688 = vmatprep.subr.mxu0 0.0
    %1689 = vmatpush1.xpose.msra.mxu0 0.0
    %1690 = vmatprep.subr.mxu0 0.0
    %1691 = vmatpush1.xpose.msra.mxu0 0.0
    %1692 = vmatprep.subr.mxu0 0.0
    %1693 = vmatpush1.xpose.msra.mxu0 0.0
    %1694 = vmatprep.subr.mxu0 0.0
    %1695 = vmatpush1.xpose.msra.mxu0 0.0
    %1696 = vmatprep.subr.mxu0 0.0
    %1697 = vmatpush1.xpose.msra.mxu0 0.0
    %1698 = vmatprep.subr.mxu0 0.0
    %1699 = vmatpush1.xpose.msra.mxu0 0.0
    %1700 = vmatprep.subr.mxu0 0.0
    %1701 = vmatpush1.xpose.msra.mxu0 0.0
    %1702 = vmatprep.subr.mxu0 0.0
    %1703 = vmatpush1.xpose.msra.mxu0 0.0
    %1704 = vmatprep.subr.mxu0 0.0
    %1705 = vmatpush1.xpose.msra.mxu0 0.0
    %1706 = vmatprep.subr.mxu0 0.0
    %1707 = vmatpush1.xpose.msra.mxu0 0.0
    %1708 = vmatprep.subr.mxu0 0.0
    %1709 = vmatpush1.xpose.msra.mxu0 0.0
    %1710 = vmatprep.subr.mxu0 0.0
    %1711 = vmatpush1.xpose.msra.mxu0 0.0
    %1712 = vmatprep.subr.mxu0 0.0
    %1713 = vmatpush1.xpose.msra.mxu0 0.0
    %1714 = vmatprep.subr.mxu0 0.0
    %1715 = vmatpush1.xpose.msra.mxu0 0.0
    %1716 = vmatprep.subr.mxu0 0.0
    %1717 = vmatpush1.xpose.msra.mxu0 0.0
    %1718 = vmatprep.subr.mxu0 0.0
    %1719 = vmatpush1.xpose.msra.mxu0 0.0
    %1720 = vmatprep.subr.mxu0 0.0
    %1721 = vmatpush1.xpose.msra.mxu0 0.0
    %1722 = vmatprep.subr.mxu0 0.0
    %1723 = vmatpush1.xpose.msra.mxu0 0.0
    %1724 = vmatprep.subr.mxu0 0.0
    %1725 = vmatpush1.xpose.msra.mxu0 0.0
    %1726 = vmatprep.subr.mxu0 0.0
    %1727 = vmatpush1.xpose.msra.mxu0 0.0
    %1728 = vmatprep.subr.mxu0 0.0
    %1729 = vmatpush1.xpose.msra.mxu0 0.0
    %1730 = vmatprep.subr.mxu0 0.0
    %1731 = vmatpush1.xpose.msra.mxu0 0.0
    %1732 = vmatprep.mubr.f32.mxu0 0.0
    %1733 = vmatmul.mubr.f32.gmra.mrb[0].mxu0 %v1660
    %v1734 = vpop.f32.mrb[0].mxu0
    %v1735 = vadd.f32 %v31, %v1734
    %v1736 = vpop.f32.mrb[0].mxu0
    %1737 = vmatprep.mubr.f32.mxu0 0.0
    %1738 = vmatmul.mubr.f32.gmra.mrb[0].mxu0 %v1662
    %v1739 = vpop.f32.mrb[0].mxu0
    %v1740 = vadd.f32 %v32, %v1739
    %v1741 = vpop.f32.mrb[0].mxu0
    %1742 = vdwg.mxu0
    %1743 = vrot.lane.b32.xlu0 %v1479, 96
    %v1744 = vpop.permute.xlu0 %1743
    %1745 = vrot.lane.b32.xlu0 %v1481, 96
    %v1746 = vpop.permute.xlu0 %1745
    %v1747 = vsel %vm204, %v1479, 0
    %v1749 = vsel %vm204, %v1481, 0
    %v1751 = vsel %vm204, %v1744, 0
    %v1753 = vsel %vm204, %v1746, 0
    %1755 = vmatprep.subr.mxu0 0.0
    %1756 = vmatpush1.xpose.msra.mxu0 %v1751
    %1757 = vmatprep.subr.mxu0 0.0
    %1758 = vmatpush1.xpose.msra.mxu0 %v1753
    %1759 = vmatprep.subr.mxu0 0.0
    %1760 = vmatpush1.xpose.msra.mxu0 0.0
    %1761 = vmatprep.subr.mxu0 0.0
    %1762 = vmatpush1.xpose.msra.mxu0 0.0
    %1763 = vmatprep.subr.mxu0 0.0
    %1764 = vmatpush1.xpose.msra.mxu0 0.0
    %1765 = vmatprep.subr.mxu0 0.0
    %1766 = vmatpush1.xpose.msra.mxu0 0.0
    %1767 = vmatprep.subr.mxu0 0.0
    %1768 = vmatpush1.xpose.msra.mxu0 0.0
    %1769 = vmatprep.subr.mxu0 0.0
    %1770 = vmatpush1.xpose.msra.mxu0 0.0
    %1771 = vmatprep.subr.mxu0 0.0
    %1772 = vmatpush1.xpose.msra.mxu0 0.0
    %1773 = vmatprep.subr.mxu0 0.0
    %1774 = vmatpush1.xpose.msra.mxu0 0.0
    %1775 = vmatprep.subr.mxu0 0.0
    %1776 = vmatpush1.xpose.msra.mxu0 0.0
    %1777 = vmatprep.subr.mxu0 0.0
    %1778 = vmatpush1.xpose.msra.mxu0 0.0
    %1779 = vmatprep.subr.mxu0 0.0
    %1780 = vmatpush1.xpose.msra.mxu0 0.0
    %1781 = vmatprep.subr.mxu0 0.0
    %1782 = vmatpush1.xpose.msra.mxu0 0.0
    %1783 = vmatprep.subr.mxu0 0.0
    %1784 = vmatpush1.xpose.msra.mxu0 0.0
    %1785 = vmatprep.subr.mxu0 0.0
    %1786 = vmatpush1.xpose.msra.mxu0 0.0
    %1787 = vmatprep.subr.mxu0 0.0
    %1788 = vmatpush1.xpose.msra.mxu0 0.0
    %1789 = vmatprep.subr.mxu0 0.0
    %1790 = vmatpush1.xpose.msra.mxu0 0.0
    %1791 = vmatprep.subr.mxu0 0.0
    %1792 = vmatpush1.xpose.msra.mxu0 0.0
    %1793 = vmatprep.subr.mxu0 0.0
    %1794 = vmatpush1.xpose.msra.mxu0 0.0
    %1795 = vmatprep.subr.mxu0 0.0
    %1796 = vmatpush1.xpose.msra.mxu0 0.0
    %1797 = vmatprep.subr.mxu0 0.0
    %1798 = vmatpush1.xpose.msra.mxu0 0.0
    %1799 = vmatprep.subr.mxu0 0.0
    %1800 = vmatpush1.xpose.msra.mxu0 0.0
    %1801 = vmatprep.subr.mxu0 0.0
    %1802 = vmatpush1.xpose.msra.mxu0 0.0
    %1803 = vmatprep.subr.mxu0 0.0
    %1804 = vmatpush1.xpose.msra.mxu0 0.0
    %1805 = vmatprep.subr.mxu0 0.0
    %1806 = vmatpush1.xpose.msra.mxu0 0.0
    %1807 = vmatprep.subr.mxu0 0.0
    %1808 = vmatpush1.xpose.msra.mxu0 0.0
    %1809 = vmatprep.subr.mxu0 0.0
    %1810 = vmatpush1.xpose.msra.mxu0 0.0
    %1811 = vmatprep.subr.mxu0 0.0
    %1812 = vmatpush1.xpose.msra.mxu0 0.0
    %1813 = vmatprep.subr.mxu0 0.0
    %1814 = vmatpush1.xpose.msra.mxu0 0.0
    %1815 = vmatprep.subr.mxu0 0.0
    %1816 = vmatpush1.xpose.msra.mxu0 0.0
    %1817 = vmatprep.subr.mxu0 0.0
    %1818 = vmatpush1.xpose.msra.mxu0 0.0
    %1819 = vmatprep.mubr.f32.mxu0 0.0
    %1820 = vmatmul.mubr.f32.gmra.mrb[0].mxu0 %v1747
    %v1821 = vpop.f32.mrb[0].mxu0
    %v1822 = vadd.f32 %v31, %v1821
    %v1823 = vpop.f32.mrb[0].mxu0
    %1824 = vmatprep.mubr.f32.mxu0 0.0
    %1825 = vmatmul.mubr.f32.gmra.mrb[0].mxu0 %v1749
    %v1826 = vpop.f32.mrb[0].mxu0
    %v1827 = vadd.f32 %v32, %v1826
    %v1828 = vpop.f32.mrb[0].mxu0
    %1829 = vdwg.mxu0
    %v1830 = vsel %vm549, %v1561, -inf
    %1831 = vmax.xlane.f32.xlu0 %v1830
    %v1832 = vpop.xlane.xlu0 %1831
    %v1833 = vsel %vm549, %v1566, -inf
    %1834 = vmax.xlane.f32.xlu0 %v1833
    %v1835 = vpop.xlane.xlu0 %1834
    %v1836 = vsel %vm549, %v1648, -inf
    %1837 = vmax.xlane.f32.xlu0 %v1836
    %v1838 = vpop.xlane.xlu0 %1837
    %v1839 = vsel %vm549, %v1653, -inf
    %1840 = vmax.xlane.f32.xlu0 %v1839
    %v1841 = vpop.xlane.xlu0 %1840
    %v1842 = vsel %vm549, %v1735, -inf
    %1843 = vmax.xlane.f32.xlu0 %v1842
    %v1844 = vpop.xlane.xlu0 %1843
    %v1845 = vsel %vm549, %v1740, -inf
    %1846 = vmax.xlane.f32.xlu0 %v1845
    %v1847 = vpop.xlane.xlu0 %1846
    %v1848 = vsel %vm549, %v1822, -inf
    %1849 = vmax.xlane.f32.xlu0 %v1848
    %v1850 = vpop.xlane.xlu0 %1849
    %v1851 = vsel %vm549, %v1827, -inf
    %1852 = vmax.xlane.f32.xlu0 %v1851
    %v1853 = vpop.xlane.xlu0 %1852
    %v1854 = vsub.f32 %v1561, %v1832
    %v1855 = vsub.f32 %v1566, %v1835
    %v1856 = vsub.f32 %v1648, %v1838
    %v1857 = vsub.f32 %v1653, %v1841
    %v1858 = vsub.f32 %v1735, %v1844
    %v1859 = vsub.f32 %v1740, %v1847
    %v1860 = vsub.f32 %v1822, %v1850
    %v1861 = vsub.f32 %v1827, %v1853
    %v1862 = vmul.f32 %v1854, 1.442695
    %v1863 = vpow.pop %v1862
    %v1864 = vmul.f32 %v1855, 1.442695
    %v1865 = vpow.pop %v1864
    %v1866 = vmul.f32 %v1856, 1.442695
    %v1867 = vpow.pop %v1866
    %v1868 = vmul.f32 %v1857, 1.442695
    %v1869 = vpow.pop %v1868
    %v1870 = vmul.f32 %v1858, 1.442695
    %v1871 = vpow.pop %v1870
    %v1872 = vmul.f32 %v1859, 1.442695
    %v1873 = vpow.pop %v1872
    %v1874 = vmul.f32 %v1860, 1.442695
    %v1875 = vpow.pop %v1874
    %v1876 = vmul.f32 %v1861, 1.442695
    %v1877 = vpow.pop %v1876
    %v1878 = vsel %vm549, %v1863, 0.0
    %1879 = vadd.xlane.f32.xlu0 %v1878
    %v1880 = vpop.xlane.xlu0 %1879
    %v1881 = vsel %vm549, %v1865, 0.0
    %1882 = vadd.xlane.f32.xlu0 %v1881
    %v1883 = vpop.xlane.xlu0 %1882
    %v1884 = vsel %vm549, %v1867, 0.0
    %1885 = vadd.xlane.f32.xlu0 %v1884
    %v1886 = vpop.xlane.xlu0 %1885
    %v1887 = vsel %vm549, %v1869, 0.0
    %1888 = vadd.xlane.f32.xlu0 %v1887
    %v1889 = vpop.xlane.xlu0 %1888
    %v1890 = vsel %vm549, %v1871, 0.0
    %1891 = vadd.xlane.f32.xlu0 %v1890
    %v1892 = vpop.xlane.xlu0 %1891
    %v1893 = vsel %vm549, %v1873, 0.0
    %1894 = vadd.xlane.f32.xlu0 %v1893
    %v1895 = vpop.xlane.xlu0 %1894
    %v1896 = vsel %vm549, %v1875, 0.0
    %1897 = vadd.xlane.f32.xlu0 %v1896
    %v1898 = vpop.xlane.xlu0 %1897
    %v1899 = vsel %vm549, %v1877, 0.0
    %1900 = vadd.xlane.f32.xlu0 %v1899
    %v1901 = vpop.xlane.xlu0 %1900
    %v1902 = vrcp.pop %v1880
    %v1903 = vrcp.pop %v1883
    %v1904 = vrcp.pop %v1886
    %v1905 = vrcp.pop %v1889
    %v1906 = vrcp.pop %v1892
    %v1907 = vrcp.pop %v1895
    %v1908 = vrcp.pop %v1898
    %v1909 = vrcp.pop %v1901
    %v1910 = vmul.f32 %v1863, %v1902
    %v1911 = vmul.f32 %v1865, %v1903
    %v1912 = vmul.f32 %v1867, %v1904
    %v1913 = vmul.f32 %v1869, %v1905
    %v1914 = vmul.f32 %v1871, %v1906
    %v1915 = vmul.f32 %v1873, %v1907
    %v1916 = vmul.f32 %v1875, %v1908
    %v1917 = vmul.f32 %v1877, %v1909
    %1918 = vrot.lane.b32.xlu0 %v1460, 64
    %v1919 = vpop.permute.xlu0 %1918
    %1920 = vrot.lane.b32.xlu0 %v1465, 64
    %v1921 = vpop.permute.xlu0 %1920
    %v1925 = vsel %vm549, %v1910, 0
    %v1928 = vsel %vm549, %v1911, 0
    %1930 = vmatprep.subr.mxu0 0.0
    %1931 = vmatpush1.msra.mxu0 %v1919
    %1932 = vmatprep.subr.mxu0 0.0
    %1933 = vmatpush1.msra.mxu0 %v1921
    %1934 = vmatprep.subr.mxu0 0.0
    %1935 = vmatpush1.msra.mxu0 0.0
    %1936 = vmatprep.subr.mxu0 0.0
    %1937 = vmatpush1.msra.mxu0 0.0
    %1938 = vmatprep.subr.mxu0 0.0
    %1939 = vmatpush1.msra.mxu0 0.0
    %1940 = vmatprep.subr.mxu0 0.0
    %1941 = vmatpush1.msra.mxu0 0.0
    %1942 = vmatprep.subr.mxu0 0.0
    %1943 = vmatpush1.msra.mxu0 0.0
    %1944 = vmatprep.subr.mxu0 0.0
    %1945 = vmatpush1.msra.mxu0 0.0
    %1946 = vmatprep.subr.mxu0 0.0
    %1947 = vmatpush1.msra.mxu0 0.0
    %1948 = vmatprep.subr.mxu0 0.0
    %1949 = vmatpush1.msra.mxu0 0.0
    %1950 = vmatprep.subr.mxu0 0.0
    %1951 = vmatpush1.msra.mxu0 0.0
    %1952 = vmatprep.subr.mxu0 0.0
    %1953 = vmatpush1.msra.mxu0 0.0
    %1954 = vmatprep.subr.mxu0 0.0
    %1955 = vmatpush1.msra.mxu0 0.0
    %1956 = vmatprep.subr.mxu0 0.0
    %1957 = vmatpush1.msra.mxu0 0.0
    %1958 = vmatprep.subr.mxu0 0.0
    %1959 = vmatpush1.msra.mxu0 0.0
    %1960 = vmatprep.subr.mxu0 0.0
    %1961 = vmatpush1.msra.mxu0 0.0
    %1962 = vmatprep.subr.mxu0 0.0
    %1963 = vmatpush1.msra.mxu0 0.0
    %1964 = vmatprep.subr.mxu0 0.0
    %1965 = vmatpush1.msra.mxu0 0.0
    %1966 = vmatprep.subr.mxu0 0.0
    %1967 = vmatpush1.msra.mxu0 0.0
    %1968 = vmatprep.subr.mxu0 0.0
    %1969 = vmatpush1.msra.mxu0 0.0
    %1970 = vmatprep.subr.mxu0 0.0
    %1971 = vmatpush1.msra.mxu0 0.0
    %1972 = vmatprep.subr.mxu0 0.0
    %1973 = vmatpush1.msra.mxu0 0.0
    %1974 = vmatprep.subr.mxu0 0.0
    %1975 = vmatpush1.msra.mxu0 0.0
    %1976 = vmatprep.subr.mxu0 0.0
    %1977 = vmatpush1.msra.mxu0 0.0
    %1978 = vmatprep.subr.mxu0 0.0
    %1979 = vmatpush1.msra.mxu0 0.0
    %1980 = vmatprep.subr.mxu0 0.0
    %1981 = vmatpush1.msra.mxu0 0.0
    %1982 = vmatprep.subr.mxu0 0.0
    %1983 = vmatpush1.msra.mxu0 0.0
    %1984 = vmatprep.subr.mxu0 0.0
    %1985 = vmatpush1.msra.mxu0 0.0
    %1986 = vmatprep.subr.mxu0 0.0
    %1987 = vmatpush1.msra.mxu0 0.0
    %1988 = vmatprep.subr.mxu0 0.0
    %1989 = vmatpush1.msra.mxu0 0.0
    %1990 = vmatprep.subr.mxu0 0.0
    %1991 = vmatpush1.msra.mxu0 0.0
    %1992 = vmatprep.subr.mxu0 0.0
    %1993 = vmatpush1.msra.mxu0 0.0
    %1994 = vmatprep.mubr.f32.mxu0 0.0
    %1995 = vmatmul.mubr.f32.gmra.mrb[0].mxu0 %v1925
    %v1996 = vpop.f32.mrb[0].mxu0
    %v1997 = vadd.f32 0.0, %v1996
    %v1998 = vpop.f32.mrb[0].mxu0
    %1999 = vmatprep.mubr.f32.mxu0 0.0
    %2000 = vmatmul.mubr.f32.gmra.mrb[0].mxu0 %v1928
    %v2001 = vpop.f32.mrb[0].mxu0
    %v2002 = vadd.f32 0.0, %v2001
    %v2003 = vpop.f32.mrb[0].mxu0
    %2004 = vdwg.mxu0
    %2005 = vrot.lane.b32.xlu0 %v1471, 64
    %v2006 = vpop.permute.xlu0 %2005
    %2007 = vrot.lane.b32.xlu0 %v1473, 64
    %v2008 = vpop.permute.xlu0 %2007
    %v2012 = vsel %vm549, %v1912, 0
    %v2015 = vsel %vm549, %v1913, 0
    %2017 = vmatprep.subr.mxu0 0.0
    %2018 = vmatpush1.msra.mxu0 %v2006
    %2019 = vmatprep.subr.mxu0 0.0
    %2020 = vmatpush1.msra.mxu0 %v2008
    %2021 = vmatprep.subr.mxu0 0.0
    %2022 = vmatpush1.msra.mxu0 0.0
    %2023 = vmatprep.subr.mxu0 0.0
    %2024 = vmatpush1.msra.mxu0 0.0
    %2025 = vmatprep.subr.mxu0 0.0
    %2026 = vmatpush1.msra.mxu0 0.0
    %2027 = vmatprep.subr.mxu0 0.0
    %2028 = vmatpush1.msra.mxu0 0.0
    %2029 = vmatprep.subr.mxu0 0.0
    %2030 = vmatpush1.msra.mxu0 0.0
    %2031 = vmatprep.subr.mxu0 0.0
    %2032 = vmatpush1.msra.mxu0 0.0
    %2033 = vmatprep.subr.mxu0 0.0
    %2034 = vmatpush1.msra.mxu0 0.0
    %2035 = vmatprep.subr.mxu0 0.0
    %2036 = vmatpush1.msra.mxu0 0.0
    %2037 = vmatprep.subr.mxu0 0.0
    %2038 = vmatpush1.msra.mxu0 0.0
    %2039 = vmatprep.subr.mxu0 0.0
    %2040 = vmatpush1.msra.mxu0 0.0
    %2041 = vmatprep.subr.mxu0 0.0
    %2042 = vmatpush1.msra.mxu0 0.0
    %2043 = vmatprep.subr.mxu0 0.0
    %2044 = vmatpush1.msra.mxu0 0.0
    %2045 = vmatprep.subr.mxu0 0.0
    %2046 = vmatpush1.msra.mxu0 0.0
    %2047 = vmatprep.subr.mxu0 0.0
    %2048 = vmatpush1.msra.mxu0 0.0
    %2049 = vmatprep.subr.mxu0 0.0
    %2050 = vmatpush1.msra.mxu0 0.0
    %2051 = vmatprep.subr.mxu0 0.0
    %2052 = vmatpush1.msra.mxu0 0.0
    %2053 = vmatprep.subr.mxu0 0.0
    %2054 = vmatpush1.msra.mxu0 0.0
    %2055 = vmatprep.subr.mxu0 0.0
    %2056 = vmatpush1.msra.mxu0 0.0
    %2057 = vmatprep.subr.mxu0 0.0
    %2058 = vmatpush1.msra.mxu0 0.0
    %2059 = vmatprep.subr.mxu0 0.0
    %2060 = vmatpush1.msra.mxu0 0.0
    %2061 = vmatprep.subr.mxu0 0.0
    %2062 = vmatpush1.msra.mxu0 0.0
    %2063 = vmatprep.subr.mxu0 0.0
    %2064 = vmatpush1.msra.mxu0 0.0
    %2065 = vmatprep.subr.mxu0 0.0
    %2066 = vmatpush1.msra.mxu0 0.0
    %2067 = vmatprep.subr.mxu0 0.0
    %2068 = vmatpush1.msra.mxu0 0.0
    %2069 = vmatprep.subr.mxu0 0.0
    %2070 = vmatpush1.msra.mxu0 0.0
    %2071 = vmatprep.subr.mxu0 0.0
    %2072 = vmatpush1.msra.mxu0 0.0
    %2073 = vmatprep.subr.mxu0 0.0
    %2074 = vmatpush1.msra.mxu0 0.0
    %2075 = vmatprep.subr.mxu0 0.0
    %2076 = vmatpush1.msra.mxu0 0.0
    %2077 = vmatprep.subr.mxu0 0.0
    %2078 = vmatpush1.msra.mxu0 0.0
    %2079 = vmatprep.subr.mxu0 0.0
    %2080 = vmatpush1.msra.mxu0 0.0
    %2081 = vmatprep.mubr.f32.mxu0 0.0
    %2082 = vmatmul.mubr.f32.gmra.mrb[0].mxu0 %v2012
    %v2083 = vpop.f32.mrb[0].mxu0
    %v2084 = vadd.f32 0.0, %v2083
    %v2085 = vpop.f32.mrb[0].mxu0
    %2086 = vmatprep.mubr.f32.mxu0 0.0
    %2087 = vmatmul.mubr.f32.gmra.mrb[0].mxu0 %v2015
    %v2088 = vpop.f32.mrb[0].mxu0
    %v2089 = vadd.f32 0.0, %v2088
    %v2090 = vpop.f32.mrb[0].mxu0
    %2091 = vdwg.mxu0
    %2092 = vrot.lane.b32.xlu0 %v1475, 64
    %v2093 = vpop.permute.xlu0 %2092
    %2094 = vrot.lane.b32.xlu0 %v1477, 64
    %v2095 = vpop.permute.xlu0 %2094
    %v2099 = vsel %vm549, %v1914, 0
    %v2102 = vsel %vm549, %v1915, 0
    %2104 = vmatprep.subr.mxu0 0.0
    %2105 = vmatpush1.msra.mxu0 %v2093
    %2106 = vmatprep.subr.mxu0 0.0
    %2107 = vmatpush1.msra.mxu0 %v2095
    %2108 = vmatprep.subr.mxu0 0.0
    %2109 = vmatpush1.msra.mxu0 0.0
    %2110 = vmatprep.subr.mxu0 0.0
    %2111 = vmatpush1.msra.mxu0 0.0
    %2112 = vmatprep.subr.mxu0 0.0
    %2113 = vmatpush1.msra.mxu0 0.0
    %2114 = vmatprep.subr.mxu0 0.0
    %2115 = vmatpush1.msra.mxu0 0.0
    %2116 = vmatprep.subr.mxu0 0.0
    %2117 = vmatpush1.msra.mxu0 0.0
    %2118 = vmatprep.subr.mxu0 0.0
    %2119 = vmatpush1.msra.mxu0 0.0
    %2120 = vmatprep.subr.mxu0 0.0
    %2121 = vmatpush1.msra.mxu0 0.0
    %2122 = vmatprep.subr.mxu0 0.0
    %2123 = vmatpush1.msra.mxu0 0.0
    %2124 = vmatprep.subr.mxu0 0.0
    %2125 = vmatpush1.msra.mxu0 0.0
    %2126 = vmatprep.subr.mxu0 0.0
    %2127 = vmatpush1.msra.mxu0 0.0
    %2128 = vmatprep.subr.mxu0 0.0
    %2129 = vmatpush1.msra.mxu0 0.0
    %2130 = vmatprep.subr.mxu0 0.0
    %2131 = vmatpush1.msra.mxu0 0.0
    %2132 = vmatprep.subr.mxu0 0.0
    %2133 = vmatpush1.msra.mxu0 0.0
    %2134 = vmatprep.subr.mxu0 0.0
    %2135 = vmatpush1.msra.mxu0 0.0
    %2136 = vmatprep.subr.mxu0 0.0
    %2137 = vmatpush1.msra.mxu0 0.0
    %2138 = vmatprep.subr.mxu0 0.0
    %2139 = vmatpush1.msra.mxu0 0.0
    %2140 = vmatprep.subr.mxu0 0.0
    %2141 = vmatpush1.msra.mxu0 0.0
    %2142 = vmatprep.subr.mxu0 0.0
    %2143 = vmatpush1.msra.mxu0 0.0
    %2144 = vmatprep.subr.mxu0 0.0
    %2145 = vmatpush1.msra.mxu0 0.0
    %2146 = vmatprep.subr.mxu0 0.0
    %2147 = vmatpush1.msra.mxu0 0.0
    %2148 = vmatprep.subr.mxu0 0.0
    %2149 = vmatpush1.msra.mxu0 0.0
    %2150 = vmatprep.subr.mxu0 0.0
    %2151 = vmatpush1.msra.mxu0 0.0
    %2152 = vmatprep.subr.mxu0 0.0
    %2153 = vmatpush1.msra.mxu0 0.0
    %2154 = vmatprep.subr.mxu0 0.0
    %2155 = vmatpush1.msra.mxu0 0.0
    %2156 = vmatprep.subr.mxu0 0.0
    %2157 = vmatpush1.msra.mxu0 0.0
    %2158 = vmatprep.subr.mxu0 0.0
    %2159 = vmatpush1.msra.mxu0 0.0
    %2160 = vmatprep.subr.mxu0 0.0
    %2161 = vmatpush1.msra.mxu0 0.0
    %2162 = vmatprep.subr.mxu0 0.0
    %2163 = vmatpush1.msra.mxu0 0.0
    %2164 = vmatprep.subr.mxu0 0.0
    %2165 = vmatpush1.msra.mxu0 0.0
    %2166 = vmatprep.subr.mxu0 0.0
    %2167 = vmatpush1.msra.mxu0 0.0
    %2168 = vmatprep.mubr.f32.mxu0 0.0
    %2169 = vmatmul.mubr.f32.gmra.mrb[0].mxu0 %v2099
    %v2170 = vpop.f32.mrb[0].mxu0
    %v2171 = vadd.f32 0.0, %v2170
    %v2172 = vpop.f32.mrb[0].mxu0
    %2173 = vmatprep.mubr.f32.mxu0 0.0
    %2174 = vmatmul.mubr.f32.gmra.mrb[0].mxu0 %v2102
    %v2175 = vpop.f32.mrb[0].mxu0
    %v2176 = vadd.f32 0.0, %v2175
    %v2177 = vpop.f32.mrb[0].mxu0
    %2178 = vdwg.mxu0
    %2179 = vrot.lane.b32.xlu0 %v1479, 64
    %v2180 = vpop.permute.xlu0 %2179
    %2181 = vrot.lane.b32.xlu0 %v1481, 64
    %v2182 = vpop.permute.xlu0 %2181
    %v2186 = vsel %vm549, %v1916, 0
    %v2189 = vsel %vm549, %v1917, 0
    %2191 = vmatprep.subr.mxu0 0.0
    %2192 = vmatpush1.msra.mxu0 %v2180
    %2193 = vmatprep.subr.mxu0 0.0
    %2194 = vmatpush1.msra.mxu0 %v2182
    %2195 = vmatprep.subr.mxu0 0.0
    %2196 = vmatpush1.msra.mxu0 0.0
    %2197 = vmatprep.subr.mxu0 0.0
    %2198 = vmatpush1.msra.mxu0 0.0
    %2199 = vmatprep.subr.mxu0 0.0
    %2200 = vmatpush1.msra.mxu0 0.0
    %2201 = vmatprep.subr.mxu0 0.0
    %2202 = vmatpush1.msra.mxu0 0.0
    %2203 = vmatprep.subr.mxu0 0.0
    %2204 = vmatpush1.msra.mxu0 0.0
    %2205 = vmatprep.subr.mxu0 0.0
    %2206 = vmatpush1.msra.mxu0 0.0
    %2207 = vmatprep.subr.mxu0 0.0
    %2208 = vmatpush1.msra.mxu0 0.0
    %2209 = vmatprep.subr.mxu0 0.0
    %2210 = vmatpush1.msra.mxu0 0.0
    %2211 = vmatprep.subr.mxu0 0.0
    %2212 = vmatpush1.msra.mxu0 0.0
    %2213 = vmatprep.subr.mxu0 0.0
    %2214 = vmatpush1.msra.mxu0 0.0
    %2215 = vmatprep.subr.mxu0 0.0
    %2216 = vmatpush1.msra.mxu0 0.0
    %2217 = vmatprep.subr.mxu0 0.0
    %2218 = vmatpush1.msra.mxu0 0.0
    %2219 = vmatprep.subr.mxu0 0.0
    %2220 = vmatpush1.msra.mxu0 0.0
    %2221 = vmatprep.subr.mxu0 0.0
    %2222 = vmatpush1.msra.mxu0 0.0
    %2223 = vmatprep.subr.mxu0 0.0
    %2224 = vmatpush1.msra.mxu0 0.0
    %2225 = vmatprep.subr.mxu0 0.0
    %2226 = vmatpush1.msra.mxu0 0.0
    %2227 = vmatprep.subr.mxu0 0.0
    %2228 = vmatpush1.msra.mxu0 0.0
    %2229 = vmatprep.subr.mxu0 0.0
    %2230 = vmatpush1.msra.mxu0 0.0
    %2231 = vmatprep.subr.mxu0 0.0
    %2232 = vmatpush1.msra.mxu0 0.0
    %2233 = vmatprep.subr.mxu0 0.0
    %2234 = vmatpush1.msra.mxu0 0.0
    %2235 = vmatprep.subr.mxu0 0.0
    %2236 = vmatpush1.msra.mxu0 0.0
    %2237 = vmatprep.subr.mxu0 0.0
    %2238 = vmatpush1.msra.mxu0 0.0
    %2239 = vmatprep.subr.mxu0 0.0
    %2240 = vmatpush1.msra.mxu0 0.0
    %2241 = vmatprep.subr.mxu0 0.0
    %2242 = vmatpush1.msra.mxu0 0.0
    %2243 = vmatprep.subr.mxu0 0.0
    %2244 = vmatpush1.msra.mxu0 0.0
    %2245 = vmatprep.subr.mxu0 0.0
    %2246 = vmatpush1.msra.mxu0 0.0
    %2247 = vmatprep.subr.mxu0 0.0
    %2248 = vmatpush1.msra.mxu0 0.0
    %2249 = vmatprep.subr.mxu0 0.0
    %2250 = vmatpush1.msra.mxu0 0.0
    %2251 = vmatprep.subr.mxu0 0.0
    %2252 = vmatpush1.msra.mxu0 0.0
    %2253 = vmatprep.subr.mxu0 0.0
    %2254 = vmatpush1.msra.mxu0 0.0
    %2255 = vmatprep.mubr.f32.mxu0 0.0
    %2256 = vmatmul.mubr.f32.gmra.mrb[0].mxu0 %v2186
    %v2257 = vpop.f32.mrb[0].mxu0
    %v2258 = vadd.f32 0.0, %v2257
    %v2259 = vpop.f32.mrb[0].mxu0
    %2260 = vmatprep.mubr.f32.mxu0 0.0
    %2261 = vmatmul.mubr.f32.gmra.mrb[0].mxu0 %v2189
    %v2262 = vpop.f32.mrb[0].mxu0
    %v2263 = vadd.f32 0.0, %v2262
    %v2264 = vpop.f32.mrb[0].mxu0
    %2265 = vdwg.mxu0
    %2268 = vrot.lane.b32.xlu0 %v2084, 8
    %v2269 = vpop.permute.xlu0 %2268
    %2270 = vrot.lane.b32.xlu0 %v2089, 8
    %v2271 = vpop.permute.xlu0 %2270
    %2276 = vrot.lane.b32.xlu0 %v2171, 16
    %v2277 = vpop.permute.xlu0 %2276
    %2278 = vrot.lane.b32.xlu0 %v2176, 16
    %v2279 = vpop.permute.xlu0 %2278
    %2284 = vrot.lane.b32.xlu0 %v2258, 24
    %v2285 = vpop.permute.xlu0 %2284
    %2286 = vrot.lane.b32.xlu0 %v2263, 24
    %v2287 = vpop.permute.xlu0 %2286
    %v2290 = vsel %vm204, %v1997, %v2269
    %v2291 = vsel %vm204, %v2002, %v2271
    %v2292 = vsel %vm549, %v2290, %v2277
    %v2293 = vsel %vm549, %v2291, %v2279
    %v2294 = vsel %vm1014, %v2292, %v2285
    %v2295 = vsel %vm1014, %v2293, %v2287
    %v2296 = vlaneseq
    %v2297 = vshrl.u32 %v2296, 7
    %v2298 = vsub.s32 0, %v2297
    %v2299 = vrot.slane %v1338, %v2298
    %v2301 = vsel %vm61, %v2294, 0
    %v2304 = vsel %vm61, %v2295, 0
    %2306 = vmatprep.subr.mxu0 0.0
    %2307 = vmatpush1.msra.mxu0 %v1321
    %2308 = vmatprep.subr.mxu0 0.0
    %2309 = vmatpush1.msra.mxu0 %v1322
    %2310 = vmatprep.subr.mxu0 0.0
    %2311 = vmatpush1.msra.mxu0 %v1323
    %2312 = vmatprep.subr.mxu0 0.0
    %2313 = vmatpush1.msra.mxu0 %v1324
    %2314 = vmatprep.subr.mxu0 0.0
    %2315 = vmatpush1.msra.mxu0 0.0
    %2316 = vmatprep.subr.mxu0 0.0
    %2317 = vmatpush1.msra.mxu0 0.0
    %2318 = vmatprep.subr.mxu0 0.0
    %2319 = vmatpush1.msra.mxu0 0.0
    %2320 = vmatprep.subr.mxu0 0.0
    %2321 = vmatpush1.msra.mxu0 0.0
    %2322 = vmatprep.subr.mxu0 0.0
    %2323 = vmatpush1.msra.mxu0 0.0
    %2324 = vmatprep.subr.mxu0 0.0
    %2325 = vmatpush1.msra.mxu0 0.0
    %2326 = vmatprep.subr.mxu0 0.0
    %2327 = vmatpush1.msra.mxu0 0.0
    %2328 = vmatprep.subr.mxu0 0.0
    %2329 = vmatpush1.msra.mxu0 0.0
    %2330 = vmatprep.subr.mxu0 0.0
    %2331 = vmatpush1.msra.mxu0 0.0
    %2332 = vmatprep.subr.mxu0 0.0
    %2333 = vmatpush1.msra.mxu0 0.0
    %2334 = vmatprep.subr.mxu0 0.0
    %2335 = vmatpush1.msra.mxu0 0.0
    %2336 = vmatprep.subr.mxu0 0.0
    %2337 = vmatpush1.msra.mxu0 0.0
    %2338 = vmatprep.subr.mxu0 0.0
    %2339 = vmatpush1.msra.mxu0 0.0
    %2340 = vmatprep.subr.mxu0 0.0
    %2341 = vmatpush1.msra.mxu0 0.0
    %2342 = vmatprep.subr.mxu0 0.0
    %2343 = vmatpush1.msra.mxu0 0.0
    %2344 = vmatprep.subr.mxu0 0.0
    %2345 = vmatpush1.msra.mxu0 0.0
    %2346 = vmatprep.subr.mxu0 0.0
    %2347 = vmatpush1.msra.mxu0 0.0
    %2348 = vmatprep.subr.mxu0 0.0
    %2349 = vmatpush1.msra.mxu0 0.0
    %2350 = vmatprep.subr.mxu0 0.0
    %2351 = vmatpush1.msra.mxu0 0.0
    %2352 = vmatprep.subr.mxu0 0.0
    %2353 = vmatpush1.msra.mxu0 0.0
    %2354 = vmatprep.subr.mxu0 0.0
    %2355 = vmatpush1.msra.mxu0 0.0
    %2356 = vmatprep.subr.mxu0 0.0
    %2357 = vmatpush1.msra.mxu0 0.0
    %2358 = vmatprep.subr.mxu0 0.0
    %2359 = vmatpush1.msra.mxu0 0.0
    %2360 = vmatprep.subr.mxu0 0.0
    %2361 = vmatpush1.msra.mxu0 0.0
    %2362 = vmatprep.subr.mxu0 0.0
    %2363 = vmatpush1.msra.mxu0 0.0
    %2364 = vmatprep.subr.mxu0 0.0
    %2365 = vmatpush1.msra.mxu0 0.0
    %2366 = vmatprep.subr.mxu0 0.0
    %2367 = vmatpush1.msra.mxu0 0.0
    %2368 = vmatprep.subr.mxu0 0.0
    %2369 = vmatpush1.msra.mxu0 0.0
    %2370 = vmatprep.mubr.f32.mxu0 0.0
    %2371 = vmatmul.mubr.f32.gmra.mrb[0].mxu0 %v2301
    %v2372 = vpop.f32.mrb[0].mxu0
    %v2373 = vadd.f32 %v2299, %v2372
    %v2374 = vpop.f32.mrb[0].mxu0
    %2375 = vmatprep.mubr.f32.mxu0 0.0
    %2376 = vmatmul.mubr.f32.gmra.mrb[0].mxu0 %v2304
    %v2377 = vpop.f32.mrb[0].mxu0
    %v2378 = vadd.f32 %v2299, %v2377
    %v2379 = vpop.f32.mrb[0].mxu0
    %2380 = vdwg.mxu0
    %v2381 = vadd.f32 %v1315, %v2373
    %v2382 = vadd.f32 %v1316, %v2378
    %v2383 = vsel %vm61, %v2381, 0.0
    %2384 = vadd.xlane.f32.xlu0 %v2383
    %v2385 = vpop.xlane.xlu0 %2384
    %v2386 = vsel %vm61, %v2382, 0.0
    %2387 = vadd.xlane.f32.xlu0 %v2386
    %v2388 = vpop.xlane.xlu0 %2387
    %v2389 = vmul.f32 %v2385, %v68
    %v2390 = vmul.f32 %v2388, %v68
    %v2391 = vsub.f32 %v2381, %v2389
    %v2392 = vsub.f32 %v2382, %v2390
    %v2393 = vmul.f32 %v2391, %v2391
    %v2394 = vmul.f32 %v2392, %v2392
    %v2395 = vsel %vm61, %v2393, 0.0
    %2396 = vadd.xlane.f32.xlu0 %v2395
    %v2397 = vpop.xlane.xlu0 %2396
    %v2398 = vsel %vm61, %v2394, 0.0
    %2399 = vadd.xlane.f32.xlu0 %v2398
    %v2400 = vpop.xlane.xlu0 %2399
    %v2401 = vmul.f32 %v2397, %v68
    %v2402 = vmul.f32 %v2400, %v68
    %v2403 = vadd.f32 %v2401, 1e-05
    %v2404 = vadd.f32 %v2402, 1e-05
    %v2405 = vrsqrt.pop %v2403
    %v2406 = vrsqrt.pop %v2404
    %v2407 = vmul.f32 %v2391, %v2405
    %v2408 = vmul.f32 %v2392, %v2406
    %v2409 = vlaneseq
    %v2410 = vshrl.u32 %v2409, 7
    %v2411 = vsub.s32 0, %v2410
    %v2412 = vrot.slane %v1341, %v2411
    %v2413 = vmul.f32 %v2407, %v2412
    %v2414 = vmul.f32 %v2408, %v2412
    %v2415 = vlaneseq
    %v2416 = vshrl.u32 %v2415, 7
    %v2417 = vsub.s32 0, %v2416
    %v2418 = vrot.slane %v1342, %v2417
    %v2419 = vadd.f32 %v2413, %v2418
    %v2420 = vadd.f32 %v2414, %v2418
    %v2421 = vlaneseq
    %v2422 = vshrl.u32 %v2421, 7
    %v2423 = vsub.s32 0, %v2422
    %v2424 = vrot.slane %v1343, %v2423
    %v2426 = vsel %vm61, %v2419, 0
    %v2429 = vsel %vm61, %v2420, 0
    %2431 = vmatprep.subr.mxu0 0.0
    %2432 = vmatpush1.msra.mxu0 %v1325
    %2433 = vmatprep.subr.mxu0 0.0
    %2434 = vmatpush1.msra.mxu0 %v1326
    %2435 = vmatprep.subr.mxu0 0.0
    %2436 = vmatpush1.msra.mxu0 %v1327
    %2437 = vmatprep.subr.mxu0 0.0
    %2438 = vmatpush1.msra.mxu0 %v1328
    %2439 = vmatprep.subr.mxu0 0.0
    %2440 = vmatpush1.msra.mxu0 0.0
    %2441 = vmatprep.subr.mxu0 0.0
    %2442 = vmatpush1.msra.mxu0 0.0
    %2443 = vmatprep.subr.mxu0 0.0
    %2444 = vmatpush1.msra.mxu0 0.0
    %2445 = vmatprep.subr.mxu0 0.0
    %2446 = vmatpush1.msra.mxu0 0.0
    %2447 = vmatprep.subr.mxu0 0.0
    %2448 = vmatpush1.msra.mxu0 0.0
    %2449 = vmatprep.subr.mxu0 0.0
    %2450 = vmatpush1.msra.mxu0 0.0
    %2451 = vmatprep.subr.mxu0 0.0
    %2452 = vmatpush1.msra.mxu0 0.0
    %2453 = vmatprep.subr.mxu0 0.0
    %2454 = vmatpush1.msra.mxu0 0.0
    %2455 = vmatprep.subr.mxu0 0.0
    %2456 = vmatpush1.msra.mxu0 0.0
    %2457 = vmatprep.subr.mxu0 0.0
    %2458 = vmatpush1.msra.mxu0 0.0
    %2459 = vmatprep.subr.mxu0 0.0
    %2460 = vmatpush1.msra.mxu0 0.0
    %2461 = vmatprep.subr.mxu0 0.0
    %2462 = vmatpush1.msra.mxu0 0.0
    %2463 = vmatprep.subr.mxu0 0.0
    %2464 = vmatpush1.msra.mxu0 0.0
    %2465 = vmatprep.subr.mxu0 0.0
    %2466 = vmatpush1.msra.mxu0 0.0
    %2467 = vmatprep.subr.mxu0 0.0
    %2468 = vmatpush1.msra.mxu0 0.0
    %2469 = vmatprep.subr.mxu0 0.0
    %2470 = vmatpush1.msra.mxu0 0.0
    %2471 = vmatprep.subr.mxu0 0.0
    %2472 = vmatpush1.msra.mxu0 0.0
    %2473 = vmatprep.subr.mxu0 0.0
    %2474 = vmatpush1.msra.mxu0 0.0
    %2475 = vmatprep.subr.mxu0 0.0
    %2476 = vmatpush1.msra.mxu0 0.0
    %2477 = vmatprep.subr.mxu0 0.0
    %2478 = vmatpush1.msra.mxu0 0.0
    %2479 = vmatprep.subr.mxu0 0.0
    %2480 = vmatpush1.msra.mxu0 0.0
    %2481 = vmatprep.subr.mxu0 0.0
    %2482 = vmatpush1.msra.mxu0 0.0
    %2483 = vmatprep.subr.mxu0 0.0
    %2484 = vmatpush1.msra.mxu0 0.0
    %2485 = vmatprep.subr.mxu0 0.0
    %2486 = vmatpush1.msra.mxu0 0.0
    %2487 = vmatprep.subr.mxu0 0.0
    %2488 = vmatpush1.msra.mxu0 0.0
    %2489 = vmatprep.subr.mxu0 0.0
    %2490 = vmatpush1.msra.mxu0 0.0
    %2491 = vmatprep.subr.mxu0 0.0
    %2492 = vmatpush1.msra.mxu0 0.0
    %2493 = vmatprep.subr.mxu0 0.0
    %2494 = vmatpush1.msra.mxu0 0.0
    %2495 = vmatprep.mubr.f32.mxu0 0.0
    %2496 = vmatmul.mubr.f32.gmra.mrb[0].mxu0 %v2426
    %v2497 = vpop.f32.mrb[0].mxu0
    %v2498 = vadd.f32 %v2424, %v2497
    %v2499 = vpop.f32.mrb[0].mxu0
    %2500 = vmatprep.mubr.f32.mxu0 0.0
    %2501 = vmatmul.mubr.f32.gmra.mrb[0].mxu0 %v2429
    %v2502 = vpop.f32.mrb[0].mxu0
    %v2503 = vadd.f32 %v2424, %v2502
    %v2504 = vpop.f32.mrb[0].mxu0
    %2505 = vdwg.mxu0
    %v2506 = vmax.f32 %v2498, 0.0
    %v2507 = vmax.f32 %v2503, 0.0
    %v2508 = vlaneseq
    %v2509 = vshrl.u32 %v2508, 7
    %v2510 = vsub.s32 0, %v2509
    %v2511 = vrot.slane %v1344, %v2510
    %v2513 = vsel %vm1233, %v2506, 0
    %v2516 = vsel %vm1233, %v2507, 0
    %2518 = vmatprep.subr.mxu0 0.0
    %2519 = vmatpush1.msra.mxu0 %v1329
    %2520 = vmatprep.subr.mxu0 0.0
    %2521 = vmatpush1.msra.mxu0 %v1330
    %2522 = vmatprep.subr.mxu0 0.0
    %2523 = vmatpush1.msra.mxu0 %v1331
    %2524 = vmatprep.subr.mxu0 0.0
    %2525 = vmatpush1.msra.mxu0 %v1332
    %2526 = vmatprep.subr.mxu0 0.0
    %2527 = vmatpush1.msra.mxu0 %v1333
    %2528 = vmatprep.subr.mxu0 0.0
    %2529 = vmatpush1.msra.mxu0 %v1334
    %2530 = vmatprep.subr.mxu0 0.0
    %2531 = vmatpush1.msra.mxu0 %v1335
    %2532 = vmatprep.subr.mxu0 0.0
    %2533 = vmatpush1.msra.mxu0 %v1336
    %2534 = vmatprep.subr.mxu0 0.0
    %2535 = vmatpush1.msra.mxu0 0.0
    %2536 = vmatprep.subr.mxu0 0.0
    %2537 = vmatpush1.msra.mxu0 0.0
    %2538 = vmatprep.subr.mxu0 0.0
    %2539 = vmatpush1.msra.mxu0 0.0
    %2540 = vmatprep.subr.mxu0 0.0
    %2541 = vmatpush1.msra.mxu0 0.0
    %2542 = vmatprep.subr.mxu0 0.0
    %2543 = vmatpush1.msra.mxu0 0.0
    %2544 = vmatprep.subr.mxu0 0.0
    %2545 = vmatpush1.msra.mxu0 0.0
    %2546 = vmatprep.subr.mxu0 0.0
    %2547 = vmatpush1.msra.mxu0 0.0
    %2548 = vmatprep.subr.mxu0 0.0
    %2549 = vmatpush1.msra.mxu0 0.0
    %2550 = vmatprep.subr.mxu0 0.0
    %2551 = vmatpush1.msra.mxu0 0.0
    %2552 = vmatprep.subr.mxu0 0.0
    %2553 = vmatpush1.msra.mxu0 0.0
    %2554 = vmatprep.subr.mxu0 0.0
    %2555 = vmatpush1.msra.mxu0 0.0
    %2556 = vmatprep.subr.mxu0 0.0
    %2557 = vmatpush1.msra.mxu0 0.0
    %2558 = vmatprep.subr.mxu0 0.0
    %2559 = vmatpush1.msra.mxu0 0.0
    %2560 = vmatprep.subr.mxu0 0.0
    %2561 = vmatpush1.msra.mxu0 0.0
    %2562 = vmatprep.subr.mxu0 0.0
    %2563 = vmatpush1.msra.mxu0 0.0
    %2564 = vmatprep.subr.mxu0 0.0
    %2565 = vmatpush1.msra.mxu0 0.0
    %2566 = vmatprep.subr.mxu0 0.0
    %2567 = vmatpush1.msra.mxu0 0.0
    %2568 = vmatprep.subr.mxu0 0.0
    %2569 = vmatpush1.msra.mxu0 0.0
    %2570 = vmatprep.subr.mxu0 0.0
    %2571 = vmatpush1.msra.mxu0 0.0
    %2572 = vmatprep.subr.mxu0 0.0
    %2573 = vmatpush1.msra.mxu0 0.0
    %2574 = vmatprep.subr.mxu0 0.0
    %2575 = vmatpush1.msra.mxu0 0.0
    %2576 = vmatprep.subr.mxu0 0.0
    %2577 = vmatpush1.msra.mxu0 0.0
    %2578 = vmatprep.subr.mxu0 0.0
    %2579 = vmatpush1.msra.mxu0 0.0
    %2580 = vmatprep.subr.mxu0 0.0
    %2581 = vmatpush1.msra.mxu0 0.0
    %2582 = vmatprep.mubr.f32.mxu0 0.0
    %2583 = vmatmul.mubr.f32.gmra.mrb[0].mxu0 %v2513
    %v2584 = vpop.f32.mrb[0].mxu0
    %v2585 = vadd.f32 %v2511, %v2584
    %v2586 = vpop.f32.mrb[0].mxu0
    %2587 = vmatprep.mubr.f32.mxu0 0.0
    %2588 = vmatmul.mubr.f32.gmra.mrb[0].mxu0 %v2516
    %v2589 = vpop.f32.mrb[0].mxu0
    %v2590 = vadd.f32 %v2511, %v2589
    %v2591 = vpop.f32.mrb[0].mxu0
    %2592 = vdwg.mxu0
    %v2593 = vadd.f32 %v2381, %v2585
    %v2594 = vadd.f32 %v2382, %v2590
    %v2595 = vld [vmem:[#allocation2 + $0x150] sm:$0x1]
    %v2596 = vld [vmem:[#allocation2 + $0x151] sm:$0x1]
    %v2597 = vsel %vm61, %v2593, 0.0
    %2598 = vadd.xlane.f32.xlu0 %v2597
    %v2599 = vpop.xlane.xlu0 %2598
    %v2600 = vsel %vm61, %v2594, 0.0
    %2601 = vadd.xlane.f32.xlu0 %v2600
    %v2602 = vpop.xlane.xlu0 %2601
    %v2603 = vmul.f32 %v2599, %v68
    %v2604 = vmul.f32 %v2602, %v68
    %v2605 = vsub.f32 %v2593, %v2603
    %v2606 = vsub.f32 %v2594, %v2604
    %v2607 = vmul.f32 %v2605, %v2605
    %v2608 = vmul.f32 %v2606, %v2606
    %v2609 = vsel %vm61, %v2607, 0.0
    %2610 = vadd.xlane.f32.xlu0 %v2609
    %v2611 = vpop.xlane.xlu0 %2610
    %v2612 = vsel %vm61, %v2608, 0.0
    %2613 = vadd.xlane.f32.xlu0 %v2612
    %v2614 = vpop.xlane.xlu0 %2613
    %v2615 = vmul.f32 %v2611, %v68
    %v2616 = vmul.f32 %v2614, %v68
    %v2617 = vadd.f32 %v2615, 1e-05
    %v2618 = vadd.f32 %v2616, 1e-05
    %v2619 = vrsqrt.pop %v2617
    %v2620 = vrsqrt.pop %v2618
    %v2621 = vmul.f32 %v2605, %v2619
    %v2622 = vmul.f32 %v2606, %v2620
    %v2623 = vlaneseq
    %v2624 = vshrl.u32 %v2623, 7
    %v2625 = vsub.s32 0, %v2624
    %v2626 = vrot.slane %v2595, %v2625
    %v2627 = vmul.f32 %v2621, %v2626
    %v2628 = vmul.f32 %v2622, %v2626
    %v2629 = vlaneseq
    %v2630 = vshrl.u32 %v2629, 7
    %v2631 = vsub.s32 0, %v2630
    %v2632 = vrot.slane %v2596, %v2631
    %v2633 = vadd.f32 %v2627, %v2632
    %v2634 = vadd.f32 %v2628, %v2632
    %2635 = vst.msk [vmem:[#allocation5] sm:$0xff] %vm61, %v2633
    %2636 = vst.msk [vmem:[#allocation5 + $0x8] sm:$0xff] %vm61, %v2634
    // Predicated region
    $region18: #{transformer_encoder.1} parent=1 // pred_check
      _
    $region19: #{transformer_encoder.1} parent=1 // pred_check_branch
      %2638 = sbr.rel (0) target = $region21
    $region20: #{transformer_encoder.1} parent=1 // pred_region
      %s2640 = ssub.s32 256, 256
      %2641 = vsyncadd [#allocation4], %s2640
      %s2642 = sshll.u32 [#allocation5], 4
      %s2643 = int_to_ptr.vmem [resolvable:$true] %s2642
      %2648 = dma.vmem_to_hbm [thread:$0]  %s2643, 256, %s3, [#allocation4], 128, 128, 8
    $region21: #{transformer_encoder.1} parent=1 // pred_fallthru
      _
    // Predicated region
    $region22: #{transformer_encoder.1} parent=1 // pred_check
      _
    $region23: #{transformer_encoder.1} parent=1 // pred_check_branch
      %2650 = sbr.rel (0) target = $region25
    $region24: #{transformer_encoder.1} parent=1 // pred_region
      %2651 = dma.done [#allocation4], 256
    $region25: #{transformer_encoder.1} parent=1 // pred_fallthru
      _
    %2652 = vsyncpa [#allocation3], 1
    %2653 = vsyncpa [#allocation4], 1

</llo_original>
